<compile_context>
chip_gen: v5e
topology: v5e:2x2
jax: 0.10.0
libtpu: 0.0.40
codegen_flags: <defaults>
</compile_context>

<pallas_src>
import functools

import jax
import jax.numpy as jnp
import numpy as np
from jax.experimental import pallas as pl
from jax.experimental.pallas import tpu as pltpu

_EPS = 1e-5          # nn.GroupNorm default eps
_PRELU_INIT = 0.25   # nn.PReLU() default init (single shared parameter)


def _gn_prelu(y, mask, inv_count, gamma, beta, alpha):
    """Per-channel GroupNorm (num_groups == C) + PReLU in the wide layout.

    y: (Q, C) f32, mask: (Q, 1) f32 (1 on valid spatial positions, 0 on the
    garbage columns of the wide rows).  Returns the activated value with the
    garbage columns zeroed (they double as conv2's zero padding).
    """
    ym = y * mask
    s1 = jnp.sum(ym, axis=0, keepdims=True)           # (1, C)
    s2 = jnp.sum(ym * y, axis=0, keepdims=True)       # (1, C)  sum of y^2 (valid)
    mean = s1 * inv_count
    var = jnp.maximum(s2 * inv_count - mean * mean, 0.0)
    yn = (y - mean) * jax.lax.rsqrt(var + _EPS) * gamma + beta
    act = jnp.where(yn >= 0, yn, alpha * yn)
    return act * mask


def _fused_forward_kernel(stride, Ho, Wo, Ws, alpha1, alpha2, pool,
                          xps_ref, mask_ref,
                          w1_ref, b1_ref, g1_ref, be1_ref,
                          w2_ref, b2_ref, g2_ref, be2_ref,
                          *rest):
    """One batch element of Forward_layer, fully fused in VMEM.

    conv1 (3x3, stride s) + GN + PReLU  ->  h       (VMEM only)
    conv2 (3x3, stride 1) + GN + PReLU  ->  y2
    output = y2 + residual  (residual = x, or the pool-branch stride-2 conv)

    Layout: "wide rows".  Output positions are flattened as q = ho*Ws + wo with
    Ws = Wo + 2, so every 3x3 tap is a contiguous slice of the flattened
    (parity-split) padded image and each conv is ONE (Q, 9*Cin) x (9*Cin, Cout)
    matmul.  Columns wo >= Wo are garbage: masked out of the GroupNorm stats,
    zeroed, and reused as conv2's zero padding.
    """
    if pool:
        (wp_ref, bp_ref, o_ref,
         xstage_ref, im1_ref, im2_ref, hpad_ref) = rest
    else:
        (o_ref, xstage_ref, im1_ref, im2_ref, hpad_ref) = rest

    Q = Ho * Ws
    cin = xps_ref.shape[-1]
    cmid = w1_ref.shape[-1]
    inv_count = 1.0 / float(Ho * Wo)
    mask = mask_ref[...]                               # (Q, 1) f32

    # Stage the bf16 HBM input once as f32 in VMEM (aligned full-block copy);
    # all shifted tap reads below are then plain unaligned f32 ref slices.
    xstage_ref[...] = xps_ref[0].astype(jnp.float32)

    # ---- conv1: build the (Q, 9*Cin) im2col matrix in VMEM, one matmul ------
    for dy in range(3):
        for dx in range(3):
            t = dy * 3 + dx
            par = (dy % stride) * stride + (dx % stride)
            off = (dy // stride) * Ws + (dx // stride)
            im1_ref[:, t * cin:(t + 1) * cin] = xstage_ref[par, pl.ds(off, Q), :]
    a1 = im1_ref[...].astype(jnp.bfloat16)             # MXU operands in bf16
    y1 = jnp.dot(a1, w1_ref[...], preferred_element_type=jnp.float32) + b1_ref[...]
    h = _gn_prelu(y1, mask, inv_count, g1_ref[...], be1_ref[...], alpha1)

    # ---- residual branch ----------------------------------------------------
    if pool:
        # pool_layer: stride-2 conv on the same input -> reuse the im2col a1.
        res = jnp.dot(a1, wp_ref[...], preferred_element_type=jnp.float32) + bp_ref[...]
    else:
        # Identity residual: x itself in wide layout (= padded input shifted by
        # one row and one column).
        res = xstage_ref[0, pl.ds(Ws + 1, Q), :]

    # ---- conv2 (stride 1, pad 1): zero-pad h inside VMEM, one matmul --------
    hpad_ref[...] = jnp.zeros_like(hpad_ref)
    hpad_ref[pl.ds(Ws + 1, Q), :] = h                  # masked h => zero padding
    for dy in range(3):
        for dx in range(3):
            t = dy * 3 + dx
            im2_ref[:, t * cmid:(t + 1) * cmid] = hpad_ref[pl.ds(dy * Ws + dx, Q), :]
    a2 = im2_ref[...].astype(jnp.bfloat16)
    y2 = jnp.dot(a2, w2_ref[...], preferred_element_type=jnp.float32) + b2_ref[...]
    y2 = _gn_prelu(y2, mask, inv_count, g2_ref[...], be2_ref[...], alpha2)

    o_ref[0] = y2 + res


def _prep_wide_input(x_nhwc, stride, pad):
    """Zero-pad, parity-split (for stride 2) and row-flatten the input.

    Returns xps (B, stride*stride, LW, Cin) plus the wide-layout geometry.
    Total size ~= the padded input (no 9x im2col blow-up in HBM).
    """
    B, H, W, cin = x_nhwc.shape
    Ho = (H + 2 * pad - 3) // stride + 1
    Wo = (W + 2 * pad - 3) // stride + 1
    Ws = Wo + 2                 # wide row width (== conv2's padded width)
    Hs = Ho + 3                 # enough rows for the largest tap offset
    LW = Hs * Ws
    xp = jnp.pad(x_nhwc, ((0, 0), (pad, pad), (pad, pad), (0, 0)))
    subs = []
    for py in range(stride):
        for px in range(stride):
            sub = xp[:, py::stride, px::stride, :]
            sub = jnp.pad(sub, ((0, 0),
                                (0, Hs - sub.shape[1]),
                                (0, Ws - sub.shape[2]),
                                (0, 0)))
            subs.append(sub.reshape(B, LW, cin))
    xps = jnp.stack(subs, axis=1)                      # (B, s*s, LW, Cin)
    return xps, Ho, Wo, Ws, LW


class ForwardLayer:
    """JAX/Pallas port of Forward_layer (deterministic synthetic init).

    The whole forward pass runs as a single fused Pallas kernel; matmuls use
    bf16 operands with f32 accumulation, GroupNorm / PReLU / residual are f32.
    """

    def __init__(self, channels, pool=False, key=jax.random.PRNGKey(0)):
        self.pool = pool
        cin = channels
        cout = 2 * channels if pool else channels
        k = jax.random.split(key, 6)

        def conv_w(kk, ci, co):
            return jax.random.normal(kk, (3, 3, ci, co), jnp.float32) * 0.1

        # layer = Conv -> GN -> PReLU -> Conv -> GN -> PReLU
        self.w1 = conv_w(k[0], cin, cout)
        self.b1 = jax.random.normal(k[1], (cout,), jnp.float32) * 0.01
        self.g1 = jnp.ones((cout,), jnp.float32)       # GroupNorm weight
        self.be1 = jnp.zeros((cout,), jnp.float32)     # GroupNorm bias
        self.a1 = _PRELU_INIT                          # PReLU shared param
        self.w2 = conv_w(k[2], cout, cout)
        self.b2 = jax.random.normal(k[3], (cout,), jnp.float32) * 0.01
        self.g2 = jnp.ones((cout,), jnp.float32)
        self.be2 = jnp.zeros((cout,), jnp.float32)
        self.a2 = _PRELU_INIT
        if pool:
            # pool_layer = single stride-2 conv (no norm / activation)
            self.wp = conv_w(k[4], cin, cout)
            self.bp = jax.random.normal(k[5], (cout,), jnp.float32) * 0.01

    # ----- fused Pallas forward ----------------------------------------------
    def __call__(self, x_nchw):
        x = jnp.transpose(x_nchw, (0, 2, 3, 1))        # NCHW -> NHWC
        B, H, W, cin = x.shape
        cout = self.w1.shape[-1]
        stride, pad = (2, 3) if self.pool else (1, 1)

        xps, Ho, Wo, Ws, LW = _prep_wide_input(x, stride, pad)
        xps = xps.astype(jnp.bfloat16)                 # activations: bf16 in HBM
        Q = Ho * Ws
        npar = stride * stride

        # valid-position mask over the wide layout (garbage columns masked out)
        col = np.arange(Ws, dtype=np.int32)
        mask = np.tile((col < Wo).astype(np.float32), Ho).reshape(Q, 1)
        mask = jnp.asarray(mask)

        def vec(p):
            return p.reshape(1, cout).astype(jnp.float32)

        w1 = self.w1.reshape(9 * cin, cout).astype(jnp.bfloat16)
        w2 = self.w2.reshape(9 * cout, cout).astype(jnp.bfloat16)

        inputs = [xps, mask,
                  w1, vec(self.b1), vec(self.g1), vec(self.be1),
                  w2, vec(self.b2), vec(self.g2), vec(self.be2)]
        in_specs = [
            pl.BlockSpec((1, npar, LW, cin), lambda i: (i, 0, 0, 0)),
            pl.BlockSpec((Q, 1), lambda i: (0, 0)),
            pl.BlockSpec((9 * cin, cout), lambda i: (0, 0)),
            pl.BlockSpec((1, cout), lambda i: (0, 0)),
            pl.BlockSpec((1, cout), lambda i: (0, 0)),
            pl.BlockSpec((1, cout), lambda i: (0, 0)),
            pl.BlockSpec((9 * cout, cout), lambda i: (0, 0)),
            pl.BlockSpec((1, cout), lambda i: (0, 0)),
            pl.BlockSpec((1, cout), lambda i: (0, 0)),
            pl.BlockSpec((1, cout), lambda i: (0, 0)),
        ]
        if self.pool:
            wp = self.wp.reshape(9 * cin, cout).astype(jnp.bfloat16)
            inputs += [wp, vec(self.bp)]
            in_specs += [
                pl.BlockSpec((9 * cin, cout), lambda i: (0, 0)),
                pl.BlockSpec((1, cout), lambda i: (0, 0)),
            ]

        kernel = functools.partial(_fused_forward_kernel,
                                   stride, Ho, Wo, Ws,
                                   float(self.a1), float(self.a2), self.pool)
        # Note: at realistic channel counts the (P, C) output layout is
        # lane-dense; with the fused kernel only the single final result is
        # written to HBM, so the tiny-C masked store here is negligible.
        out = pl.pallas_call(
            kernel,
            out_shape=jax.ShapeDtypeStruct((B, Q, cout), jnp.float32),
            grid=(B,),
            in_specs=in_specs,
            out_specs=pl.BlockSpec((1, Q, cout), lambda i: (i, 0, 0)),
            scratch_shapes=[
                pltpu.VMEM((npar, LW, cin), jnp.float32),   # staged f32 input
                pltpu.VMEM((Q, 9 * cin), jnp.float32),      # conv1 im2col
                pltpu.VMEM((Q, 9 * cout), jnp.float32),     # conv2 im2col
                pltpu.VMEM((LW, cout), jnp.float32),        # zero-padded h
            ],
            compiler_params=pltpu.CompilerParams(
                dimension_semantics=("parallel",)),
        )(*inputs)

        out = out.reshape(B, Ho, Ws, cout)[:, :, :Wo, :]    # crop garbage cols
        return jnp.transpose(out, (0, 3, 1, 2))             # NHWC -> NCHW

    # ----- pure-JAX reference (lax.conv; same bf16 operand quantization) -----
    def reference(self, x_nchw):
        x = jnp.transpose(x_nchw, (0, 2, 3, 1))
        xb = x.astype(jnp.bfloat16)

        def conv(inp, w, b, stride, pad):
            y = jax.lax.conv_general_dilated(
                inp, w.astype(jnp.bfloat16),
                window_strides=(stride, stride),
                padding=((pad, pad), (pad, pad)),
                dimension_numbers=("NHWC", "HWIO", "NHWC"),
                preferred_element_type=jnp.float32)
            return y + b.reshape(1, 1, 1, -1)

        def gn_prelu(y, g, be, a):
            mean = jnp.mean(y, axis=(1, 2), keepdims=True)
            var = jnp.mean((y - mean) ** 2, axis=(1, 2), keepdims=True)
            yn = (y - mean) * jax.lax.rsqrt(var + _EPS)
            yn = yn * g.reshape(1, 1, 1, -1) + be.reshape(1, 1, 1, -1)
            return jnp.where(yn >= 0, yn, a * yn)

        if self.pool:
            res = conv(xb, self.wp, self.bp, 2, 3)
            h = gn_prelu(conv(xb, self.w1, self.b1, 2, 3), self.g1, self.be1, self.a1)
            y2 = gn_prelu(conv(h.astype(jnp.bfloat16), self.w2, self.b2, 1, 1),
                          self.g2, self.be2, self.a2)
            out = y2 + res
        else:
            h = gn_prelu(conv(xb, self.w1, self.b1, 1, 1), self.g1, self.be1, self.a1)
            y2 = gn_prelu(conv(h.astype(jnp.bfloat16), self.w2, self.b2, 1, 1),
                          self.g2, self.be2, self.a2)
            # the kernel reads its identity residual from the bf16 input copy
            out = y2 + xb.astype(jnp.float32)
        return jnp.transpose(out, (0, 3, 1, 2))


if __name__ == "__main__":
    key = jax.random.PRNGKey(0)
    x = jax.random.normal(key, (2, 4, 16, 16), jnp.float32)  # NCHW, like torch

    # pool=False : out shape (2, 4, 16, 16)
    layer = ForwardLayer(channels=4, pool=False, key=jax.random.PRNGKey(1))
    out = jax.block_until_ready(layer(x))
    ref = jax.block_until_ready(layer.reference(x))
    assert out.shape == (2, 4, 16, 16), out.shape
    np.testing.assert_allclose(np.asarray(out), np.asarray(ref),
                               rtol=1e-2, atol=1e-2)

    # pool=True : out shape (2, 8, 10, 10)
    layer_p = ForwardLayer(channels=4, pool=True, key=jax.random.PRNGKey(2))
    out_p = jax.block_until_ready(layer_p(x))
    ref_p = jax.block_until_ready(layer_p.reference(x))
    assert out_p.shape == (2, 8, 10, 10), out_p.shape
    np.testing.assert_allclose(np.asarray(out_p), np.asarray(ref_p),
                               rtol=1e-2, atol=1e-2)

    print("KERNEL_OK")
</pallas_src>

<mosaic_0001>
module attributes {stable_mosaic.version = 11 : i64} {
  func.func @_fused_forward_kernel(%arg0: i32, %arg1: memref<1x1x342x4xbf16, #tpu.memory_space<vmem>>, %arg2: memref<288x1xf32, #tpu.memory_space<vmem>>, %arg3: memref<36x4xbf16, #tpu.memory_space<vmem>>, %arg4: memref<1x4xf32, #tpu.memory_space<vmem>>, %arg5: memref<1x4xf32, #tpu.memory_space<vmem>>, %arg6: memref<1x4xf32, #tpu.memory_space<vmem>>, %arg7: memref<36x4xbf16, #tpu.memory_space<vmem>>, %arg8: memref<1x4xf32, #tpu.memory_space<vmem>>, %arg9: memref<1x4xf32, #tpu.memory_space<vmem>>, %arg10: memref<1x4xf32, #tpu.memory_space<vmem>>, %arg11: memref<1x288x4xf32, #tpu.memory_space<vmem>>, %arg12: memref<1x342x4xf32, #tpu.memory_space<vmem>>, %arg13: memref<288x36xf32, #tpu.memory_space<vmem>>, %arg14: memref<288x36xf32, #tpu.memory_space<vmem>>, %arg15: memref<342x4xf32, #tpu.memory_space<vmem>>) attributes {dimension_semantics = [#tpu.dimension_semantics<parallel>], iteration_bounds = array<i64: 2>, scalar_prefetch = 0 : i64, scratch_operands = 4 : i64, tpu.core_type = #tpu.core_type<tc>, window_params = [{transform_indices = @transform_0, window_bounds = array<i64: 1, 1, 342, 4>}, {pipeline_mode = #tpu.pipeline_mode<synchronous>, transform_indices = @transform_1, window_bounds = array<i64: 288, 1>}, {pipeline_mode = #tpu.pipeline_mode<synchronous>, transform_indices = @transform_2, window_bounds = array<i64: 36, 4>}, {pipeline_mode = #tpu.pipeline_mode<synchronous>, transform_indices = @transform_3, window_bounds = array<i64: 1, 4>}, {pipeline_mode = #tpu.pipeline_mode<synchronous>, transform_indices = @transform_4, window_bounds = array<i64: 1, 4>}, {pipeline_mode = #tpu.pipeline_mode<synchronous>, transform_indices = @transform_5, window_bounds = array<i64: 1, 4>}, {pipeline_mode = #tpu.pipeline_mode<synchronous>, transform_indices = @transform_6, window_bounds = array<i64: 36, 4>}, {pipeline_mode = #tpu.pipeline_mode<synchronous>, transform_indices = @transform_7, window_bounds = array<i64: 1, 4>}, {pipeline_mode = #tpu.pipeline_mode<synchronous>, transform_indices = @transform_8, window_bounds = array<i64: 1, 4>}, {pipeline_mode = #tpu.pipeline_mode<synchronous>, transform_indices = @transform_9, window_bounds = array<i64: 1, 4>}, {transform_indices = @transform_10, window_bounds = array<i64: 1, 288, 4>}]} {
    %c0 = arith.constant 0 : index
    %c0_0 = arith.constant 0 : index
    %0 = vector.load %arg2[%c0, %c0_0] : memref<288x1xf32, #tpu.memory_space<vmem>>, vector<288x1xf32>
    %c0_1 = arith.constant 0 : index
    %c0_2 = arith.constant 0 : index
    %c0_3 = arith.constant 0 : index
    %c0_4 = arith.constant 0 : index
    %1 = vector.load %arg1[%c0_1, %c0_2, %c0_3, %c0_4] : memref<1x1x342x4xbf16, #tpu.memory_space<vmem>>, vector<1x1x342x4xbf16>
    %2 = vector.shape_cast %1 : vector<1x1x342x4xbf16> to vector<1x342x4xbf16>
    %3 = arith.extf %2 : vector<1x342x4xbf16> to vector<1x342x4xf32>
    %c0_5 = arith.constant 0 : index
    %c0_6 = arith.constant 0 : index
    %c0_7 = arith.constant 0 : index
    %4 = vector.load %arg12[%c0_5, %c0_6, %c0_7] : memref<1x342x4xf32, #tpu.memory_space<vmem>>, vector<1x342x4xf32>
    tpu.vector_store %arg12[%c0_5, %c0_6, %c0_7], %3 {strides = array<i32>} : memref<1x342x4xf32, #tpu.memory_space<vmem>>, vector<1x342x4xf32>,
    %c0_8 = arith.constant 0 : index
    %c0_9 = arith.constant 0 : index
    %c0_10 = arith.constant 0 : index
    %5 = vector.load %arg12[%c0_8, %c0_9, %c0_10] : memref<1x342x4xf32, #tpu.memory_space<vmem>>, vector<1x288x4xf32>
    %6 = vector.shape_cast %5 : vector<1x288x4xf32> to vector<288x4xf32>
    %c0_11 = arith.constant 0 : index
    %c0_12 = arith.constant 0 : index
    %7 = vector.load %arg13[%c0_11, %c0_12] : memref<288x36xf32, #tpu.memory_space<vmem>>, vector<288x4xf32>
    tpu.vector_store %arg13[%c0_11, %c0_12], %6 {strides = array<i32>} : memref<288x36xf32, #tpu.memory_space<vmem>>, vector<288x4xf32>,
    %c0_13 = arith.constant 0 : index
    %c1 = arith.constant 1 : index
    %c0_14 = arith.constant 0 : index
    %8 = vector.load %arg12[%c0_13, %c1, %c0_14] : memref<1x342x4xf32, #tpu.memory_space<vmem>>, vector<1x288x4xf32>
    %9 = vector.shape_cast %8 : vector<1x288x4xf32> to vector<288x4xf32>
    %c0_15 = arith.constant 0 : index
    %c4 = arith.constant 4 : index
    %10 = vector.load %arg13[%c0_15, %c4] : memref<288x36xf32, #tpu.memory_space<vmem>>, vector<288x4xf32>
    tpu.vector_store %arg13[%c0_15, %c4], %9 {strides = array<i32>} : memref<288x36xf32, #tpu.memory_space<vmem>>, vector<288x4xf32>,
    %c0_16 = arith.constant 0 : index
    %c2 = arith.constant 2 : index
    %c0_17 = arith.constant 0 : index
    %11 = vector.load %arg12[%c0_16, %c2, %c0_17] : memref<1x342x4xf32, #tpu.memory_space<vmem>>, vector<1x288x4xf32>
    %12 = vector.shape_cast %11 : vector<1x288x4xf32> to vector<288x4xf32>
    %c0_18 = arith.constant 0 : index
    %c8 = arith.constant 8 : index
    %13 = vector.load %arg13[%c0_18, %c8] : memref<288x36xf32, #tpu.memory_space<vmem>>, vector<288x4xf32>
    tpu.vector_store %arg13[%c0_18, %c8], %12 {strides = array<i32>} : memref<288x36xf32, #tpu.memory_space<vmem>>, vector<288x4xf32>,
    %c0_19 = arith.constant 0 : index
    %c18 = arith.constant 18 : index
    %c0_20 = arith.constant 0 : index
    %14 = vector.load %arg12[%c0_19, %c18, %c0_20] : memref<1x342x4xf32, #tpu.memory_space<vmem>>, vector<1x288x4xf32>
    %15 = vector.shape_cast %14 : vector<1x288x4xf32> to vector<288x4xf32>
    %c0_21 = arith.constant 0 : index
    %c12 = arith.constant 12 : index
    %16 = vector.load %arg13[%c0_21, %c12] : memref<288x36xf32, #tpu.memory_space<vmem>>, vector<288x4xf32>
    tpu.vector_store %arg13[%c0_21, %c12], %15 {strides = array<i32>} : memref<288x36xf32, #tpu.memory_space<vmem>>, vector<288x4xf32>,
    %c0_22 = arith.constant 0 : index
    %c19 = arith.constant 19 : index
    %c0_23 = arith.constant 0 : index
    %17 = vector.load %arg12[%c0_22, %c19, %c0_23] : memref<1x342x4xf32, #tpu.memory_space<vmem>>, vector<1x288x4xf32>
    %18 = vector.shape_cast %17 : vector<1x288x4xf32> to vector<288x4xf32>
    %c0_24 = arith.constant 0 : index
    %c16 = arith.constant 16 : index
    %19 = vector.load %arg13[%c0_24, %c16] : memref<288x36xf32, #tpu.memory_space<vmem>>, vector<288x4xf32>
    tpu.vector_store %arg13[%c0_24, %c16], %18 {strides = array<i32>} : memref<288x36xf32, #tpu.memory_space<vmem>>, vector<288x4xf32>,
    %c0_25 = arith.constant 0 : index
    %c20 = arith.constant 20 : index
    %c0_26 = arith.constant 0 : index
    %20 = vector.load %arg12[%c0_25, %c20, %c0_26] : memref<1x342x4xf32, #tpu.memory_space<vmem>>, vector<1x288x4xf32>
    %21 = vector.shape_cast %20 : vector<1x288x4xf32> to vector<288x4xf32>
    %c0_27 = arith.constant 0 : index
    %c20_28 = arith.constant 20 : index
    %22 = vector.load %arg13[%c0_27, %c20_28] : memref<288x36xf32, #tpu.memory_space<vmem>>, vector<288x4xf32>
    tpu.vector_store %arg13[%c0_27, %c20_28], %21 {strides = array<i32>} : memref<288x36xf32, #tpu.memory_space<vmem>>, vector<288x4xf32>,
    %c0_29 = arith.constant 0 : index
    %c36 = arith.constant 36 : index
    %c0_30 = arith.constant 0 : index
    %23 = vector.load %arg12[%c0_29, %c36, %c0_30] : memref<1x342x4xf32, #tpu.memory_space<vmem>>, vector<1x288x4xf32>
    %24 = vector.shape_cast %23 : vector<1x288x4xf32> to vector<288x4xf32>
    %c0_31 = arith.constant 0 : index
    %c24 = arith.constant 24 : index
    %25 = vector.load %arg13[%c0_31, %c24] : memref<288x36xf32, #tpu.memory_space<vmem>>, vector<288x4xf32>
    tpu.vector_store %arg13[%c0_31, %c24], %24 {strides = array<i32>} : memref<288x36xf32, #tpu.memory_space<vmem>>, vector<288x4xf32>,
    %c0_32 = arith.constant 0 : index
    %c37 = arith.constant 37 : index
    %c0_33 = arith.constant 0 : index
    %26 = vector.load %arg12[%c0_32, %c37, %c0_33] : memref<1x342x4xf32, #tpu.memory_space<vmem>>, vector<1x288x4xf32>
    %27 = vector.shape_cast %26 : vector<1x288x4xf32> to vector<288x4xf32>
    %c0_34 = arith.constant 0 : index
    %c28 = arith.constant 28 : index
    %28 = vector.load %arg13[%c0_34, %c28] : memref<288x36xf32, #tpu.memory_space<vmem>>, vector<288x4xf32>
    tpu.vector_store %arg13[%c0_34, %c28], %27 {strides = array<i32>} : memref<288x36xf32, #tpu.memory_space<vmem>>, vector<288x4xf32>,
    %c0_35 = arith.constant 0 : index
    %c38 = arith.constant 38 : index
    %c0_36 = arith.constant 0 : index
    %29 = vector.load %arg12[%c0_35, %c38, %c0_36] : memref<1x342x4xf32, #tpu.memory_space<vmem>>, vector<1x288x4xf32>
    %30 = vector.shape_cast %29 : vector<1x288x4xf32> to vector<288x4xf32>
    %c0_37 = arith.constant 0 : index
    %c32 = arith.constant 32 : index
    %31 = vector.load %arg13[%c0_37, %c32] : memref<288x36xf32, #tpu.memory_space<vmem>>, vector<288x4xf32>
    tpu.vector_store %arg13[%c0_37, %c32], %30 {strides = array<i32>} : memref<288x36xf32, #tpu.memory_space<vmem>>, vector<288x4xf32>,
    %c0_38 = arith.constant 0 : index
    %c0_39 = arith.constant 0 : index
    %32 = vector.load %arg13[%c0_38, %c0_39] : memref<288x36xf32, #tpu.memory_space<vmem>>, vector<288x36xf32>
    %33 = arith.truncf %32 : vector<288x36xf32> to vector<288x36xbf16>
    %c0_40 = arith.constant 0 : index
    %c0_41 = arith.constant 0 : index
    %34 = vector.load %arg3[%c0_40, %c0_41] : memref<36x4xbf16, #tpu.memory_space<vmem>>, vector<36x4xbf16>
    %cst = arith.constant dense<0.000000e+00> : vector<288x4xf32>
    %35 = tpu.matmul %33, %34, %cst {dimension_numbers = #tpu.dot_dimension_numbers<[1], [0], [0], [1], [0, 0, 1, 1], [], []>} : vector<288x36xbf16>, vector<36x4xbf16>, vector<288x4xf32> -> vector<288x4xf32>
    %c0_42 = arith.constant 0 : index
    %c0_43 = arith.constant 0 : index
    %36 = vector.load %arg4[%c0_42, %c0_43] : memref<1x4xf32, #tpu.memory_space<vmem>>, vector<1x4xf32>
    %37 = vector.broadcast %36 : vector<1x4xf32> to vector<288x4xf32>
    %38 = arith.addf %35, %37 : vector<288x4xf32>
    %c0_44 = arith.constant 0 : index
    %c0_45 = arith.constant 0 : index
    %39 = vector.load %arg5[%c0_44, %c0_45] : memref<1x4xf32, #tpu.memory_space<vmem>>, vector<1x4xf32>
    %c0_46 = arith.constant 0 : index
    %c0_47 = arith.constant 0 : index
    %40 = vector.load %arg6[%c0_46, %c0_47] : memref<1x4xf32, #tpu.memory_space<vmem>>, vector<1x4xf32>
    %41 = vector.broadcast %0 : vector<288x1xf32> to vector<288x4xf32>
    %42 = arith.mulf %38, %41 : vector<288x4xf32>
    %cst_48 = arith.constant dense<0.000000e+00> : vector<4xf32>
    %43 = vector.multi_reduction <add>, %42, %cst_48 [0] : vector<288x4xf32> to vector<4xf32>
    %44 = vector.shape_cast %43 : vector<4xf32> to vector<1x4xf32>
    %45 = arith.mulf %42, %38 : vector<288x4xf32>
    %cst_49 = arith.constant dense<0.000000e+00> : vector<4xf32>
    %46 = vector.multi_reduction <add>, %45, %cst_49 [0] : vector<288x4xf32> to vector<4xf32>
    %47 = vector.shape_cast %46 : vector<4xf32> to vector<1x4xf32>
    %cst_50 = arith.constant 3.906250e-03 : f32
    %48 = vector.broadcast %cst_50 : f32 to vector<1x4xf32>
    %49 = arith.mulf %44, %48 : vector<1x4xf32>
    %cst_51 = arith.constant 3.906250e-03 : f32
    %50 = vector.broadcast %cst_51 : f32 to vector<1x4xf32>
    %51 = arith.mulf %47, %50 : vector<1x4xf32>
    %52 = arith.mulf %49, %49 : vector<1x4xf32>
    %53 = arith.subf %51, %52 : vector<1x4xf32>
    %cst_52 = arith.constant 0.000000e+00 : f32
    %54 = vector.broadcast %cst_52 : f32 to vector<1x4xf32>
    %55 = arith.maximumf %53, %54 : vector<1x4xf32>
    %56 = vector.broadcast %49 : vector<1x4xf32> to vector<288x4xf32>
    %57 = arith.subf %38, %56 : vector<288x4xf32>
    %cst_53 = arith.constant 9.99999974E-6 : f32
    %58 = vector.broadcast %cst_53 : f32 to vector<1x4xf32>
    %59 = arith.addf %55, %58 : vector<1x4xf32>
    %60 = math.rsqrt %59 : vector<1x4xf32>
    %61 = vector.broadcast %60 : vector<1x4xf32> to vector<288x4xf32>
    %62 = arith.mulf %57, %61 : vector<288x4xf32>
    %63 = vector.broadcast %39 : vector<1x4xf32> to vector<288x4xf32>
    %64 = arith.mulf %62, %63 : vector<288x4xf32>
    %65 = vector.broadcast %40 : vector<1x4xf32> to vector<288x4xf32>
    %66 = arith.addf %64, %65 : vector<288x4xf32>
    %cst_54 = arith.constant 0.000000e+00 : f32
    %67 = vector.broadcast %cst_54 : f32 to vector<288x4xf32>
    %68 = arith.cmpf oge, %66, %67 : vector<288x4xf32>
    %cst_55 = arith.constant 2.500000e-01 : f32
    %69 = vector.broadcast %cst_55 : f32 to vector<288x4xf32>
    %70 = arith.mulf %69, %66 : vector<288x4xf32>
    %71 = arith.select %68, %66, %70 : vector<288x4xi1>, vector<288x4xf32>
    %72 = vector.broadcast %0 : vector<288x1xf32> to vector<288x4xf32>
    %73 = arith.mulf %71, %72 : vector<288x4xf32>
    %c0_56 = arith.constant 0 : index
    %c19_57 = arith.constant 19 : index
    %c0_58 = arith.constant 0 : index
    %74 = vector.load %arg12[%c0_56, %c19_57, %c0_58] : memref<1x342x4xf32, #tpu.memory_space<vmem>>, vector<1x288x4xf32>
    %75 = vector.shape_cast %74 : vector<1x288x4xf32> to vector<288x4xf32>
    %cst_59 = arith.constant 0.000000e+00 : f32
    %76 = vector.broadcast %cst_59 : f32 to vector<342x4xf32>
    %c0_60 = arith.constant 0 : index
    %c0_61 = arith.constant 0 : index
    %77 = vector.load %arg15[%c0_60, %c0_61] : memref<342x4xf32, #tpu.memory_space<vmem>>, vector<342x4xf32>
    tpu.vector_store %arg15[%c0_60, %c0_61], %76 {strides = array<i32>} : memref<342x4xf32, #tpu.memory_space<vmem>>, vector<342x4xf32>,
    %c19_62 = arith.constant 19 : index
    %c0_63 = arith.constant 0 : index
    %78 = vector.load %arg15[%c19_62, %c0_63] : memref<342x4xf32, #tpu.memory_space<vmem>>, vector<288x4xf32>
    tpu.vector_store %arg15[%c19_62, %c0_63], %73 {strides = array<i32>} : memref<342x4xf32, #tpu.memory_space<vmem>>, vector<288x4xf32>,
    %c0_64 = arith.constant 0 : index
    %c0_65 = arith.constant 0 : index
    %79 = vector.load %arg15[%c0_64, %c0_65] : memref<342x4xf32, #tpu.memory_space<vmem>>, vector<288x4xf32>
    %c0_66 = arith.constant 0 : index
    %c0_67 = arith.constant 0 : index
    %80 = vector.load %arg14[%c0_66, %c0_67] : memref<288x36xf32, #tpu.memory_space<vmem>>, vector<288x4xf32>
    tpu.vector_store %arg14[%c0_66, %c0_67], %79 {strides = array<i32>} : memref<288x36xf32, #tpu.memory_space<vmem>>, vector<288x4xf32>,
    %c1_68 = arith.constant 1 : index
    %c0_69 = arith.constant 0 : index
    %81 = vector.load %arg15[%c1_68, %c0_69] : memref<342x4xf32, #tpu.memory_space<vmem>>, vector<288x4xf32>
    %c0_70 = arith.constant 0 : index
    %c4_71 = arith.constant 4 : index
    %82 = vector.load %arg14[%c0_70, %c4_71] : memref<288x36xf32, #tpu.memory_space<vmem>>, vector<288x4xf32>
    tpu.vector_store %arg14[%c0_70, %c4_71], %81 {strides = array<i32>} : memref<288x36xf32, #tpu.memory_space<vmem>>, vector<288x4xf32>,
    %c2_72 = arith.constant 2 : index
    %c0_73 = arith.constant 0 : index
    %83 = vector.load %arg15[%c2_72, %c0_73] : memref<342x4xf32, #tpu.memory_space<vmem>>, vector<288x4xf32>
    %c0_74 = arith.constant 0 : index
    %c8_75 = arith.constant 8 : index
    %84 = vector.load %arg14[%c0_74, %c8_75] : memref<288x36xf32, #tpu.memory_space<vmem>>, vector<288x4xf32>
    tpu.vector_store %arg14[%c0_74, %c8_75], %83 {strides = array<i32>} : memref<288x36xf32, #tpu.memory_space<vmem>>, vector<288x4xf32>,
    %c18_76 = arith.constant 18 : index
    %c0_77 = arith.constant 0 : index
    %85 = vector.load %arg15[%c18_76, %c0_77] : memref<342x4xf32, #tpu.memory_space<vmem>>, vector<288x4xf32>
    %c0_78 = arith.constant 0 : index
    %c12_79 = arith.constant 12 : index
    %86 = vector.load %arg14[%c0_78, %c12_79] : memref<288x36xf32, #tpu.memory_space<vmem>>, vector<288x4xf32>
    tpu.vector_store %arg14[%c0_78, %c12_79], %85 {strides = array<i32>} : memref<288x36xf32, #tpu.memory_space<vmem>>, vector<288x4xf32>,
    %c19_80 = arith.constant 19 : index
    %c0_81 = arith.constant 0 : index
    %87 = vector.load %arg15[%c19_80, %c0_81] : memref<342x4xf32, #tpu.memory_space<vmem>>, vector<288x4xf32>
    %c0_82 = arith.constant 0 : index
    %c16_83 = arith.constant 16 : index
    %88 = vector.load %arg14[%c0_82, %c16_83] : memref<288x36xf32, #tpu.memory_space<vmem>>, vector<288x4xf32>
    tpu.vector_store %arg14[%c0_82, %c16_83], %87 {strides = array<i32>} : memref<288x36xf32, #tpu.memory_space<vmem>>, vector<288x4xf32>,
    %c20_84 = arith.constant 20 : index
    %c0_85 = arith.constant 0 : index
    %89 = vector.load %arg15[%c20_84, %c0_85] : memref<342x4xf32, #tpu.memory_space<vmem>>, vector<288x4xf32>
    %c0_86 = arith.constant 0 : index
    %c20_87 = arith.constant 20 : index
    %90 = vector.load %arg14[%c0_86, %c20_87] : memref<288x36xf32, #tpu.memory_space<vmem>>, vector<288x4xf32>
    tpu.vector_store %arg14[%c0_86, %c20_87], %89 {strides = array<i32>} : memref<288x36xf32, #tpu.memory_space<vmem>>, vector<288x4xf32>,
    %c36_88 = arith.constant 36 : index
    %c0_89 = arith.constant 0 : index
    %91 = vector.load %arg15[%c36_88, %c0_89] : memref<342x4xf32, #tpu.memory_space<vmem>>, vector<288x4xf32>
    %c0_90 = arith.constant 0 : index
    %c24_91 = arith.constant 24 : index
    %92 = vector.load %arg14[%c0_90, %c24_91] : memref<288x36xf32, #tpu.memory_space<vmem>>, vector<288x4xf32>
    tpu.vector_store %arg14[%c0_90, %c24_91], %91 {strides = array<i32>} : memref<288x36xf32, #tpu.memory_space<vmem>>, vector<288x4xf32>,
    %c37_92 = arith.constant 37 : index
    %c0_93 = arith.constant 0 : index
    %93 = vector.load %arg15[%c37_92, %c0_93] : memref<342x4xf32, #tpu.memory_space<vmem>>, vector<288x4xf32>
    %c0_94 = arith.constant 0 : index
    %c28_95 = arith.constant 28 : index
    %94 = vector.load %arg14[%c0_94, %c28_95] : memref<288x36xf32, #tpu.memory_space<vmem>>, vector<288x4xf32>
    tpu.vector_store %arg14[%c0_94, %c28_95], %93 {strides = array<i32>} : memref<288x36xf32, #tpu.memory_space<vmem>>, vector<288x4xf32>,
    %c38_96 = arith.constant 38 : index
    %c0_97 = arith.constant 0 : index
    %95 = vector.load %arg15[%c38_96, %c0_97] : memref<342x4xf32, #tpu.memory_space<vmem>>, vector<288x4xf32>
    %c0_98 = arith.constant 0 : index
    %c32_99 = arith.constant 32 : index
    %96 = vector.load %arg14[%c0_98, %c32_99] : memref<288x36xf32, #tpu.memory_space<vmem>>, vector<288x4xf32>
    tpu.vector_store %arg14[%c0_98, %c32_99], %95 {strides = array<i32>} : memref<288x36xf32, #tpu.memory_space<vmem>>, vector<288x4xf32>,
    %c0_100 = arith.constant 0 : index
    %c0_101 = arith.constant 0 : index
    %97 = vector.load %arg14[%c0_100, %c0_101] : memref<288x36xf32, #tpu.memory_space<vmem>>, vector<288x36xf32>
    %98 = arith.truncf %97 : vector<288x36xf32> to vector<288x36xbf16>
    %c0_102 = arith.constant 0 : index
    %c0_103 = arith.constant 0 : index
    %99 = vector.load %arg7[%c0_102, %c0_103] : memref<36x4xbf16, #tpu.memory_space<vmem>>, vector<36x4xbf16>
    %cst_104 = arith.constant dense<0.000000e+00> : vector<288x4xf32>
    %100 = tpu.matmul %98, %99, %cst_104 {dimension_numbers = #tpu.dot_dimension_numbers<[1], [0], [0], [1], [0, 0, 1, 1], [], []>} : vector<288x36xbf16>, vector<36x4xbf16>, vector<288x4xf32> -> vector<288x4xf32>
    %c0_105 = arith.constant 0 : index
    %c0_106 = arith.constant 0 : index
    %101 = vector.load %arg8[%c0_105, %c0_106] : memref<1x4xf32, #tpu.memory_space<vmem>>, vector<1x4xf32>
    %102 = vector.broadcast %101 : vector<1x4xf32> to vector<288x4xf32>
    %103 = arith.addf %100, %102 : vector<288x4xf32>
    %c0_107 = arith.constant 0 : index
    %c0_108 = arith.constant 0 : index
    %104 = vector.load %arg9[%c0_107, %c0_108] : memref<1x4xf32, #tpu.memory_space<vmem>>, vector<1x4xf32>
    %c0_109 = arith.constant 0 : index
    %c0_110 = arith.constant 0 : index
    %105 = vector.load %arg10[%c0_109, %c0_110] : memref<1x4xf32, #tpu.memory_space<vmem>>, vector<1x4xf32>
    %106 = vector.broadcast %0 : vector<288x1xf32> to vector<288x4xf32>
    %107 = arith.mulf %103, %106 : vector<288x4xf32>
    %cst_111 = arith.constant dense<0.000000e+00> : vector<4xf32>
    %108 = vector.multi_reduction <add>, %107, %cst_111 [0] : vector<288x4xf32> to vector<4xf32>
    %109 = vector.shape_cast %108 : vector<4xf32> to vector<1x4xf32>
    %110 = arith.mulf %107, %103 : vector<288x4xf32>
    %cst_112 = arith.constant dense<0.000000e+00> : vector<4xf32>
    %111 = vector.multi_reduction <add>, %110, %cst_112 [0] : vector<288x4xf32> to vector<4xf32>
    %112 = vector.shape_cast %111 : vector<4xf32> to vector<1x4xf32>
    %cst_113 = arith.constant 3.906250e-03 : f32
    %113 = vector.broadcast %cst_113 : f32 to vector<1x4xf32>
    %114 = arith.mulf %109, %113 : vector<1x4xf32>
    %cst_114 = arith.constant 3.906250e-03 : f32
    %115 = vector.broadcast %cst_114 : f32 to vector<1x4xf32>
    %116 = arith.mulf %112, %115 : vector<1x4xf32>
    %117 = arith.mulf %114, %114 : vector<1x4xf32>
    %118 = arith.subf %116, %117 : vector<1x4xf32>
    %cst_115 = arith.constant 0.000000e+00 : f32
    %119 = vector.broadcast %cst_115 : f32 to vector<1x4xf32>
    %120 = arith.maximumf %118, %119 : vector<1x4xf32>
    %121 = vector.broadcast %114 : vector<1x4xf32> to vector<288x4xf32>
    %122 = arith.subf %103, %121 : vector<288x4xf32>
    %cst_116 = arith.constant 9.99999974E-6 : f32
    %123 = vector.broadcast %cst_116 : f32 to vector<1x4xf32>
    %124 = arith.addf %120, %123 : vector<1x4xf32>
    %125 = math.rsqrt %124 : vector<1x4xf32>
    %126 = vector.broadcast %125 : vector<1x4xf32> to vector<288x4xf32>
    %127 = arith.mulf %122, %126 : vector<288x4xf32>
    %128 = vector.broadcast %104 : vector<1x4xf32> to vector<288x4xf32>
    %129 = arith.mulf %127, %128 : vector<288x4xf32>
    %130 = vector.broadcast %105 : vector<1x4xf32> to vector<288x4xf32>
    %131 = arith.addf %129, %130 : vector<288x4xf32>
    %cst_117 = arith.constant 0.000000e+00 : f32
    %132 = vector.broadcast %cst_117 : f32 to vector<288x4xf32>
    %133 = arith.cmpf oge, %131, %132 : vector<288x4xf32>
    %cst_118 = arith.constant 2.500000e-01 : f32
    %134 = vector.broadcast %cst_118 : f32 to vector<288x4xf32>
    %135 = arith.mulf %134, %131 : vector<288x4xf32>
    %136 = arith.select %133, %131, %135 : vector<288x4xi1>, vector<288x4xf32>
    %137 = vector.broadcast %0 : vector<288x1xf32> to vector<288x4xf32>
    %138 = arith.mulf %136, %137 : vector<288x4xf32>
    %139 = arith.addf %138, %75 : vector<288x4xf32>
    %c0_119 = arith.constant 0 : index
    %c0_120 = arith.constant 0 : index
    %c0_121 = arith.constant 0 : index
    %140 = vector.load %arg11[%c0_119, %c0_120, %c0_121] : memref<1x288x4xf32, #tpu.memory_space<vmem>>, vector<1x288x4xf32>
    %141 = vector.shape_cast %140 : vector<1x288x4xf32> to vector<288x4xf32>
    %142 = vector.shape_cast %139 : vector<288x4xf32> to vector<1x288x4xf32>
    tpu.vector_store %arg11[%c0_119, %c0_120, %c0_121], %142 {strides = array<i32>} : memref<1x288x4xf32, #tpu.memory_space<vmem>>, vector<1x288x4xf32>,
    return
  }
  func.func @transform_0(%arg0: i32) -> (i32, i32, i32, i32) {
    %c0_i32 = arith.constant 0 : i32
    %c0_i32_0 = arith.constant 0 : i32
    %c0_i32_1 = arith.constant 0 : i32
    %c0_i32_2 = arith.constant 0 : i32
    return %arg0, %c0_i32, %c0_i32_0, %c0_i32_1 : i32, i32, i32, i32
  }
  func.func @transform_1(%arg0: i32) -> (i32, i32) {
    %c0_i32 = arith.constant 0 : i32
    %c0_i32_0 = arith.constant 0 : i32
    %c0_i32_1 = arith.constant 0 : i32
    return %c0_i32, %c0_i32_0 : i32, i32
  }
  func.func @transform_2(%arg0: i32) -> (i32, i32) {
    %c0_i32 = arith.constant 0 : i32
    %c0_i32_0 = arith.constant 0 : i32
    %c0_i32_1 = arith.constant 0 : i32
    return %c0_i32, %c0_i32_0 : i32, i32
  }
  func.func @transform_3(%arg0: i32) -> (i32, i32) {
    %c0_i32 = arith.constant 0 : i32
    %c0_i32_0 = arith.constant 0 : i32
    %c0_i32_1 = arith.constant 0 : i32
    return %c0_i32, %c0_i32_0 : i32, i32
  }
  func.func @transform_4(%arg0: i32) -> (i32, i32) {
    %c0_i32 = arith.constant 0 : i32
    %c0_i32_0 = arith.constant 0 : i32
    %c0_i32_1 = arith.constant 0 : i32
    return %c0_i32, %c0_i32_0 : i32, i32
  }
  func.func @transform_5(%arg0: i32) -> (i32, i32) {
    %c0_i32 = arith.constant 0 : i32
    %c0_i32_0 = arith.constant 0 : i32
    %c0_i32_1 = arith.constant 0 : i32
    return %c0_i32, %c0_i32_0 : i32, i32
  }
  func.func @transform_6(%arg0: i32) -> (i32, i32) {
    %c0_i32 = arith.constant 0 : i32
    %c0_i32_0 = arith.constant 0 : i32
    %c0_i32_1 = arith.constant 0 : i32
    return %c0_i32, %c0_i32_0 : i32, i32
  }
  func.func @transform_7(%arg0: i32) -> (i32, i32) {
    %c0_i32 = arith.constant 0 : i32
    %c0_i32_0 = arith.constant 0 : i32
    %c0_i32_1 = arith.constant 0 : i32
    return %c0_i32, %c0_i32_0 : i32, i32
  }
  func.func @transform_8(%arg0: i32) -> (i32, i32) {
    %c0_i32 = arith.constant 0 : i32
    %c0_i32_0 = arith.constant 0 : i32
    %c0_i32_1 = arith.constant 0 : i32
    return %c0_i32, %c0_i32_0 : i32, i32
  }
  func.func @transform_9(%arg0: i32) -> (i32, i32) {
    %c0_i32 = arith.constant 0 : i32
    %c0_i32_0 = arith.constant 0 : i32
    %c0_i32_1 = arith.constant 0 : i32
    return %c0_i32, %c0_i32_0 : i32, i32
  }
  func.func @transform_10(%arg0: i32) -> (i32, i32, i32) {
    %c0_i32 = arith.constant 0 : i32
    %c0_i32_0 = arith.constant 0 : i32
    %c0_i32_1 = arith.constant 0 : i32
    return %arg0, %c0_i32, %c0_i32_0 : i32, i32, i32
  }
}

</mosaic_0001>

<llo_original>
// kernel: tpu_custom_call.1
$region0: #{tpu_custom_call.1}
  #allocation0 [shape = 'u32[]', space=smem, size = 0x4, offset = 0x4, fixed_abs, tag = 'smem constant byte address 0x4 - core index']
  #allocation1 [shape = 'u32[72,128]{1,0:T(1,128)}', space=vmem, size = 0x9000, scoped, tag = 'internal scratch']
  #allocation2 [shape = 'f32[1,342,4]{2,1,0:T(8,128)}', space=vmem, size = 0x2b000, scoped, tag = 'scratch operand']
  #allocation3 [shape = 'f32[288,36]{1,0:T(8,128)}', space=vmem, size = 0x24000, scoped, tag = 'scratch operand']
  #allocation4 [shape = 'f32[288,36]{1,0:T(8,128)}', space=vmem, size = 0x24000, scoped, tag = 'scratch operand']
  #allocation5 [shape = 'f32[342,4]{1,0:T(8,128)}', space=vmem, size = 0x2b000, scoped, tag = 'scratch operand']
  %s0 = inlined_call_operand.vmem [shape: bf16[2,1,342,4], index: 0, kind: input, shape index: {}]
  %s1 = inlined_call_operand.vmem [shape: f32[288,1], index: 1, kind: input, shape index: {}]
  %s2 = inlined_call_operand.vmem [shape: bf16[36,4], index: 2, kind: input, shape index: {}]
  %s3 = inlined_call_operand.vmem [shape: f32[1,4], index: 3, kind: input, shape index: {}]
  %s4 = inlined_call_operand.vmem [shape: f32[1,4], index: 4, kind: input, shape index: {}]
  %s5 = inlined_call_operand.vmem [shape: f32[1,4], index: 5, kind: input, shape index: {}]
  %s6 = inlined_call_operand.vmem [shape: bf16[36,4], index: 6, kind: input, shape index: {}]
  %s7 = inlined_call_operand.vmem [shape: f32[1,4], index: 7, kind: input, shape index: {}]
  %s8 = inlined_call_operand.vmem [shape: f32[1,4], index: 8, kind: input, shape index: {}]
  %s9 = inlined_call_operand.vmem [shape: f32[1,4], index: 9, kind: input, shape index: {}]
  %s10 = inlined_call_operand.vmem [shape: f32[2,288,4], index: 10, kind: output, shape index: {}]
  %s11 = sld [smem:[#allocation0]]
  $region73: #{tpu_custom_call.1} parent=0
    _
  %s13 = ssub.s32 1, %s11
  %s14 = scalar_select 0, %s13, %s11
  loop: start=0, step=1, limit=4
  $region2: #{tpu_custom_call.1} parent=0 // loop_pre_header
    _
  $region3: #{tpu_custom_call.1} parent=0 // loop_header
    %s16 = sphi 0, %s20
    %p17 = scmp.ge.s32.totalorder %s16, 4
    %s26 = sphi 0, %s28
    %s29 = sphi 0, %s26
    %s30 = sphi 0, %s29
    %s46 = sphi 0, %s30
    %s50 = sphi 0, %s50
    %s52 = sphi 0, %s50
    %s53 = sphi 0, %s52
    %s67 = sphi 0, %s53
    %s71 = sphi 0, %s71
    %s73 = sphi 0, %s71
    %s74 = sphi 0, %s73
    %s88 = sphi 0, %s74
    %s92 = sphi 0, %s92
    %s94 = sphi 0, %s92
    %s95 = sphi 0, %s94
    %s109 = sphi 0, %s95
    %s113 = sphi 0, %s113
    %s115 = sphi 0, %s113
    %s116 = sphi 0, %s115
    %s130 = sphi 0, %s116
    %s134 = sphi 0, %s134
    %s136 = sphi 0, %s134
    %s137 = sphi 0, %s136
    %s151 = sphi 0, %s137
    %s155 = sphi 0, %s155
    %s157 = sphi 0, %s155
    %s158 = sphi 0, %s157
    %s172 = sphi 0, %s158
    %s176 = sphi 0, %s176
    %s178 = sphi 0, %s176
    %s179 = sphi 0, %s178
    %s193 = sphi 0, %s179
    %s197 = sphi 0, %s197
    %s199 = sphi 0, %s197
    %s200 = sphi 0, %s199
    %s214 = sphi 0, %s200
    %s218 = sphi 0, %s218
    %s220 = sphi 0, %s218
    %s221 = sphi 0, %s220
    %s235 = sphi 0, %s221
    %s241 = sphi 0, %s243
    %s244 = sphi 0, %s241
    %s245 = sphi 0, %s244
    %s261 = sphi 0, %s245
  $region4: #{tpu_custom_call.1} parent=0 // loop_header_branch
    %19 = sbr.rel (%p17) target = $region8
  $region5: #{tpu_custom_call.1} parent=0 // loop_body
    %s21 = ssub.s32 %s16, 1
    %s22 = ssub.s32 %s16, 2
    %s23 = sadd.s32 %s16, 1
    %s24 = ssub.s32 %s16, %s23
    %p25 = scmp.eq.s32.totalorder %s24, 0
    %s27 = sadd.s32 %s26, 1
    %s28 = scalar_select %p25, %s26, %s27
    %p31 = pneg %p25
    %p32 = scmp.eq.s32.totalorder %s16, 1
    %p33 = por %p31, %p32
    %p34 = scmp.ne.s32.totalorder %s26, %s29
    %p35 = scmp.eq.s32.totalorder %s16, 0
    %p36 = por %p34, %p35
    %p37 = scmp.ne.s32.totalorder %s26, %s29
    %p38 = scmp.eq.s32.totalorder %s21, 1
    %p39 = por %p37, %p38
    %p40 = scmp.ne.s32.totalorder %s29, %s30
    %p41 = scmp.eq.s32.totalorder %s21, 0
    %p42 = por %p40, %p41
    %p43 = scmp.ne.s32.totalorder %s29, %s30
    %p44 = scmp.eq.s32.totalorder %s22, 1
    %p45 = por %p43, %p44
    %p47 = scmp.ne.s32.totalorder %s30, %s46
    %p48 = scmp.eq.s32.totalorder %s22, 0
    %p49 = por %p47, %p48
    %s51 = sadd.s32 %s50, 1
    %p54 = scmp.eq.s32.totalorder %s16, 1
    %p55 = scmp.ne.s32.totalorder %s50, %s52
    %p56 = scmp.eq.s32.totalorder %s16, 0
    %p57 = por %p55, %p56
    %p58 = scmp.ne.s32.totalorder %s50, %s52
    %p59 = scmp.eq.s32.totalorder %s21, 1
    %p60 = por %p58, %p59
    %p61 = scmp.ne.s32.totalorder %s52, %s53
    %p62 = scmp.eq.s32.totalorder %s21, 0
    %p63 = por %p61, %p62
    %p64 = scmp.ne.s32.totalorder %s52, %s53
    %p65 = scmp.eq.s32.totalorder %s22, 1
    %p66 = por %p64, %p65
    %p68 = scmp.ne.s32.totalorder %s53, %s67
    %p69 = scmp.eq.s32.totalorder %s22, 0
    %p70 = por %p68, %p69
    %s72 = sadd.s32 %s71, 1
    %p75 = scmp.eq.s32.totalorder %s16, 1
    %p76 = scmp.ne.s32.totalorder %s71, %s73
    %p77 = scmp.eq.s32.totalorder %s16, 0
    %p78 = por %p76, %p77
    %p79 = scmp.ne.s32.totalorder %s71, %s73
    %p80 = scmp.eq.s32.totalorder %s21, 1
    %p81 = por %p79, %p80
    %p82 = scmp.ne.s32.totalorder %s73, %s74
    %p83 = scmp.eq.s32.totalorder %s21, 0
    %p84 = por %p82, %p83
    %p85 = scmp.ne.s32.totalorder %s73, %s74
    %p86 = scmp.eq.s32.totalorder %s22, 1
    %p87 = por %p85, %p86
    %p89 = scmp.ne.s32.totalorder %s74, %s88
    %p90 = scmp.eq.s32.totalorder %s22, 0
    %p91 = por %p89, %p90
    %s93 = sadd.s32 %s92, 1
    %p96 = scmp.eq.s32.totalorder %s16, 1
    %p97 = scmp.ne.s32.totalorder %s92, %s94
    %p98 = scmp.eq.s32.totalorder %s16, 0
    %p99 = por %p97, %p98
    %p100 = scmp.ne.s32.totalorder %s92, %s94
    %p101 = scmp.eq.s32.totalorder %s21, 1
    %p102 = por %p100, %p101
    %p103 = scmp.ne.s32.totalorder %s94, %s95
    %p104 = scmp.eq.s32.totalorder %s21, 0
    %p105 = por %p103, %p104
    %p106 = scmp.ne.s32.totalorder %s94, %s95
    %p107 = scmp.eq.s32.totalorder %s22, 1
    %p108 = por %p106, %p107
    %p110 = scmp.ne.s32.totalorder %s95, %s109
    %p111 = scmp.eq.s32.totalorder %s22, 0
    %p112 = por %p110, %p111
    %s114 = sadd.s32 %s113, 1
    %p117 = scmp.eq.s32.totalorder %s16, 1
    %p118 = scmp.ne.s32.totalorder %s113, %s115
    %p119 = scmp.eq.s32.totalorder %s16, 0
    %p120 = por %p118, %p119
    %p121 = scmp.ne.s32.totalorder %s113, %s115
    %p122 = scmp.eq.s32.totalorder %s21, 1
    %p123 = por %p121, %p122
    %p124 = scmp.ne.s32.totalorder %s115, %s116
    %p125 = scmp.eq.s32.totalorder %s21, 0
    %p126 = por %p124, %p125
    %p127 = scmp.ne.s32.totalorder %s115, %s116
    %p128 = scmp.eq.s32.totalorder %s22, 1
    %p129 = por %p127, %p128
    %p131 = scmp.ne.s32.totalorder %s116, %s130
    %p132 = scmp.eq.s32.totalorder %s22, 0
    %p133 = por %p131, %p132
    %s135 = sadd.s32 %s134, 1
    %p138 = scmp.eq.s32.totalorder %s16, 1
    %p139 = scmp.ne.s32.totalorder %s134, %s136
    %p140 = scmp.eq.s32.totalorder %s16, 0
    %p141 = por %p139, %p140
    %p142 = scmp.ne.s32.totalorder %s134, %s136
    %p143 = scmp.eq.s32.totalorder %s21, 1
    %p144 = por %p142, %p143
    %p145 = scmp.ne.s32.totalorder %s136, %s137
    %p146 = scmp.eq.s32.totalorder %s21, 0
    %p147 = por %p145, %p146
    %p148 = scmp.ne.s32.totalorder %s136, %s137
    %p149 = scmp.eq.s32.totalorder %s22, 1
    %p150 = por %p148, %p149
    %p152 = scmp.ne.s32.totalorder %s137, %s151
    %p153 = scmp.eq.s32.totalorder %s22, 0
    %p154 = por %p152, %p153
    %s156 = sadd.s32 %s155, 1
    %p159 = scmp.eq.s32.totalorder %s16, 1
    %p160 = scmp.ne.s32.totalorder %s155, %s157
    %p161 = scmp.eq.s32.totalorder %s16, 0
    %p162 = por %p160, %p161
    %p163 = scmp.ne.s32.totalorder %s155, %s157
    %p164 = scmp.eq.s32.totalorder %s21, 1
    %p165 = por %p163, %p164
    %p166 = scmp.ne.s32.totalorder %s157, %s158
    %p167 = scmp.eq.s32.totalorder %s21, 0
    %p168 = por %p166, %p167
    %p169 = scmp.ne.s32.totalorder %s157, %s158
    %p170 = scmp.eq.s32.totalorder %s22, 1
    %p171 = por %p169, %p170
    %p173 = scmp.ne.s32.totalorder %s158, %s172
    %p174 = scmp.eq.s32.totalorder %s22, 0
    %p175 = por %p173, %p174
    %s177 = sadd.s32 %s176, 1
    %p180 = scmp.eq.s32.totalorder %s16, 1
    %p181 = scmp.ne.s32.totalorder %s176, %s178
    %p182 = scmp.eq.s32.totalorder %s16, 0
    %p183 = por %p181, %p182
    %p184 = scmp.ne.s32.totalorder %s176, %s178
    %p185 = scmp.eq.s32.totalorder %s21, 1
    %p186 = por %p184, %p185
    %p187 = scmp.ne.s32.totalorder %s178, %s179
    %p188 = scmp.eq.s32.totalorder %s21, 0
    %p189 = por %p187, %p188
    %p190 = scmp.ne.s32.totalorder %s178, %s179
    %p191 = scmp.eq.s32.totalorder %s22, 1
    %p192 = por %p190, %p191
    %p194 = scmp.ne.s32.totalorder %s179, %s193
    %p195 = scmp.eq.s32.totalorder %s22, 0
    %p196 = por %p194, %p195
    %s198 = sadd.s32 %s197, 1
    %p201 = scmp.eq.s32.totalorder %s16, 1
    %p202 = scmp.ne.s32.totalorder %s197, %s199
    %p203 = scmp.eq.s32.totalorder %s16, 0
    %p204 = por %p202, %p203
    %p205 = scmp.ne.s32.totalorder %s197, %s199
    %p206 = scmp.eq.s32.totalorder %s21, 1
    %p207 = por %p205, %p206
    %p208 = scmp.ne.s32.totalorder %s199, %s200
    %p209 = scmp.eq.s32.totalorder %s21, 0
    %p210 = por %p208, %p209
    %p211 = scmp.ne.s32.totalorder %s199, %s200
    %p212 = scmp.eq.s32.totalorder %s22, 1
    %p213 = por %p211, %p212
    %p215 = scmp.ne.s32.totalorder %s200, %s214
    %p216 = scmp.eq.s32.totalorder %s22, 0
    %p217 = por %p215, %p216
    %s219 = sadd.s32 %s218, 1
    %p222 = scmp.eq.s32.totalorder %s16, 1
    %p223 = scmp.ne.s32.totalorder %s218, %s220
    %p224 = scmp.eq.s32.totalorder %s16, 0
    %p225 = por %p223, %p224
    %p226 = scmp.ne.s32.totalorder %s218, %s220
    %p227 = scmp.eq.s32.totalorder %s21, 1
    %p228 = por %p226, %p227
    %p229 = scmp.ne.s32.totalorder %s220, %s221
    %p230 = scmp.eq.s32.totalorder %s21, 0
    %p231 = por %p229, %p230
    %p232 = scmp.ne.s32.totalorder %s220, %s221
    %p233 = scmp.eq.s32.totalorder %s22, 1
    %p234 = por %p232, %p233
    %p236 = scmp.ne.s32.totalorder %s221, %s235
    %p237 = scmp.eq.s32.totalorder %s22, 0
    %p238 = por %p236, %p237
    %s239 = ssub.s32 %s16, %s23
    %p240 = scmp.eq.s32.totalorder %s239, 0
    %s242 = sadd.s32 %s241, 1
    %s243 = scalar_select %p240, %s241, %s242
    %p246 = pneg %p240
    %p247 = scmp.eq.s32.totalorder %s16, 1
    %p248 = por %p246, %p247
    %p249 = scmp.ne.s32.totalorder %s241, %s244
    %p250 = scmp.eq.s32.totalorder %s16, 0
    %p251 = por %p249, %p250
    %p252 = scmp.ne.s32.totalorder %s241, %s244
    %p253 = scmp.eq.s32.totalorder %s21, 1
    %p254 = por %p252, %p253
    %p255 = scmp.ne.s32.totalorder %s244, %s245
    %p256 = scmp.eq.s32.totalorder %s21, 0
    %p257 = por %p255, %p256
    %p258 = scmp.ne.s32.totalorder %s244, %s245
    %p259 = scmp.eq.s32.totalorder %s22, 1
    %p260 = por %p258, %p259
    %p262 = scmp.ne.s32.totalorder %s245, %s261
    %p263 = scmp.eq.s32.totalorder %s22, 0
    %p264 = por %p262, %p263
    %p265 = scmp.le.s32.totalorder 1, %s16
    %p266 = scmp.lt.s32.totalorder %s16, 3
    %p267 = pnand %p265, %p266
    %p268 = pneg %p267
    // Predicated region
    $region9: #{tpu_custom_call.1} parent=5 // pred_check
      _
    $region10: #{tpu_custom_call.1} parent=5 // pred_check_branch
      %270 = sbr.rel (%p267) target = $region12
    $region11: #{tpu_custom_call.1} parent=5 // pred_region
      %s271 = ssub.s32 %s16, 1
      // Predicated region
      $region13: #{tpu_custom_call.1} parent=11 // pred_check
        %p272 = pneg %p63
      $region14: #{tpu_custom_call.1} parent=11 // pred_check_branch
        %274 = sbr.rel (%p272) target = $region16
      $region15: #{tpu_custom_call.1} parent=11 // pred_region
        _
      $region16: #{tpu_custom_call.1} parent=11 // pred_fallthru
        _
      // Predicated region
      $region17: #{tpu_custom_call.1} parent=11 // pred_check
        %p275 = pneg %p84
      $region18: #{tpu_custom_call.1} parent=11 // pred_check_branch
        %277 = sbr.rel (%p275) target = $region20
      $region19: #{tpu_custom_call.1} parent=11 // pred_region
        _
      $region20: #{tpu_custom_call.1} parent=11 // pred_fallthru
        _
      // Predicated region
      $region21: #{tpu_custom_call.1} parent=11 // pred_check
        %p278 = pneg %p105
      $region22: #{tpu_custom_call.1} parent=11 // pred_check_branch
        %280 = sbr.rel (%p278) target = $region24
      $region23: #{tpu_custom_call.1} parent=11 // pred_region
        _
      $region24: #{tpu_custom_call.1} parent=11 // pred_fallthru
        _
      // Predicated region
      $region25: #{tpu_custom_call.1} parent=11 // pred_check
        %p281 = pneg %p126
      $region26: #{tpu_custom_call.1} parent=11 // pred_check_branch
        %283 = sbr.rel (%p281) target = $region28
      $region27: #{tpu_custom_call.1} parent=11 // pred_region
        _
      $region28: #{tpu_custom_call.1} parent=11 // pred_fallthru
        _
      // Predicated region
      $region29: #{tpu_custom_call.1} parent=11 // pred_check
        %p284 = pneg %p147
      $region30: #{tpu_custom_call.1} parent=11 // pred_check_branch
        %286 = sbr.rel (%p284) target = $region32
      $region31: #{tpu_custom_call.1} parent=11 // pred_region
        _
      $region32: #{tpu_custom_call.1} parent=11 // pred_fallthru
        _
      // Predicated region
      $region33: #{tpu_custom_call.1} parent=11 // pred_check
        %p287 = pneg %p168
      $region34: #{tpu_custom_call.1} parent=11 // pred_check_branch
        %289 = sbr.rel (%p287) target = $region36
      $region35: #{tpu_custom_call.1} parent=11 // pred_region
        _
      $region36: #{tpu_custom_call.1} parent=11 // pred_fallthru
        _
      // Predicated region
      $region37: #{tpu_custom_call.1} parent=11 // pred_check
        %p290 = pneg %p189
      $region38: #{tpu_custom_call.1} parent=11 // pred_check_branch
        %292 = sbr.rel (%p290) target = $region40
      $region39: #{tpu_custom_call.1} parent=11 // pred_region
        _
      $region40: #{tpu_custom_call.1} parent=11 // pred_fallthru
        _
      // Predicated region
      $region41: #{tpu_custom_call.1} parent=11 // pred_check
        %p293 = pneg %p210
      $region42: #{tpu_custom_call.1} parent=11 // pred_check_branch
        %295 = sbr.rel (%p293) target = $region44
      $region43: #{tpu_custom_call.1} parent=11 // pred_region
        _
      $region44: #{tpu_custom_call.1} parent=11 // pred_fallthru
        _
      // Predicated region
      $region45: #{tpu_custom_call.1} parent=11 // pred_check
        %p296 = pneg %p231
      $region46: #{tpu_custom_call.1} parent=11 // pred_check_branch
        %298 = sbr.rel (%p296) target = $region48
      $region47: #{tpu_custom_call.1} parent=11 // pred_region
        _
      $region48: #{tpu_custom_call.1} parent=11 // pred_fallthru
        _
    $region12: #{tpu_custom_call.1} parent=5 // pred_fallthru
      _
    %p299 = scmp.lt.s32.totalorder %s16, 2
    // Predicated region
    $region49: #{tpu_custom_call.1} parent=5 // pred_check
      %p300 = pneg %p299
    $region50: #{tpu_custom_call.1} parent=5 // pred_check_branch
      %302 = sbr.rel (%p300) target = $region52
    $region51: #{tpu_custom_call.1} parent=5 // pred_region
      // Predicated region
      $region53: #{tpu_custom_call.1} parent=51 // pred_check
        %p303 = pneg %p36
      $region54: #{tpu_custom_call.1} parent=51 // pred_check_branch
        %305 = sbr.rel (%p303) target = $region56
      $region55: #{tpu_custom_call.1} parent=51 // pred_region
        %p306 = scmp.lt.s32.totalorder %s16, 1
        %s307 = scalar_select %p306, %s16, 1
        %s308 = smul.addr %s307, 43
        %s309 = smul.addr %s308, 4
        %s310 = scalar_lea.vmem %s0, %s309
      $region56: #{tpu_custom_call.1} parent=51 // pred_fallthru
        _
    $region52: #{tpu_custom_call.1} parent=5 // pred_fallthru
      _
    %p311 = scmp.le.s32.totalorder 1, %s16
    %p312 = scmp.lt.s32.totalorder %s16, 3
    %p313 = pnand %p311, %p312
    %p314 = pneg %p313
    // Predicated region
    $region57: #{tpu_custom_call.1} parent=5 // pred_check
      _
    $region58: #{tpu_custom_call.1} parent=5 // pred_check_branch
      %316 = sbr.rel (%p313) target = $region60
    $region59: #{tpu_custom_call.1} parent=5 // pred_region
      %s317 = ssub.s32 %s16, 1
      %p318 = scmp.lt.s32.totalorder %s21, 1
      %s319 = scalar_select %p318, %s21, 1
      %s320 = smul.addr %s319, 43
      %s321 = smul.addr %s320, 4
      %s322 = scalar_lea.vmem %s0, %s321
      %p323 = pneg %p42
      %p324 = pneg %p39
      %p325 = pneg %p63
      %p326 = pneg %p60
      %p327 = pneg %p84
      %p328 = pneg %p81
      %p329 = pneg %p105
      %p330 = pneg %p102
      %p331 = pneg %p126
      %p332 = pneg %p123
      %p333 = pneg %p147
      %p334 = pneg %p144
      %p335 = pneg %p168
      %p336 = pneg %p165
      %p337 = pneg %p189
      %p338 = pneg %p186
      %p339 = pneg %p210
      %p340 = pneg %p207
      %p341 = pneg %p231
      %p342 = pneg %p228
      %p343 = pneg %p257
      %p344 = pneg %p254
      %p345 = scmp.lt.s32.totalorder %s21, 1
      %s346 = scalar_select %p345, %s21, 1
      %s347 = smul.addr %s346, 36
      %s348 = smul.addr %s347, 8
      %s349 = scalar_lea.vmem %s10, %s348
      %p350 = scmp.lt.s32.totalorder %s21, 1
      %s351 = scalar_select %p350, %s21, 1
      %s352 = smul.addr %s351, 43
      %s353 = smul.addr %s352, 4
      %s354 = scalar_lea.vmem %s0, %s353
      %p355 = scmp.lt.s32.totalorder %s21, 1
      %s356 = scalar_select %p355, %s21, 1
      %s357 = smul.addr %s356, 36
      %s358 = smul.addr %s357, 8
      %s359 = scalar_lea.vmem %s10, %s358
      %v361 = vld [vmem:[%s1] sm:$0xff]
      %v362 = vld [vmem:[%s1 + $0x8] sm:$0xff]
      %v363 = vld [vmem:[%s1 + $0x10] sm:$0xff]
      %v364 = vld [vmem:[%s1 + $0x18] sm:$0xff]
      %v365 = vld [vmem:[%s1 + $0x20] sm:$0xff]
      %v366 = vld [vmem:[%s1 + $0x28] sm:$0xff]
      %v367 = vld [vmem:[%s1 + $0x30] sm:$0xff]
      %v368 = vld [vmem:[%s1 + $0x38] sm:$0xff]
      %v369 = vld [vmem:[%s1 + $0x40] sm:$0xff]
      %v370 = vld [vmem:[%s1 + $0x48] sm:$0xff]
      %v371 = vld [vmem:[%s1 + $0x50] sm:$0xff]
      %v372 = vld [vmem:[%s1 + $0x58] sm:$0xff]
      %v373 = vld [vmem:[%s1 + $0x60] sm:$0xff]
      %v374 = vld [vmem:[%s1 + $0x68] sm:$0xff]
      %v375 = vld [vmem:[%s1 + $0x70] sm:$0xff]
      %v376 = vld [vmem:[%s1 + $0x78] sm:$0xff]
      %v377 = vld [vmem:[%s1 + $0x80] sm:$0xff]
      %v378 = vld [vmem:[%s1 + $0x88] sm:$0xff]
      %v379 = vld [vmem:[%s1 + $0x90] sm:$0xff]
      %v380 = vld [vmem:[%s1 + $0x98] sm:$0xff]
      %v381 = vld [vmem:[%s1 + $0xa0] sm:$0xff]
      %v382 = vld [vmem:[%s1 + $0xa8] sm:$0xff]
      %v383 = vld [vmem:[%s1 + $0xb0] sm:$0xff]
      %v384 = vld [vmem:[%s1 + $0xb8] sm:$0xff]
      %v385 = vld [vmem:[%s1 + $0xc0] sm:$0xff]
      %v386 = vld [vmem:[%s1 + $0xc8] sm:$0xff]
      %v387 = vld [vmem:[%s1 + $0xd0] sm:$0xff]
      %v388 = vld [vmem:[%s1 + $0xd8] sm:$0xff]
      %v389 = vld [vmem:[%s1 + $0xe0] sm:$0xff]
      %v390 = vld [vmem:[%s1 + $0xe8] sm:$0xff]
      %v391 = vld [vmem:[%s1 + $0xf0] sm:$0xff]
      %v392 = vld [vmem:[%s1 + $0xf8] sm:$0xff]
      %v393 = vld [vmem:[%s1 + $0x100] sm:$0xff]
      %v394 = vld [vmem:[%s1 + $0x108] sm:$0xff]
      %v395 = vld [vmem:[%s1 + $0x110] sm:$0xff]
      %v396 = vld [vmem:[%s1 + $0x118] sm:$0xff]
      %v397 = vld [vmem:[%s354] sm:$0xf]
      %v398 = vld [vmem:[%s354 + $0x4] sm:$0xf]
      %v399 = vld [vmem:[%s354 + $0x8] sm:$0xf]
      %v400 = vld [vmem:[%s354 + $0xc] sm:$0xf]
      %v401 = vld [vmem:[%s354 + $0x10] sm:$0xf]
      %v402 = vld [vmem:[%s354 + $0x14] sm:$0xf]
      %v403 = vld [vmem:[%s354 + $0x18] sm:$0xf]
      %v404 = vld [vmem:[%s354 + $0x1c] sm:$0xf]
      %v405 = vld [vmem:[%s354 + $0x20] sm:$0xf]
      %v406 = vld [vmem:[%s354 + $0x24] sm:$0xf]
      %v407 = vld [vmem:[%s354 + $0x28] sm:$0xf]
      %v408 = vld [vmem:[%s354 + $0x2c] sm:$0xf]
      %v409 = vld [vmem:[%s354 + $0x30] sm:$0xf]
      %v410 = vld [vmem:[%s354 + $0x34] sm:$0xf]
      %v411 = vld [vmem:[%s354 + $0x38] sm:$0xf]
      %v412 = vld [vmem:[%s354 + $0x3c] sm:$0xf]
      %v413 = vld [vmem:[%s354 + $0x40] sm:$0xf]
      %v414 = vld [vmem:[%s354 + $0x44] sm:$0xf]
      %v415 = vld [vmem:[%s354 + $0x48] sm:$0xf]
      %v416 = vld [vmem:[%s354 + $0x4c] sm:$0xf]
      %v417 = vld [vmem:[%s354 + $0x50] sm:$0xf]
      %v418 = vld [vmem:[%s354 + $0x54] sm:$0xf]
      %v419 = vld [vmem:[%s354 + $0x58] sm:$0xf]
      %v420 = vld [vmem:[%s354 + $0x5c] sm:$0xf]
      %v421 = vld [vmem:[%s354 + $0x60] sm:$0xf]
      %v422 = vld [vmem:[%s354 + $0x64] sm:$0xf]
      %v423 = vld [vmem:[%s354 + $0x68] sm:$0xf]
      %v424 = vld [vmem:[%s354 + $0x6c] sm:$0xf]
      %v425 = vld [vmem:[%s354 + $0x70] sm:$0xf]
      %v426 = vld [vmem:[%s354 + $0x74] sm:$0xf]
      %v427 = vld [vmem:[%s354 + $0x78] sm:$0xf]
      %v428 = vld [vmem:[%s354 + $0x7c] sm:$0xf]
      %v429 = vld [vmem:[%s354 + $0x80] sm:$0xf]
      %v430 = vld [vmem:[%s354 + $0x84] sm:$0xf]
      %v431 = vld [vmem:[%s354 + $0x88] sm:$0xf]
      %v432 = vld [vmem:[%s354 + $0x8c] sm:$0xf]
      %v433 = vld [vmem:[%s354 + $0x90] sm:$0xf]
      %v434 = vld [vmem:[%s354 + $0x94] sm:$0xf]
      %v435 = vld [vmem:[%s354 + $0x98] sm:$0xf]
      %v436 = vld [vmem:[%s354 + $0x9c] sm:$0xf]
      %v437 = vld [vmem:[%s354 + $0xa0] sm:$0xf]
      %v438 = vld [vmem:[%s354 + $0xa4] sm:$0xf]
      %v439 = vld [vmem:[%s354 + $0xa8] sm:$0x7]
      %v440 = vunpack.c.l.bf16 %v397
      %v441 = vunpack.c.l.bf16 %v398
      %v442 = vunpack.c.l.bf16 %v399
      %v443 = vunpack.c.l.bf16 %v400
      %v444 = vunpack.c.l.bf16 %v401
      %v445 = vunpack.c.l.bf16 %v402
      %v446 = vunpack.c.l.bf16 %v403
      %v447 = vunpack.c.l.bf16 %v404
      %v448 = vunpack.c.l.bf16 %v405
      %v449 = vunpack.c.l.bf16 %v406
      %v450 = vunpack.c.l.bf16 %v407
      %v451 = vunpack.c.l.bf16 %v408
      %v452 = vunpack.c.l.bf16 %v409
      %v453 = vunpack.c.l.bf16 %v410
      %v454 = vunpack.c.l.bf16 %v411
      %v455 = vunpack.c.l.bf16 %v412
      %v456 = vunpack.c.l.bf16 %v413
      %v457 = vunpack.c.l.bf16 %v414
      %v458 = vunpack.c.l.bf16 %v415
      %v459 = vunpack.c.l.bf16 %v416
      %v460 = vunpack.c.l.bf16 %v417
      %v461 = vunpack.c.l.bf16 %v418
      %v462 = vunpack.c.l.bf16 %v419
      %v463 = vunpack.c.l.bf16 %v420
      %v464 = vunpack.c.l.bf16 %v421
      %v465 = vunpack.c.l.bf16 %v422
      %v466 = vunpack.c.l.bf16 %v423
      %v467 = vunpack.c.l.bf16 %v424
      %v468 = vunpack.c.l.bf16 %v425
      %v469 = vunpack.c.l.bf16 %v426
      %v470 = vunpack.c.l.bf16 %v427
      %v471 = vunpack.c.l.bf16 %v428
      %v472 = vunpack.c.l.bf16 %v429
      %v473 = vunpack.c.l.bf16 %v430
      %v474 = vunpack.c.l.bf16 %v431
      %v475 = vunpack.c.l.bf16 %v432
      %v476 = vunpack.c.l.bf16 %v433
      %v477 = vunpack.c.l.bf16 %v434
      %v478 = vunpack.c.l.bf16 %v435
      %v479 = vunpack.c.l.bf16 %v436
      %v480 = vunpack.c.l.bf16 %v437
      %v481 = vunpack.c.l.bf16 %v438
      %v482 = vunpack.c.l.bf16 %v439
      %vm483 = vcmask 31744
      %484 = vst.msk [vmem:[#allocation2] sm:$0xff] %vm483, %v440
      %485 = vst.msk [vmem:[#allocation2 + $0x8] sm:$0xff] %vm483, %v441
      %486 = vst.msk [vmem:[#allocation2 + $0x10] sm:$0xff] %vm483, %v442
      %487 = vst.msk [vmem:[#allocation2 + $0x18] sm:$0xff] %vm483, %v443
      %488 = vst.msk [vmem:[#allocation2 + $0x20] sm:$0xff] %vm483, %v444
      %489 = vst.msk [vmem:[#allocation2 + $0x28] sm:$0xff] %vm483, %v445
      %490 = vst.msk [vmem:[#allocation2 + $0x30] sm:$0xff] %vm483, %v446
      %491 = vst.msk [vmem:[#allocation2 + $0x38] sm:$0xff] %vm483, %v447
      %492 = vst.msk [vmem:[#allocation2 + $0x40] sm:$0xff] %vm483, %v448
      %493 = vst.msk [vmem:[#allocation2 + $0x48] sm:$0xff] %vm483, %v449
      %494 = vst.msk [vmem:[#allocation2 + $0x50] sm:$0xff] %vm483, %v450
      %495 = vst.msk [vmem:[#allocation2 + $0x58] sm:$0xff] %vm483, %v451
      %496 = vst.msk [vmem:[#allocation2 + $0x60] sm:$0xff] %vm483, %v452
      %497 = vst.msk [vmem:[#allocation2 + $0x68] sm:$0xff] %vm483, %v453
      %498 = vst.msk [vmem:[#allocation2 + $0x70] sm:$0xff] %vm483, %v454
      %499 = vst.msk [vmem:[#allocation2 + $0x78] sm:$0xff] %vm483, %v455
      %500 = vst.msk [vmem:[#allocation2 + $0x80] sm:$0xff] %vm483, %v456
      %501 = vst.msk [vmem:[#allocation2 + $0x88] sm:$0xff] %vm483, %v457
      %502 = vst.msk [vmem:[#allocation2 + $0x90] sm:$0xff] %vm483, %v458
      %503 = vst.msk [vmem:[#allocation2 + $0x98] sm:$0xff] %vm483, %v459
      %504 = vst.msk [vmem:[#allocation2 + $0xa0] sm:$0xff] %vm483, %v460
      %505 = vst.msk [vmem:[#allocation2 + $0xa8] sm:$0xff] %vm483, %v461
      %506 = vst.msk [vmem:[#allocation2 + $0xb0] sm:$0xff] %vm483, %v462
      %507 = vst.msk [vmem:[#allocation2 + $0xb8] sm:$0xff] %vm483, %v463
      %508 = vst.msk [vmem:[#allocation2 + $0xc0] sm:$0xff] %vm483, %v464
      %509 = vst.msk [vmem:[#allocation2 + $0xc8] sm:$0xff] %vm483, %v465
      %510 = vst.msk [vmem:[#allocation2 + $0xd0] sm:$0xff] %vm483, %v466
      %511 = vst.msk [vmem:[#allocation2 + $0xd8] sm:$0xff] %vm483, %v467
      %512 = vst.msk [vmem:[#allocation2 + $0xe0] sm:$0xff] %vm483, %v468
      %513 = vst.msk [vmem:[#allocation2 + $0xe8] sm:$0xff] %vm483, %v469
      %514 = vst.msk [vmem:[#allocation2 + $0xf0] sm:$0xff] %vm483, %v470
      %515 = vst.msk [vmem:[#allocation2 + $0xf8] sm:$0xff] %vm483, %v471
      %516 = vst.msk [vmem:[#allocation2 + $0x100] sm:$0xff] %vm483, %v472
      %517 = vst.msk [vmem:[#allocation2 + $0x108] sm:$0xff] %vm483, %v473
      %518 = vst.msk [vmem:[#allocation2 + $0x110] sm:$0xff] %vm483, %v474
      %519 = vst.msk [vmem:[#allocation2 + $0x118] sm:$0xff] %vm483, %v475
      %520 = vst.msk [vmem:[#allocation2 + $0x120] sm:$0xff] %vm483, %v476
      %521 = vst.msk [vmem:[#allocation2 + $0x128] sm:$0xff] %vm483, %v477
      %522 = vst.msk [vmem:[#allocation2 + $0x130] sm:$0xff] %vm483, %v478
      %523 = vst.msk [vmem:[#allocation2 + $0x138] sm:$0xff] %vm483, %v479
      %524 = vst.msk [vmem:[#allocation2 + $0x140] sm:$0xff] %vm483, %v480
      %525 = vst.msk [vmem:[#allocation2 + $0x148] sm:$0xff] %vm483, %v481
      %vm526 = vcmask 29696
      %527 = vst.msk [vmem:[#allocation2 + $0x150] sm:$0x3f] %vm526, %v482
      %v528 = vld [vmem:[#allocation2] sm:$0xff]
      %v529 = vld [vmem:[#allocation2 + $0x8] sm:$0xff]
      %v530 = vld [vmem:[#allocation2 + $0x10] sm:$0xff]
      %v531 = vld [vmem:[#allocation2 + $0x18] sm:$0xff]
      %v532 = vld [vmem:[#allocation2 + $0x20] sm:$0xff]
      %v533 = vld [vmem:[#allocation2 + $0x28] sm:$0xff]
      %v534 = vld [vmem:[#allocation2 + $0x30] sm:$0xff]
      %v535 = vld [vmem:[#allocation2 + $0x38] sm:$0xff]
      %v536 = vld [vmem:[#allocation2 + $0x40] sm:$0xff]
      %v537 = vld [vmem:[#allocation2 + $0x48] sm:$0xff]
      %v538 = vld [vmem:[#allocation2 + $0x50] sm:$0xff]
      %v539 = vld [vmem:[#allocation2 + $0x58] sm:$0xff]
      %v540 = vld [vmem:[#allocation2 + $0x60] sm:$0xff]
      %v541 = vld [vmem:[#allocation2 + $0x68] sm:$0xff]
      %v542 = vld [vmem:[#allocation2 + $0x70] sm:$0xff]
      %v543 = vld [vmem:[#allocation2 + $0x78] sm:$0xff]
      %v544 = vld [vmem:[#allocation2 + $0x80] sm:$0xff]
      %v545 = vld [vmem:[#allocation2 + $0x88] sm:$0xff]
      %v546 = vld [vmem:[#allocation2 + $0x90] sm:$0xff]
      %v547 = vld [vmem:[#allocation2 + $0x98] sm:$0xff]
      %v548 = vld [vmem:[#allocation2 + $0xa0] sm:$0xff]
      %v549 = vld [vmem:[#allocation2 + $0xa8] sm:$0xff]
      %v550 = vld [vmem:[#allocation2 + $0xb0] sm:$0xff]
      %v551 = vld [vmem:[#allocation2 + $0xb8] sm:$0xff]
      %v552 = vld [vmem:[#allocation2 + $0xc0] sm:$0xff]
      %v553 = vld [vmem:[#allocation2 + $0xc8] sm:$0xff]
      %v554 = vld [vmem:[#allocation2 + $0xd0] sm:$0xff]
      %v555 = vld [vmem:[#allocation2 + $0xd8] sm:$0xff]
      %v556 = vld [vmem:[#allocation2 + $0xe0] sm:$0xff]
      %v557 = vld [vmem:[#allocation2 + $0xe8] sm:$0xff]
      %v558 = vld [vmem:[#allocation2 + $0xf0] sm:$0xff]
      %v559 = vld [vmem:[#allocation2 + $0xf8] sm:$0xff]
      %v560 = vld [vmem:[#allocation2 + $0x100] sm:$0xff]
      %v561 = vld [vmem:[#allocation2 + $0x108] sm:$0xff]
      %v562 = vld [vmem:[#allocation2 + $0x110] sm:$0xff]
      %v563 = vld [vmem:[#allocation2 + $0x118] sm:$0xff]
      %564 = vst.msk [vmem:[#allocation3] sm:$0xff] %vm483, %v528
      %565 = vst.msk [vmem:[#allocation3 + $0x8] sm:$0xff] %vm483, %v529
      %566 = vst.msk [vmem:[#allocation3 + $0x10] sm:$0xff] %vm483, %v530
      %567 = vst.msk [vmem:[#allocation3 + $0x18] sm:$0xff] %vm483, %v531
      %568 = vst.msk [vmem:[#allocation3 + $0x20] sm:$0xff] %vm483, %v532
      %569 = vst.msk [vmem:[#allocation3 + $0x28] sm:$0xff] %vm483, %v533
      %570 = vst.msk [vmem:[#allocation3 + $0x30] sm:$0xff] %vm483, %v534
      %571 = vst.msk [vmem:[#allocation3 + $0x38] sm:$0xff] %vm483, %v535
      %572 = vst.msk [vmem:[#allocation3 + $0x40] sm:$0xff] %vm483, %v536
      %573 = vst.msk [vmem:[#allocation3 + $0x48] sm:$0xff] %vm483, %v537
      %574 = vst.msk [vmem:[#allocation3 + $0x50] sm:$0xff] %vm483, %v538
      %575 = vst.msk [vmem:[#allocation3 + $0x58] sm:$0xff] %vm483, %v539
      %576 = vst.msk [vmem:[#allocation3 + $0x60] sm:$0xff] %vm483, %v540
      %577 = vst.msk [vmem:[#allocation3 + $0x68] sm:$0xff] %vm483, %v541
      %578 = vst.msk [vmem:[#allocation3 + $0x70] sm:$0xff] %vm483, %v542
      %579 = vst.msk [vmem:[#allocation3 + $0x78] sm:$0xff] %vm483, %v543
      %580 = vst.msk [vmem:[#allocation3 + $0x80] sm:$0xff] %vm483, %v544
      %581 = vst.msk [vmem:[#allocation3 + $0x88] sm:$0xff] %vm483, %v545
      %582 = vst.msk [vmem:[#allocation3 + $0x90] sm:$0xff] %vm483, %v546
      %583 = vst.msk [vmem:[#allocation3 + $0x98] sm:$0xff] %vm483, %v547
      %584 = vst.msk [vmem:[#allocation3 + $0xa0] sm:$0xff] %vm483, %v548
      %585 = vst.msk [vmem:[#allocation3 + $0xa8] sm:$0xff] %vm483, %v549
      %586 = vst.msk [vmem:[#allocation3 + $0xb0] sm:$0xff] %vm483, %v550
      %587 = vst.msk [vmem:[#allocation3 + $0xb8] sm:$0xff] %vm483, %v551
      %588 = vst.msk [vmem:[#allocation3 + $0xc0] sm:$0xff] %vm483, %v552
      %589 = vst.msk [vmem:[#allocation3 + $0xc8] sm:$0xff] %vm483, %v553
      %590 = vst.msk [vmem:[#allocation3 + $0xd0] sm:$0xff] %vm483, %v554
      %591 = vst.msk [vmem:[#allocation3 + $0xd8] sm:$0xff] %vm483, %v555
      %592 = vst.msk [vmem:[#allocation3 + $0xe0] sm:$0xff] %vm483, %v556
      %593 = vst.msk [vmem:[#allocation3 + $0xe8] sm:$0xff] %vm483, %v557
      %594 = vst.msk [vmem:[#allocation3 + $0xf0] sm:$0xff] %vm483, %v558
      %595 = vst.msk [vmem:[#allocation3 + $0xf8] sm:$0xff] %vm483, %v559
      %596 = vst.msk [vmem:[#allocation3 + $0x100] sm:$0xff] %vm483, %v560
      %597 = vst.msk [vmem:[#allocation3 + $0x108] sm:$0xff] %vm483, %v561
      %598 = vst.msk [vmem:[#allocation3 + $0x110] sm:$0xff] %vm483, %v562
      %599 = vst.msk [vmem:[#allocation3 + $0x118] sm:$0xff] %vm483, %v563
      %v600 = vld [vmem:[#allocation2 + $0x1] sm:$0xff]
      %v601 = vld [vmem:[#allocation2 + $0x9] sm:$0xff]
      %v602 = vld [vmem:[#allocation2 + $0x11] sm:$0xff]
      %v603 = vld [vmem:[#allocation2 + $0x19] sm:$0xff]
      %v604 = vld [vmem:[#allocation2 + $0x21] sm:$0xff]
      %v605 = vld [vmem:[#allocation2 + $0x29] sm:$0xff]
      %v606 = vld [vmem:[#allocation2 + $0x31] sm:$0xff]
      %v607 = vld [vmem:[#allocation2 + $0x39] sm:$0xff]
      %v608 = vld [vmem:[#allocation2 + $0x41] sm:$0xff]
      %v609 = vld [vmem:[#allocation2 + $0x49] sm:$0xff]
      %v610 = vld [vmem:[#allocation2 + $0x51] sm:$0xff]
      %v611 = vld [vmem:[#allocation2 + $0x59] sm:$0xff]
      %v612 = vld [vmem:[#allocation2 + $0x61] sm:$0xff]
      %v613 = vld [vmem:[#allocation2 + $0x69] sm:$0xff]
      %v614 = vld [vmem:[#allocation2 + $0x71] sm:$0xff]
      %v615 = vld [vmem:[#allocation2 + $0x79] sm:$0xff]
      %v616 = vld [vmem:[#allocation2 + $0x81] sm:$0xff]
      %v617 = vld [vmem:[#allocation2 + $0x89] sm:$0xff]
      %v618 = vld [vmem:[#allocation2 + $0x91] sm:$0xff]
      %v619 = vld [vmem:[#allocation2 + $0x99] sm:$0xff]
      %v620 = vld [vmem:[#allocation2 + $0xa1] sm:$0xff]
      %v621 = vld [vmem:[#allocation2 + $0xa9] sm:$0xff]
      %v622 = vld [vmem:[#allocation2 + $0xb1] sm:$0xff]
      %v623 = vld [vmem:[#allocation2 + $0xb9] sm:$0xff]
      %v624 = vld [vmem:[#allocation2 + $0xc1] sm:$0xff]
      %v625 = vld [vmem:[#allocation2 + $0xc9] sm:$0xff]
      %v626 = vld [vmem:[#allocation2 + $0xd1] sm:$0xff]
      %v627 = vld [vmem:[#allocation2 + $0xd9] sm:$0xff]
      %v628 = vld [vmem:[#allocation2 + $0xe1] sm:$0xff]
      %v629 = vld [vmem:[#allocation2 + $0xe9] sm:$0xff]
      %v630 = vld [vmem:[#allocation2 + $0xf1] sm:$0xff]
      %v631 = vld [vmem:[#allocation2 + $0xf9] sm:$0xff]
      %v632 = vld [vmem:[#allocation2 + $0x101] sm:$0xff]
      %v633 = vld [vmem:[#allocation2 + $0x109] sm:$0xff]
      %v634 = vld [vmem:[#allocation2 + $0x111] sm:$0xff]
      %v635 = vld [vmem:[#allocation2 + $0x119] sm:$0xff]
      %672 = vrot.lane.b32.xlu0 %v600, 4
      %v673 = vpop.permute.xlu0 %672
      %674 = vrot.lane.b32.xlu0 %v601, 4
      %v675 = vpop.permute.xlu0 %674
      %676 = vrot.lane.b32.xlu0 %v602, 4
      %v677 = vpop.permute.xlu0 %676
      %678 = vrot.lane.b32.xlu0 %v603, 4
      %v679 = vpop.permute.xlu0 %678
      %680 = vrot.lane.b32.xlu0 %v604, 4
      %v681 = vpop.permute.xlu0 %680
      %682 = vrot.lane.b32.xlu0 %v605, 4
      %v683 = vpop.permute.xlu0 %682
      %684 = vrot.lane.b32.xlu0 %v606, 4
      %v685 = vpop.permute.xlu0 %684
      %686 = vrot.lane.b32.xlu0 %v607, 4
      %v687 = vpop.permute.xlu0 %686
      %688 = vrot.lane.b32.xlu0 %v608, 4
      %v689 = vpop.permute.xlu0 %688
      %690 = vrot.lane.b32.xlu0 %v609, 4
      %v691 = vpop.permute.xlu0 %690
      %692 = vrot.lane.b32.xlu0 %v610, 4
      %v693 = vpop.permute.xlu0 %692
      %694 = vrot.lane.b32.xlu0 %v611, 4
      %v695 = vpop.permute.xlu0 %694
      %696 = vrot.lane.b32.xlu0 %v612, 4
      %v697 = vpop.permute.xlu0 %696
      %698 = vrot.lane.b32.xlu0 %v613, 4
      %v699 = vpop.permute.xlu0 %698
      %700 = vrot.lane.b32.xlu0 %v614, 4
      %v701 = vpop.permute.xlu0 %700
      %702 = vrot.lane.b32.xlu0 %v615, 4
      %v703 = vpop.permute.xlu0 %702
      %704 = vrot.lane.b32.xlu0 %v616, 4
      %v705 = vpop.permute.xlu0 %704
      %706 = vrot.lane.b32.xlu0 %v617, 4
      %v707 = vpop.permute.xlu0 %706
      %708 = vrot.lane.b32.xlu0 %v618, 4
      %v709 = vpop.permute.xlu0 %708
      %710 = vrot.lane.b32.xlu0 %v619, 4
      %v711 = vpop.permute.xlu0 %710
      %712 = vrot.lane.b32.xlu0 %v620, 4
      %v713 = vpop.permute.xlu0 %712
      %714 = vrot.lane.b32.xlu0 %v621, 4
      %v715 = vpop.permute.xlu0 %714
      %716 = vrot.lane.b32.xlu0 %v622, 4
      %v717 = vpop.permute.xlu0 %716
      %718 = vrot.lane.b32.xlu0 %v623, 4
      %v719 = vpop.permute.xlu0 %718
      %720 = vrot.lane.b32.xlu0 %v624, 4
      %v721 = vpop.permute.xlu0 %720
      %722 = vrot.lane.b32.xlu0 %v625, 4
      %v723 = vpop.permute.xlu0 %722
      %724 = vrot.lane.b32.xlu0 %v626, 4
      %v725 = vpop.permute.xlu0 %724
      %726 = vrot.lane.b32.xlu0 %v627, 4
      %v727 = vpop.permute.xlu0 %726
      %728 = vrot.lane.b32.xlu0 %v628, 4
      %v729 = vpop.permute.xlu0 %728
      %730 = vrot.lane.b32.xlu0 %v629, 4
      %v731 = vpop.permute.xlu0 %730
      %732 = vrot.lane.b32.xlu0 %v630, 4
      %v733 = vpop.permute.xlu0 %732
      %734 = vrot.lane.b32.xlu0 %v631, 4
      %v735 = vpop.permute.xlu0 %734
      %736 = vrot.lane.b32.xlu0 %v632, 4
      %v737 = vpop.permute.xlu0 %736
      %738 = vrot.lane.b32.xlu0 %v633, 4
      %v739 = vpop.permute.xlu0 %738
      %740 = vrot.lane.b32.xlu0 %v634, 4
      %v741 = vpop.permute.xlu0 %740
      %742 = vrot.lane.b32.xlu0 %v635, 4
      %v743 = vpop.permute.xlu0 %742
      %vm780 = vcmask 64544
      %781 = vst.msk [vmem:[#allocation3] sm:$0xff] %vm780, %v673
      %782 = vst.msk [vmem:[#allocation3 + $0x8] sm:$0xff] %vm780, %v675
      %783 = vst.msk [vmem:[#allocation3 + $0x10] sm:$0xff] %vm780, %v677
      %784 = vst.msk [vmem:[#allocation3 + $0x18] sm:$0xff] %vm780, %v679
      %785 = vst.msk [vmem:[#allocation3 + $0x20] sm:$0xff] %vm780, %v681
      %786 = vst.msk [vmem:[#allocation3 + $0x28] sm:$0xff] %vm780, %v683
      %787 = vst.msk [vmem:[#allocation3 + $0x30] sm:$0xff] %vm780, %v685
      %788 = vst.msk [vmem:[#allocation3 + $0x38] sm:$0xff] %vm780, %v687
      %789 = vst.msk [vmem:[#allocation3 + $0x40] sm:$0xff] %vm780, %v689
      %790 = vst.msk [vmem:[#allocation3 + $0x48] sm:$0xff] %vm780, %v691
      %791 = vst.msk [vmem:[#allocation3 + $0x50] sm:$0xff] %vm780, %v693
      %792 = vst.msk [vmem:[#allocation3 + $0x58] sm:$0xff] %vm780, %v695
      %793 = vst.msk [vmem:[#allocation3 + $0x60] sm:$0xff] %vm780, %v697
      %794 = vst.msk [vmem:[#allocation3 + $0x68] sm:$0xff] %vm780, %v699
      %795 = vst.msk [vmem:[#allocation3 + $0x70] sm:$0xff] %vm780, %v701
      %796 = vst.msk [vmem:[#allocation3 + $0x78] sm:$0xff] %vm780, %v703
      %797 = vst.msk [vmem:[#allocation3 + $0x80] sm:$0xff] %vm780, %v705
      %798 = vst.msk [vmem:[#allocation3 + $0x88] sm:$0xff] %vm780, %v707
      %799 = vst.msk [vmem:[#allocation3 + $0x90] sm:$0xff] %vm780, %v709
      %800 = vst.msk [vmem:[#allocation3 + $0x98] sm:$0xff] %vm780, %v711
      %801 = vst.msk [vmem:[#allocation3 + $0xa0] sm:$0xff] %vm780, %v713
      %802 = vst.msk [vmem:[#allocation3 + $0xa8] sm:$0xff] %vm780, %v715
      %803 = vst.msk [vmem:[#allocation3 + $0xb0] sm:$0xff] %vm780, %v717
      %804 = vst.msk [vmem:[#allocation3 + $0xb8] sm:$0xff] %vm780, %v719
      %805 = vst.msk [vmem:[#allocation3 + $0xc0] sm:$0xff] %vm780, %v721
      %806 = vst.msk [vmem:[#allocation3 + $0xc8] sm:$0xff] %vm780, %v723
      %807 = vst.msk [vmem:[#allocation3 + $0xd0] sm:$0xff] %vm780, %v725
      %808 = vst.msk [vmem:[#allocation3 + $0xd8] sm:$0xff] %vm780, %v727
      %809 = vst.msk [vmem:[#allocation3 + $0xe0] sm:$0xff] %vm780, %v729
      %810 = vst.msk [vmem:[#allocation3 + $0xe8] sm:$0xff] %vm780, %v731
      %811 = vst.msk [vmem:[#allocation3 + $0xf0] sm:$0xff] %vm780, %v733
      %812 = vst.msk [vmem:[#allocation3 + $0xf8] sm:$0xff] %vm780, %v735
      %813 = vst.msk [vmem:[#allocation3 + $0x100] sm:$0xff] %vm780, %v737
      %814 = vst.msk [vmem:[#allocation3 + $0x108] sm:$0xff] %vm780, %v739
      %815 = vst.msk [vmem:[#allocation3 + $0x110] sm:$0xff] %vm780, %v741
      %816 = vst.msk [vmem:[#allocation3 + $0x118] sm:$0xff] %vm780, %v743
      %v817 = vld [vmem:[#allocation2 + $0x2] sm:$0xff]
      %v818 = vld [vmem:[#allocation2 + $0xa] sm:$0xff]
      %v819 = vld [vmem:[#allocation2 + $0x12] sm:$0xff]
      %v820 = vld [vmem:[#allocation2 + $0x1a] sm:$0xff]
      %v821 = vld [vmem:[#allocation2 + $0x22] sm:$0xff]
      %v822 = vld [vmem:[#allocation2 + $0x2a] sm:$0xff]
      %v823 = vld [vmem:[#allocation2 + $0x32] sm:$0xff]
      %v824 = vld [vmem:[#allocation2 + $0x3a] sm:$0xff]
      %v825 = vld [vmem:[#allocation2 + $0x42] sm:$0xff]
      %v826 = vld [vmem:[#allocation2 + $0x4a] sm:$0xff]
      %v827 = vld [vmem:[#allocation2 + $0x52] sm:$0xff]
      %v828 = vld [vmem:[#allocation2 + $0x5a] sm:$0xff]
      %v829 = vld [vmem:[#allocation2 + $0x62] sm:$0xff]
      %v830 = vld [vmem:[#allocation2 + $0x6a] sm:$0xff]
      %v831 = vld [vmem:[#allocation2 + $0x72] sm:$0xff]
      %v832 = vld [vmem:[#allocation2 + $0x7a] sm:$0xff]
      %v833 = vld [vmem:[#allocation2 + $0x82] sm:$0xff]
      %v834 = vld [vmem:[#allocation2 + $0x8a] sm:$0xff]
      %v835 = vld [vmem:[#allocation2 + $0x92] sm:$0xff]
      %v836 = vld [vmem:[#allocation2 + $0x9a] sm:$0xff]
      %v837 = vld [vmem:[#allocation2 + $0xa2] sm:$0xff]
      %v838 = vld [vmem:[#allocation2 + $0xaa] sm:$0xff]
      %v839 = vld [vmem:[#allocation2 + $0xb2] sm:$0xff]
      %v840 = vld [vmem:[#allocation2 + $0xba] sm:$0xff]
      %v841 = vld [vmem:[#allocation2 + $0xc2] sm:$0xff]
      %v842 = vld [vmem:[#allocation2 + $0xca] sm:$0xff]
      %v843 = vld [vmem:[#allocation2 + $0xd2] sm:$0xff]
      %v844 = vld [vmem:[#allocation2 + $0xda] sm:$0xff]
      %v845 = vld [vmem:[#allocation2 + $0xe2] sm:$0xff]
      %v846 = vld [vmem:[#allocation2 + $0xea] sm:$0xff]
      %v847 = vld [vmem:[#allocation2 + $0xf2] sm:$0xff]
      %v848 = vld [vmem:[#allocation2 + $0xfa] sm:$0xff]
      %v849 = vld [vmem:[#allocation2 + $0x102] sm:$0xff]
      %v850 = vld [vmem:[#allocation2 + $0x10a] sm:$0xff]
      %v851 = vld [vmem:[#allocation2 + $0x112] sm:$0xff]
      %v852 = vld [vmem:[#allocation2 + $0x11a] sm:$0xff]
      %889 = vrot.lane.b32.xlu0 %v817, 8
      %v890 = vpop.permute.xlu0 %889
      %891 = vrot.lane.b32.xlu0 %v818, 8
      %v892 = vpop.permute.xlu0 %891
      %893 = vrot.lane.b32.xlu0 %v819, 8
      %v894 = vpop.permute.xlu0 %893
      %895 = vrot.lane.b32.xlu0 %v820, 8
      %v896 = vpop.permute.xlu0 %895
      %897 = vrot.lane.b32.xlu0 %v821, 8
      %v898 = vpop.permute.xlu0 %897
      %899 = vrot.lane.b32.xlu0 %v822, 8
      %v900 = vpop.permute.xlu0 %899
      %901 = vrot.lane.b32.xlu0 %v823, 8
      %v902 = vpop.permute.xlu0 %901
      %903 = vrot.lane.b32.xlu0 %v824, 8
      %v904 = vpop.permute.xlu0 %903
      %905 = vrot.lane.b32.xlu0 %v825, 8
      %v906 = vpop.permute.xlu0 %905
      %907 = vrot.lane.b32.xlu0 %v826, 8
      %v908 = vpop.permute.xlu0 %907
      %909 = vrot.lane.b32.xlu0 %v827, 8
      %v910 = vpop.permute.xlu0 %909
      %911 = vrot.lane.b32.xlu0 %v828, 8
      %v912 = vpop.permute.xlu0 %911
      %913 = vrot.lane.b32.xlu0 %v829, 8
      %v914 = vpop.permute.xlu0 %913
      %915 = vrot.lane.b32.xlu0 %v830, 8
      %v916 = vpop.permute.xlu0 %915
      %917 = vrot.lane.b32.xlu0 %v831, 8
      %v918 = vpop.permute.xlu0 %917
      %919 = vrot.lane.b32.xlu0 %v832, 8
      %v920 = vpop.permute.xlu0 %919
      %921 = vrot.lane.b32.xlu0 %v833, 8
      %v922 = vpop.permute.xlu0 %921
      %923 = vrot.lane.b32.xlu0 %v834, 8
      %v924 = vpop.permute.xlu0 %923
      %925 = vrot.lane.b32.xlu0 %v835, 8
      %v926 = vpop.permute.xlu0 %925
      %927 = vrot.lane.b32.xlu0 %v836, 8
      %v928 = vpop.permute.xlu0 %927
      %929 = vrot.lane.b32.xlu0 %v837, 8
      %v930 = vpop.permute.xlu0 %929
      %931 = vrot.lane.b32.xlu0 %v838, 8
      %v932 = vpop.permute.xlu0 %931
      %933 = vrot.lane.b32.xlu0 %v839, 8
      %v934 = vpop.permute.xlu0 %933
      %935 = vrot.lane.b32.xlu0 %v840, 8
      %v936 = vpop.permute.xlu0 %935
      %937 = vrot.lane.b32.xlu0 %v841, 8
      %v938 = vpop.permute.xlu0 %937
      %939 = vrot.lane.b32.xlu0 %v842, 8
      %v940 = vpop.permute.xlu0 %939
      %941 = vrot.lane.b32.xlu0 %v843, 8
      %v942 = vpop.permute.xlu0 %941
      %943 = vrot.lane.b32.xlu0 %v844, 8
      %v944 = vpop.permute.xlu0 %943
      %945 = vrot.lane.b32.xlu0 %v845, 8
      %v946 = vpop.permute.xlu0 %945
      %947 = vrot.lane.b32.xlu0 %v846, 8
      %v948 = vpop.permute.xlu0 %947
      %949 = vrot.lane.b32.xlu0 %v847, 8
      %v950 = vpop.permute.xlu0 %949
      %951 = vrot.lane.b32.xlu0 %v848, 8
      %v952 = vpop.permute.xlu0 %951
      %953 = vrot.lane.b32.xlu0 %v849, 8
      %v954 = vpop.permute.xlu0 %953
      %955 = vrot.lane.b32.xlu0 %v850, 8
      %v956 = vpop.permute.xlu0 %955
      %957 = vrot.lane.b32.xlu0 %v851, 8
      %v958 = vpop.permute.xlu0 %957
      %959 = vrot.lane.b32.xlu0 %v852, 8
      %v960 = vpop.permute.xlu0 %959
      %vm997 = vcmask 97344
      %998 = vst.msk [vmem:[#allocation3] sm:$0xff] %vm997, %v890
      %999 = vst.msk [vmem:[#allocation3 + $0x8] sm:$0xff] %vm997, %v892
      %1000 = vst.msk [vmem:[#allocation3 + $0x10] sm:$0xff] %vm997, %v894
      %1001 = vst.msk [vmem:[#allocation3 + $0x18] sm:$0xff] %vm997, %v896
      %1002 = vst.msk [vmem:[#allocation3 + $0x20] sm:$0xff] %vm997, %v898
      %1003 = vst.msk [vmem:[#allocation3 + $0x28] sm:$0xff] %vm997, %v900
      %1004 = vst.msk [vmem:[#allocation3 + $0x30] sm:$0xff] %vm997, %v902
      %1005 = vst.msk [vmem:[#allocation3 + $0x38] sm:$0xff] %vm997, %v904
      %1006 = vst.msk [vmem:[#allocation3 + $0x40] sm:$0xff] %vm997, %v906
      %1007 = vst.msk [vmem:[#allocation3 + $0x48] sm:$0xff] %vm997, %v908
      %1008 = vst.msk [vmem:[#allocation3 + $0x50] sm:$0xff] %vm997, %v910
      %1009 = vst.msk [vmem:[#allocation3 + $0x58] sm:$0xff] %vm997, %v912
      %1010 = vst.msk [vmem:[#allocation3 + $0x60] sm:$0xff] %vm997, %v914
      %1011 = vst.msk [vmem:[#allocation3 + $0x68] sm:$0xff] %vm997, %v916
      %1012 = vst.msk [vmem:[#allocation3 + $0x70] sm:$0xff] %vm997, %v918
      %1013 = vst.msk [vmem:[#allocation3 + $0x78] sm:$0xff] %vm997, %v920
      %1014 = vst.msk [vmem:[#allocation3 + $0x80] sm:$0xff] %vm997, %v922
      %1015 = vst.msk [vmem:[#allocation3 + $0x88] sm:$0xff] %vm997, %v924
      %1016 = vst.msk [vmem:[#allocation3 + $0x90] sm:$0xff] %vm997, %v926
      %1017 = vst.msk [vmem:[#allocation3 + $0x98] sm:$0xff] %vm997, %v928
      %1018 = vst.msk [vmem:[#allocation3 + $0xa0] sm:$0xff] %vm997, %v930
      %1019 = vst.msk [vmem:[#allocation3 + $0xa8] sm:$0xff] %vm997, %v932
      %1020 = vst.msk [vmem:[#allocation3 + $0xb0] sm:$0xff] %vm997, %v934
      %1021 = vst.msk [vmem:[#allocation3 + $0xb8] sm:$0xff] %vm997, %v936
      %1022 = vst.msk [vmem:[#allocation3 + $0xc0] sm:$0xff] %vm997, %v938
      %1023 = vst.msk [vmem:[#allocation3 + $0xc8] sm:$0xff] %vm997, %v940
      %1024 = vst.msk [vmem:[#allocation3 + $0xd0] sm:$0xff] %vm997, %v942
      %1025 = vst.msk [vmem:[#allocation3 + $0xd8] sm:$0xff] %vm997, %v944
      %1026 = vst.msk [vmem:[#allocation3 + $0xe0] sm:$0xff] %vm997, %v946
      %1027 = vst.msk [vmem:[#allocation3 + $0xe8] sm:$0xff] %vm997, %v948
      %1028 = vst.msk [vmem:[#allocation3 + $0xf0] sm:$0xff] %vm997, %v950
      %1029 = vst.msk [vmem:[#allocation3 + $0xf8] sm:$0xff] %vm997, %v952
      %1030 = vst.msk [vmem:[#allocation3 + $0x100] sm:$0xff] %vm997, %v954
      %1031 = vst.msk [vmem:[#allocation3 + $0x108] sm:$0xff] %vm997, %v956
      %1032 = vst.msk [vmem:[#allocation3 + $0x110] sm:$0xff] %vm997, %v958
      %1033 = vst.msk [vmem:[#allocation3 + $0x118] sm:$0xff] %vm997, %v960
      %v1034 = vld [vmem:[#allocation2 + $0x12] sm:$0xff]
      %v1035 = vld [vmem:[#allocation2 + $0x1a] sm:$0xff]
      %v1036 = vld [vmem:[#allocation2 + $0x22] sm:$0xff]
      %v1037 = vld [vmem:[#allocation2 + $0x2a] sm:$0xff]
      %v1038 = vld [vmem:[#allocation2 + $0x32] sm:$0xff]
      %v1039 = vld [vmem:[#allocation2 + $0x3a] sm:$0xff]
      %v1040 = vld [vmem:[#allocation2 + $0x42] sm:$0xff]
      %v1041 = vld [vmem:[#allocation2 + $0x4a] sm:$0xff]
      %v1042 = vld [vmem:[#allocation2 + $0x52] sm:$0xff]
      %v1043 = vld [vmem:[#allocation2 + $0x5a] sm:$0xff]
      %v1044 = vld [vmem:[#allocation2 + $0x62] sm:$0xff]
      %v1045 = vld [vmem:[#allocation2 + $0x6a] sm:$0xff]
      %v1046 = vld [vmem:[#allocation2 + $0x72] sm:$0xff]
      %v1047 = vld [vmem:[#allocation2 + $0x7a] sm:$0xff]
      %v1048 = vld [vmem:[#allocation2 + $0x82] sm:$0xff]
      %v1049 = vld [vmem:[#allocation2 + $0x8a] sm:$0xff]
      %v1050 = vld [vmem:[#allocation2 + $0x92] sm:$0xff]
      %v1051 = vld [vmem:[#allocation2 + $0x9a] sm:$0xff]
      %v1052 = vld [vmem:[#allocation2 + $0xa2] sm:$0xff]
      %v1053 = vld [vmem:[#allocation2 + $0xaa] sm:$0xff]
      %v1054 = vld [vmem:[#allocation2 + $0xb2] sm:$0xff]
      %v1055 = vld [vmem:[#allocation2 + $0xba] sm:$0xff]
      %v1056 = vld [vmem:[#allocation2 + $0xc2] sm:$0xff]
      %v1057 = vld [vmem:[#allocation2 + $0xca] sm:$0xff]
      %v1058 = vld [vmem:[#allocation2 + $0xd2] sm:$0xff]
      %v1059 = vld [vmem:[#allocation2 + $0xda] sm:$0xff]
      %v1060 = vld [vmem:[#allocation2 + $0xe2] sm:$0xff]
      %v1061 = vld [vmem:[#allocation2 + $0xea] sm:$0xff]
      %v1062 = vld [vmem:[#allocation2 + $0xf2] sm:$0xff]
      %v1063 = vld [vmem:[#allocation2 + $0xfa] sm:$0xff]
      %v1064 = vld [vmem:[#allocation2 + $0x102] sm:$0xff]
      %v1065 = vld [vmem:[#allocation2 + $0x10a] sm:$0xff]
      %v1066 = vld [vmem:[#allocation2 + $0x112] sm:$0xff]
      %v1067 = vld [vmem:[#allocation2 + $0x11a] sm:$0xff]
      %v1068 = vld [vmem:[#allocation2 + $0x122] sm:$0xff]
      %v1069 = vld [vmem:[#allocation2 + $0x12a] sm:$0xff]
      %1106 = vrot.lane.b32.xlu0 %v1034, 12
      %v1107 = vpop.permute.xlu0 %1106
      %1108 = vrot.lane.b32.xlu0 %v1035, 12
      %v1109 = vpop.permute.xlu0 %1108
      %1110 = vrot.lane.b32.xlu0 %v1036, 12
      %v1111 = vpop.permute.xlu0 %1110
      %1112 = vrot.lane.b32.xlu0 %v1037, 12
      %v1113 = vpop.permute.xlu0 %1112
      %1114 = vrot.lane.b32.xlu0 %v1038, 12
      %v1115 = vpop.permute.xlu0 %1114
      %1116 = vrot.lane.b32.xlu0 %v1039, 12
      %v1117 = vpop.permute.xlu0 %1116
      %1118 = vrot.lane.b32.xlu0 %v1040, 12
      %v1119 = vpop.permute.xlu0 %1118
      %1120 = vrot.lane.b32.xlu0 %v1041, 12
      %v1121 = vpop.permute.xlu0 %1120
      %1122 = vrot.lane.b32.xlu0 %v1042, 12
      %v1123 = vpop.permute.xlu0 %1122
      %1124 = vrot.lane.b32.xlu0 %v1043, 12
      %v1125 = vpop.permute.xlu0 %1124
      %1126 = vrot.lane.b32.xlu0 %v1044, 12
      %v1127 = vpop.permute.xlu0 %1126
      %1128 = vrot.lane.b32.xlu0 %v1045, 12
      %v1129 = vpop.permute.xlu0 %1128
      %1130 = vrot.lane.b32.xlu0 %v1046, 12
      %v1131 = vpop.permute.xlu0 %1130
      %1132 = vrot.lane.b32.xlu0 %v1047, 12
      %v1133 = vpop.permute.xlu0 %1132
      %1134 = vrot.lane.b32.xlu0 %v1048, 12
      %v1135 = vpop.permute.xlu0 %1134
      %1136 = vrot.lane.b32.xlu0 %v1049, 12
      %v1137 = vpop.permute.xlu0 %1136
      %1138 = vrot.lane.b32.xlu0 %v1050, 12
      %v1139 = vpop.permute.xlu0 %1138
      %1140 = vrot.lane.b32.xlu0 %v1051, 12
      %v1141 = vpop.permute.xlu0 %1140
      %1142 = vrot.lane.b32.xlu0 %v1052, 12
      %v1143 = vpop.permute.xlu0 %1142
      %1144 = vrot.lane.b32.xlu0 %v1053, 12
      %v1145 = vpop.permute.xlu0 %1144
      %1146 = vrot.lane.b32.xlu0 %v1054, 12
      %v1147 = vpop.permute.xlu0 %1146
      %1148 = vrot.lane.b32.xlu0 %v1055, 12
      %v1149 = vpop.permute.xlu0 %1148
      %1150 = vrot.lane.b32.xlu0 %v1056, 12
      %v1151 = vpop.permute.xlu0 %1150
      %1152 = vrot.lane.b32.xlu0 %v1057, 12
      %v1153 = vpop.permute.xlu0 %1152
      %1154 = vrot.lane.b32.xlu0 %v1058, 12
      %v1155 = vpop.permute.xlu0 %1154
      %1156 = vrot.lane.b32.xlu0 %v1059, 12
      %v1157 = vpop.permute.xlu0 %1156
      %1158 = vrot.lane.b32.xlu0 %v1060, 12
      %v1159 = vpop.permute.xlu0 %1158
      %1160 = vrot.lane.b32.xlu0 %v1061, 12
      %v1161 = vpop.permute.xlu0 %1160
      %1162 = vrot.lane.b32.xlu0 %v1062, 12
      %v1163 = vpop.permute.xlu0 %1162
      %1164 = vrot.lane.b32.xlu0 %v1063, 12
      %v1165 = vpop.permute.xlu0 %1164
      %1166 = vrot.lane.b32.xlu0 %v1064, 12
      %v1167 = vpop.permute.xlu0 %1166
      %1168 = vrot.lane.b32.xlu0 %v1065, 12
      %v1169 = vpop.permute.xlu0 %1168
      %1170 = vrot.lane.b32.xlu0 %v1066, 12
      %v1171 = vpop.permute.xlu0 %1170
      %1172 = vrot.lane.b32.xlu0 %v1067, 12
      %v1173 = vpop.permute.xlu0 %1172
      %1174 = vrot.lane.b32.xlu0 %v1068, 12
      %v1175 = vpop.permute.xlu0 %1174
      %1176 = vrot.lane.b32.xlu0 %v1069, 12
      %v1177 = vpop.permute.xlu0 %1176
      %vm1214 = vcmask 130144
      %1215 = vst.msk [vmem:[#allocation3] sm:$0xff] %vm1214, %v1107
      %1216 = vst.msk [vmem:[#allocation3 + $0x8] sm:$0xff] %vm1214, %v1109
      %1217 = vst.msk [vmem:[#allocation3 + $0x10] sm:$0xff] %vm1214, %v1111
      %1218 = vst.msk [vmem:[#allocation3 + $0x18] sm:$0xff] %vm1214, %v1113
      %1219 = vst.msk [vmem:[#allocation3 + $0x20] sm:$0xff] %vm1214, %v1115
      %1220 = vst.msk [vmem:[#allocation3 + $0x28] sm:$0xff] %vm1214, %v1117
      %1221 = vst.msk [vmem:[#allocation3 + $0x30] sm:$0xff] %vm1214, %v1119
      %1222 = vst.msk [vmem:[#allocation3 + $0x38] sm:$0xff] %vm1214, %v1121
      %1223 = vst.msk [vmem:[#allocation3 + $0x40] sm:$0xff] %vm1214, %v1123
      %1224 = vst.msk [vmem:[#allocation3 + $0x48] sm:$0xff] %vm1214, %v1125
      %1225 = vst.msk [vmem:[#allocation3 + $0x50] sm:$0xff] %vm1214, %v1127
      %1226 = vst.msk [vmem:[#allocation3 + $0x58] sm:$0xff] %vm1214, %v1129
      %1227 = vst.msk [vmem:[#allocation3 + $0x60] sm:$0xff] %vm1214, %v1131
      %1228 = vst.msk [vmem:[#allocation3 + $0x68] sm:$0xff] %vm1214, %v1133
      %1229 = vst.msk [vmem:[#allocation3 + $0x70] sm:$0xff] %vm1214, %v1135
      %1230 = vst.msk [vmem:[#allocation3 + $0x78] sm:$0xff] %vm1214, %v1137
      %1231 = vst.msk [vmem:[#allocation3 + $0x80] sm:$0xff] %vm1214, %v1139
      %1232 = vst.msk [vmem:[#allocation3 + $0x88] sm:$0xff] %vm1214, %v1141
      %1233 = vst.msk [vmem:[#allocation3 + $0x90] sm:$0xff] %vm1214, %v1143
      %1234 = vst.msk [vmem:[#allocation3 + $0x98] sm:$0xff] %vm1214, %v1145
      %1235 = vst.msk [vmem:[#allocation3 + $0xa0] sm:$0xff] %vm1214, %v1147
      %1236 = vst.msk [vmem:[#allocation3 + $0xa8] sm:$0xff] %vm1214, %v1149
      %1237 = vst.msk [vmem:[#allocation3 + $0xb0] sm:$0xff] %vm1214, %v1151
      %1238 = vst.msk [vmem:[#allocation3 + $0xb8] sm:$0xff] %vm1214, %v1153
      %1239 = vst.msk [vmem:[#allocation3 + $0xc0] sm:$0xff] %vm1214, %v1155
      %1240 = vst.msk [vmem:[#allocation3 + $0xc8] sm:$0xff] %vm1214, %v1157
      %1241 = vst.msk [vmem:[#allocation3 + $0xd0] sm:$0xff] %vm1214, %v1159
      %1242 = vst.msk [vmem:[#allocation3 + $0xd8] sm:$0xff] %vm1214, %v1161
      %1243 = vst.msk [vmem:[#allocation3 + $0xe0] sm:$0xff] %vm1214, %v1163
      %1244 = vst.msk [vmem:[#allocation3 + $0xe8] sm:$0xff] %vm1214, %v1165
      %1245 = vst.msk [vmem:[#allocation3 + $0xf0] sm:$0xff] %vm1214, %v1167
      %1246 = vst.msk [vmem:[#allocation3 + $0xf8] sm:$0xff] %vm1214, %v1169
      %1247 = vst.msk [vmem:[#allocation3 + $0x100] sm:$0xff] %vm1214, %v1171
      %1248 = vst.msk [vmem:[#allocation3 + $0x108] sm:$0xff] %vm1214, %v1173
      %1249 = vst.msk [vmem:[#allocation3 + $0x110] sm:$0xff] %vm1214, %v1175
      %1250 = vst.msk [vmem:[#allocation3 + $0x118] sm:$0xff] %vm1214, %v1177
      %v1251 = vld [vmem:[#allocation2 + $0x13] sm:$0xff]
      %v1252 = vld [vmem:[#allocation2 + $0x1b] sm:$0xff]
      %v1253 = vld [vmem:[#allocation2 + $0x23] sm:$0xff]
      %v1254 = vld [vmem:[#allocation2 + $0x2b] sm:$0xff]
      %v1255 = vld [vmem:[#allocation2 + $0x33] sm:$0xff]
      %v1256 = vld [vmem:[#allocation2 + $0x3b] sm:$0xff]
      %v1257 = vld [vmem:[#allocation2 + $0x43] sm:$0xff]
      %v1258 = vld [vmem:[#allocation2 + $0x4b] sm:$0xff]
      %v1259 = vld [vmem:[#allocation2 + $0x53] sm:$0xff]
      %v1260 = vld [vmem:[#allocation2 + $0x5b] sm:$0xff]
      %v1261 = vld [vmem:[#allocation2 + $0x63] sm:$0xff]
      %v1262 = vld [vmem:[#allocation2 + $0x6b] sm:$0xff]
      %v1263 = vld [vmem:[#allocation2 + $0x73] sm:$0xff]
      %v1264 = vld [vmem:[#allocation2 + $0x7b] sm:$0xff]
      %v1265 = vld [vmem:[#allocation2 + $0x83] sm:$0xff]
      %v1266 = vld [vmem:[#allocation2 + $0x8b] sm:$0xff]
      %v1267 = vld [vmem:[#allocation2 + $0x93] sm:$0xff]
      %v1268 = vld [vmem:[#allocation2 + $0x9b] sm:$0xff]
      %v1269 = vld [vmem:[#allocation2 + $0xa3] sm:$0xff]
      %v1270 = vld [vmem:[#allocation2 + $0xab] sm:$0xff]
      %v1271 = vld [vmem:[#allocation2 + $0xb3] sm:$0xff]
      %v1272 = vld [vmem:[#allocation2 + $0xbb] sm:$0xff]
      %v1273 = vld [vmem:[#allocation2 + $0xc3] sm:$0xff]
      %v1274 = vld [vmem:[#allocation2 + $0xcb] sm:$0xff]
      %v1275 = vld [vmem:[#allocation2 + $0xd3] sm:$0xff]
      %v1276 = vld [vmem:[#allocation2 + $0xdb] sm:$0xff]
      %v1277 = vld [vmem:[#allocation2 + $0xe3] sm:$0xff]
      %v1278 = vld [vmem:[#allocation2 + $0xeb] sm:$0xff]
      %v1279 = vld [vmem:[#allocation2 + $0xf3] sm:$0xff]
      %v1280 = vld [vmem:[#allocation2 + $0xfb] sm:$0xff]
      %v1281 = vld [vmem:[#allocation2 + $0x103] sm:$0xff]
      %v1282 = vld [vmem:[#allocation2 + $0x10b] sm:$0xff]
      %v1283 = vld [vmem:[#allocation2 + $0x113] sm:$0xff]
      %v1284 = vld [vmem:[#allocation2 + $0x11b] sm:$0xff]
      %v1285 = vld [vmem:[#allocation2 + $0x123] sm:$0xff]
      %v1286 = vld [vmem:[#allocation2 + $0x12b] sm:$0xff]
      %1323 = vrot.lane.b32.xlu0 %v1251, 16
      %v1324 = vpop.permute.xlu0 %1323
      %1325 = vrot.lane.b32.xlu0 %v1252, 16
      %v1326 = vpop.permute.xlu0 %1325
      %1327 = vrot.lane.b32.xlu0 %v1253, 16
      %v1328 = vpop.permute.xlu0 %1327
      %1329 = vrot.lane.b32.xlu0 %v1254, 16
      %v1330 = vpop.permute.xlu0 %1329
      %1331 = vrot.lane.b32.xlu0 %v1255, 16
      %v1332 = vpop.permute.xlu0 %1331
      %1333 = vrot.lane.b32.xlu0 %v1256, 16
      %v1334 = vpop.permute.xlu0 %1333
      %1335 = vrot.lane.b32.xlu0 %v1257, 16
      %v1336 = vpop.permute.xlu0 %1335
      %1337 = vrot.lane.b32.xlu0 %v1258, 16
      %v1338 = vpop.permute.xlu0 %1337
      %1339 = vrot.lane.b32.xlu0 %v1259, 16
      %v1340 = vpop.permute.xlu0 %1339
      %1341 = vrot.lane.b32.xlu0 %v1260, 16
      %v1342 = vpop.permute.xlu0 %1341
      %1343 = vrot.lane.b32.xlu0 %v1261, 16
      %v1344 = vpop.permute.xlu0 %1343
      %1345 = vrot.lane.b32.xlu0 %v1262, 16
      %v1346 = vpop.permute.xlu0 %1345
      %1347 = vrot.lane.b32.xlu0 %v1263, 16
      %v1348 = vpop.permute.xlu0 %1347
      %1349 = vrot.lane.b32.xlu0 %v1264, 16
      %v1350 = vpop.permute.xlu0 %1349
      %1351 = vrot.lane.b32.xlu0 %v1265, 16
      %v1352 = vpop.permute.xlu0 %1351
      %1353 = vrot.lane.b32.xlu0 %v1266, 16
      %v1354 = vpop.permute.xlu0 %1353
      %1355 = vrot.lane.b32.xlu0 %v1267, 16
      %v1356 = vpop.permute.xlu0 %1355
      %1357 = vrot.lane.b32.xlu0 %v1268, 16
      %v1358 = vpop.permute.xlu0 %1357
      %1359 = vrot.lane.b32.xlu0 %v1269, 16
      %v1360 = vpop.permute.xlu0 %1359
      %1361 = vrot.lane.b32.xlu0 %v1270, 16
      %v1362 = vpop.permute.xlu0 %1361
      %1363 = vrot.lane.b32.xlu0 %v1271, 16
      %v1364 = vpop.permute.xlu0 %1363
      %1365 = vrot.lane.b32.xlu0 %v1272, 16
      %v1366 = vpop.permute.xlu0 %1365
      %1367 = vrot.lane.b32.xlu0 %v1273, 16
      %v1368 = vpop.permute.xlu0 %1367
      %1369 = vrot.lane.b32.xlu0 %v1274, 16
      %v1370 = vpop.permute.xlu0 %1369
      %1371 = vrot.lane.b32.xlu0 %v1275, 16
      %v1372 = vpop.permute.xlu0 %1371
      %1373 = vrot.lane.b32.xlu0 %v1276, 16
      %v1374 = vpop.permute.xlu0 %1373
      %1375 = vrot.lane.b32.xlu0 %v1277, 16
      %v1376 = vpop.permute.xlu0 %1375
      %1377 = vrot.lane.b32.xlu0 %v1278, 16
      %v1378 = vpop.permute.xlu0 %1377
      %1379 = vrot.lane.b32.xlu0 %v1279, 16
      %v1380 = vpop.permute.xlu0 %1379
      %1381 = vrot.lane.b32.xlu0 %v1280, 16
      %v1382 = vpop.permute.xlu0 %1381
      %1383 = vrot.lane.b32.xlu0 %v1281, 16
      %v1384 = vpop.permute.xlu0 %1383
      %1385 = vrot.lane.b32.xlu0 %v1282, 16
      %v1386 = vpop.permute.xlu0 %1385
      %1387 = vrot.lane.b32.xlu0 %v1283, 16
      %v1388 = vpop.permute.xlu0 %1387
      %1389 = vrot.lane.b32.xlu0 %v1284, 16
      %v1390 = vpop.permute.xlu0 %1389
      %1391 = vrot.lane.b32.xlu0 %v1285, 16
      %v1392 = vpop.permute.xlu0 %1391
      %1393 = vrot.lane.b32.xlu0 %v1286, 16
      %v1394 = vpop.permute.xlu0 %1393
      %vm1431 = vcmask 162944
      %1432 = vst.msk [vmem:[#allocation3] sm:$0xff] %vm1431, %v1324
      %1433 = vst.msk [vmem:[#allocation3 + $0x8] sm:$0xff] %vm1431, %v1326
      %1434 = vst.msk [vmem:[#allocation3 + $0x10] sm:$0xff] %vm1431, %v1328
      %1435 = vst.msk [vmem:[#allocation3 + $0x18] sm:$0xff] %vm1431, %v1330
      %1436 = vst.msk [vmem:[#allocation3 + $0x20] sm:$0xff] %vm1431, %v1332
      %1437 = vst.msk [vmem:[#allocation3 + $0x28] sm:$0xff] %vm1431, %v1334
      %1438 = vst.msk [vmem:[#allocation3 + $0x30] sm:$0xff] %vm1431, %v1336
      %1439 = vst.msk [vmem:[#allocation3 + $0x38] sm:$0xff] %vm1431, %v1338
      %1440 = vst.msk [vmem:[#allocation3 + $0x40] sm:$0xff] %vm1431, %v1340
      %1441 = vst.msk [vmem:[#allocation3 + $0x48] sm:$0xff] %vm1431, %v1342
      %1442 = vst.msk [vmem:[#allocation3 + $0x50] sm:$0xff] %vm1431, %v1344
      %1443 = vst.msk [vmem:[#allocation3 + $0x58] sm:$0xff] %vm1431, %v1346
      %1444 = vst.msk [vmem:[#allocation3 + $0x60] sm:$0xff] %vm1431, %v1348
      %1445 = vst.msk [vmem:[#allocation3 + $0x68] sm:$0xff] %vm1431, %v1350
      %1446 = vst.msk [vmem:[#allocation3 + $0x70] sm:$0xff] %vm1431, %v1352
      %1447 = vst.msk [vmem:[#allocation3 + $0x78] sm:$0xff] %vm1431, %v1354
      %1448 = vst.msk [vmem:[#allocation3 + $0x80] sm:$0xff] %vm1431, %v1356
      %1449 = vst.msk [vmem:[#allocation3 + $0x88] sm:$0xff] %vm1431, %v1358
      %1450 = vst.msk [vmem:[#allocation3 + $0x90] sm:$0xff] %vm1431, %v1360
      %1451 = vst.msk [vmem:[#allocation3 + $0x98] sm:$0xff] %vm1431, %v1362
      %1452 = vst.msk [vmem:[#allocation3 + $0xa0] sm:$0xff] %vm1431, %v1364
      %1453 = vst.msk [vmem:[#allocation3 + $0xa8] sm:$0xff] %vm1431, %v1366
      %1454 = vst.msk [vmem:[#allocation3 + $0xb0] sm:$0xff] %vm1431, %v1368
      %1455 = vst.msk [vmem:[#allocation3 + $0xb8] sm:$0xff] %vm1431, %v1370
      %1456 = vst.msk [vmem:[#allocation3 + $0xc0] sm:$0xff] %vm1431, %v1372
      %1457 = vst.msk [vmem:[#allocation3 + $0xc8] sm:$0xff] %vm1431, %v1374
      %1458 = vst.msk [vmem:[#allocation3 + $0xd0] sm:$0xff] %vm1431, %v1376
      %1459 = vst.msk [vmem:[#allocation3 + $0xd8] sm:$0xff] %vm1431, %v1378
      %1460 = vst.msk [vmem:[#allocation3 + $0xe0] sm:$0xff] %vm1431, %v1380
      %1461 = vst.msk [vmem:[#allocation3 + $0xe8] sm:$0xff] %vm1431, %v1382
      %1462 = vst.msk [vmem:[#allocation3 + $0xf0] sm:$0xff] %vm1431, %v1384
      %1463 = vst.msk [vmem:[#allocation3 + $0xf8] sm:$0xff] %vm1431, %v1386
      %1464 = vst.msk [vmem:[#allocation3 + $0x100] sm:$0xff] %vm1431, %v1388
      %1465 = vst.msk [vmem:[#allocation3 + $0x108] sm:$0xff] %vm1431, %v1390
      %1466 = vst.msk [vmem:[#allocation3 + $0x110] sm:$0xff] %vm1431, %v1392
      %1467 = vst.msk [vmem:[#allocation3 + $0x118] sm:$0xff] %vm1431, %v1394
      %v1468 = vld [vmem:[#allocation2 + $0x14] sm:$0xff]
      %v1469 = vld [vmem:[#allocation2 + $0x1c] sm:$0xff]
      %v1470 = vld [vmem:[#allocation2 + $0x24] sm:$0xff]
      %v1471 = vld [vmem:[#allocation2 + $0x2c] sm:$0xff]
      %v1472 = vld [vmem:[#allocation2 + $0x34] sm:$0xff]
      %v1473 = vld [vmem:[#allocation2 + $0x3c] sm:$0xff]
      %v1474 = vld [vmem:[#allocation2 + $0x44] sm:$0xff]
      %v1475 = vld [vmem:[#allocation2 + $0x4c] sm:$0xff]
      %v1476 = vld [vmem:[#allocation2 + $0x54] sm:$0xff]
      %v1477 = vld [vmem:[#allocation2 + $0x5c] sm:$0xff]
      %v1478 = vld [vmem:[#allocation2 + $0x64] sm:$0xff]
      %v1479 = vld [vmem:[#allocation2 + $0x6c] sm:$0xff]
      %v1480 = vld [vmem:[#allocation2 + $0x74] sm:$0xff]
      %v1481 = vld [vmem:[#allocation2 + $0x7c] sm:$0xff]
      %v1482 = vld [vmem:[#allocation2 + $0x84] sm:$0xff]
      %v1483 = vld [vmem:[#allocation2 + $0x8c] sm:$0xff]
      %v1484 = vld [vmem:[#allocation2 + $0x94] sm:$0xff]
      %v1485 = vld [vmem:[#allocation2 + $0x9c] sm:$0xff]
      %v1486 = vld [vmem:[#allocation2 + $0xa4] sm:$0xff]
      %v1487 = vld [vmem:[#allocation2 + $0xac] sm:$0xff]
      %v1488 = vld [vmem:[#allocation2 + $0xb4] sm:$0xff]
      %v1489 = vld [vmem:[#allocation2 + $0xbc] sm:$0xff]
      %v1490 = vld [vmem:[#allocation2 + $0xc4] sm:$0xff]
      %v1491 = vld [vmem:[#allocation2 + $0xcc] sm:$0xff]
      %v1492 = vld [vmem:[#allocation2 + $0xd4] sm:$0xff]
      %v1493 = vld [vmem:[#allocation2 + $0xdc] sm:$0xff]
      %v1494 = vld [vmem:[#allocation2 + $0xe4] sm:$0xff]
      %v1495 = vld [vmem:[#allocation2 + $0xec] sm:$0xff]
      %v1496 = vld [vmem:[#allocation2 + $0xf4] sm:$0xff]
      %v1497 = vld [vmem:[#allocation2 + $0xfc] sm:$0xff]
      %v1498 = vld [vmem:[#allocation2 + $0x104] sm:$0xff]
      %v1499 = vld [vmem:[#allocation2 + $0x10c] sm:$0xff]
      %v1500 = vld [vmem:[#allocation2 + $0x114] sm:$0xff]
      %v1501 = vld [vmem:[#allocation2 + $0x11c] sm:$0xff]
      %v1502 = vld [vmem:[#allocation2 + $0x124] sm:$0xff]
      %v1503 = vld [vmem:[#allocation2 + $0x12c] sm:$0xff]
      %1540 = vrot.lane.b32.xlu0 %v1468, 20
      %v1541 = vpop.permute.xlu0 %1540
      %1542 = vrot.lane.b32.xlu0 %v1469, 20
      %v1543 = vpop.permute.xlu0 %1542
      %1544 = vrot.lane.b32.xlu0 %v1470, 20
      %v1545 = vpop.permute.xlu0 %1544
      %1546 = vrot.lane.b32.xlu0 %v1471, 20
      %v1547 = vpop.permute.xlu0 %1546
      %1548 = vrot.lane.b32.xlu0 %v1472, 20
      %v1549 = vpop.permute.xlu0 %1548
      %1550 = vrot.lane.b32.xlu0 %v1473, 20
      %v1551 = vpop.permute.xlu0 %1550
      %1552 = vrot.lane.b32.xlu0 %v1474, 20
      %v1553 = vpop.permute.xlu0 %1552
      %1554 = vrot.lane.b32.xlu0 %v1475, 20
      %v1555 = vpop.permute.xlu0 %1554
      %1556 = vrot.lane.b32.xlu0 %v1476, 20
      %v1557 = vpop.permute.xlu0 %1556
      %1558 = vrot.lane.b32.xlu0 %v1477, 20
      %v1559 = vpop.permute.xlu0 %1558
      %1560 = vrot.lane.b32.xlu0 %v1478, 20
      %v1561 = vpop.permute.xlu0 %1560
      %1562 = vrot.lane.b32.xlu0 %v1479, 20
      %v1563 = vpop.permute.xlu0 %1562
      %1564 = vrot.lane.b32.xlu0 %v1480, 20
      %v1565 = vpop.permute.xlu0 %1564
      %1566 = vrot.lane.b32.xlu0 %v1481, 20
      %v1567 = vpop.permute.xlu0 %1566
      %1568 = vrot.lane.b32.xlu0 %v1482, 20
      %v1569 = vpop.permute.xlu0 %1568
      %1570 = vrot.lane.b32.xlu0 %v1483, 20
      %v1571 = vpop.permute.xlu0 %1570
      %1572 = vrot.lane.b32.xlu0 %v1484, 20
      %v1573 = vpop.permute.xlu0 %1572
      %1574 = vrot.lane.b32.xlu0 %v1485, 20
      %v1575 = vpop.permute.xlu0 %1574
      %1576 = vrot.lane.b32.xlu0 %v1486, 20
      %v1577 = vpop.permute.xlu0 %1576
      %1578 = vrot.lane.b32.xlu0 %v1487, 20
      %v1579 = vpop.permute.xlu0 %1578
      %1580 = vrot.lane.b32.xlu0 %v1488, 20
      %v1581 = vpop.permute.xlu0 %1580
      %1582 = vrot.lane.b32.xlu0 %v1489, 20
      %v1583 = vpop.permute.xlu0 %1582
      %1584 = vrot.lane.b32.xlu0 %v1490, 20
      %v1585 = vpop.permute.xlu0 %1584
      %1586 = vrot.lane.b32.xlu0 %v1491, 20
      %v1587 = vpop.permute.xlu0 %1586
      %1588 = vrot.lane.b32.xlu0 %v1492, 20
      %v1589 = vpop.permute.xlu0 %1588
      %1590 = vrot.lane.b32.xlu0 %v1493, 20
      %v1591 = vpop.permute.xlu0 %1590
      %1592 = vrot.lane.b32.xlu0 %v1494, 20
      %v1593 = vpop.permute.xlu0 %1592
      %1594 = vrot.lane.b32.xlu0 %v1495, 20
      %v1595 = vpop.permute.xlu0 %1594
      %1596 = vrot.lane.b32.xlu0 %v1496, 20
      %v1597 = vpop.permute.xlu0 %1596
      %1598 = vrot.lane.b32.xlu0 %v1497, 20
      %v1599 = vpop.permute.xlu0 %1598
      %1600 = vrot.lane.b32.xlu0 %v1498, 20
      %v1601 = vpop.permute.xlu0 %1600
      %1602 = vrot.lane.b32.xlu0 %v1499, 20
      %v1603 = vpop.permute.xlu0 %1602
      %1604 = vrot.lane.b32.xlu0 %v1500, 20
      %v1605 = vpop.permute.xlu0 %1604
      %1606 = vrot.lane.b32.xlu0 %v1501, 20
      %v1607 = vpop.permute.xlu0 %1606
      %1608 = vrot.lane.b32.xlu0 %v1502, 20
      %v1609 = vpop.permute.xlu0 %1608
      %1610 = vrot.lane.b32.xlu0 %v1503, 20
      %v1611 = vpop.permute.xlu0 %1610
      %vm1648 = vcmask 195744
      %1649 = vst.msk [vmem:[#allocation3] sm:$0xff] %vm1648, %v1541
      %1650 = vst.msk [vmem:[#allocation3 + $0x8] sm:$0xff] %vm1648, %v1543
      %1651 = vst.msk [vmem:[#allocation3 + $0x10] sm:$0xff] %vm1648, %v1545
      %1652 = vst.msk [vmem:[#allocation3 + $0x18] sm:$0xff] %vm1648, %v1547
      %1653 = vst.msk [vmem:[#allocation3 + $0x20] sm:$0xff] %vm1648, %v1549
      %1654 = vst.msk [vmem:[#allocation3 + $0x28] sm:$0xff] %vm1648, %v1551
      %1655 = vst.msk [vmem:[#allocation3 + $0x30] sm:$0xff] %vm1648, %v1553
      %1656 = vst.msk [vmem:[#allocation3 + $0x38] sm:$0xff] %vm1648, %v1555
      %1657 = vst.msk [vmem:[#allocation3 + $0x40] sm:$0xff] %vm1648, %v1557
      %1658 = vst.msk [vmem:[#allocation3 + $0x48] sm:$0xff] %vm1648, %v1559
      %1659 = vst.msk [vmem:[#allocation3 + $0x50] sm:$0xff] %vm1648, %v1561
      %1660 = vst.msk [vmem:[#allocation3 + $0x58] sm:$0xff] %vm1648, %v1563
      %1661 = vst.msk [vmem:[#allocation3 + $0x60] sm:$0xff] %vm1648, %v1565
      %1662 = vst.msk [vmem:[#allocation3 + $0x68] sm:$0xff] %vm1648, %v1567
      %1663 = vst.msk [vmem:[#allocation3 + $0x70] sm:$0xff] %vm1648, %v1569
      %1664 = vst.msk [vmem:[#allocation3 + $0x78] sm:$0xff] %vm1648, %v1571
      %1665 = vst.msk [vmem:[#allocation3 + $0x80] sm:$0xff] %vm1648, %v1573
      %1666 = vst.msk [vmem:[#allocation3 + $0x88] sm:$0xff] %vm1648, %v1575
      %1667 = vst.msk [vmem:[#allocation3 + $0x90] sm:$0xff] %vm1648, %v1577
      %1668 = vst.msk [vmem:[#allocation3 + $0x98] sm:$0xff] %vm1648, %v1579
      %1669 = vst.msk [vmem:[#allocation3 + $0xa0] sm:$0xff] %vm1648, %v1581
      %1670 = vst.msk [vmem:[#allocation3 + $0xa8] sm:$0xff] %vm1648, %v1583
      %1671 = vst.msk [vmem:[#allocation3 + $0xb0] sm:$0xff] %vm1648, %v1585
      %1672 = vst.msk [vmem:[#allocation3 + $0xb8] sm:$0xff] %vm1648, %v1587
      %1673 = vst.msk [vmem:[#allocation3 + $0xc0] sm:$0xff] %vm1648, %v1589
      %1674 = vst.msk [vmem:[#allocation3 + $0xc8] sm:$0xff] %vm1648, %v1591
      %1675 = vst.msk [vmem:[#allocation3 + $0xd0] sm:$0xff] %vm1648, %v1593
      %1676 = vst.msk [vmem:[#allocation3 + $0xd8] sm:$0xff] %vm1648, %v1595
      %1677 = vst.msk [vmem:[#allocation3 + $0xe0] sm:$0xff] %vm1648, %v1597
      %1678 = vst.msk [vmem:[#allocation3 + $0xe8] sm:$0xff] %vm1648, %v1599
      %1679 = vst.msk [vmem:[#allocation3 + $0xf0] sm:$0xff] %vm1648, %v1601
      %1680 = vst.msk [vmem:[#allocation3 + $0xf8] sm:$0xff] %vm1648, %v1603
      %1681 = vst.msk [vmem:[#allocation3 + $0x100] sm:$0xff] %vm1648, %v1605
      %1682 = vst.msk [vmem:[#allocation3 + $0x108] sm:$0xff] %vm1648, %v1607
      %1683 = vst.msk [vmem:[#allocation3 + $0x110] sm:$0xff] %vm1648, %v1609
      %1684 = vst.msk [vmem:[#allocation3 + $0x118] sm:$0xff] %vm1648, %v1611
      %v1685 = vld [vmem:[#allocation2 + $0x24] sm:$0xff]
      %v1686 = vld [vmem:[#allocation2 + $0x2c] sm:$0xff]
      %v1687 = vld [vmem:[#allocation2 + $0x34] sm:$0xff]
      %v1688 = vld [vmem:[#allocation2 + $0x3c] sm:$0xff]
      %v1689 = vld [vmem:[#allocation2 + $0x44] sm:$0xff]
      %v1690 = vld [vmem:[#allocation2 + $0x4c] sm:$0xff]
      %v1691 = vld [vmem:[#allocation2 + $0x54] sm:$0xff]
      %v1692 = vld [vmem:[#allocation2 + $0x5c] sm:$0xff]
      %v1693 = vld [vmem:[#allocation2 + $0x64] sm:$0xff]
      %v1694 = vld [vmem:[#allocation2 + $0x6c] sm:$0xff]
      %v1695 = vld [vmem:[#allocation2 + $0x74] sm:$0xff]
      %v1696 = vld [vmem:[#allocation2 + $0x7c] sm:$0xff]
      %v1697 = vld [vmem:[#allocation2 + $0x84] sm:$0xff]
      %v1698 = vld [vmem:[#allocation2 + $0x8c] sm:$0xff]
      %v1699 = vld [vmem:[#allocation2 + $0x94] sm:$0xff]
      %v1700 = vld [vmem:[#allocation2 + $0x9c] sm:$0xff]
      %v1701 = vld [vmem:[#allocation2 + $0xa4] sm:$0xff]
      %v1702 = vld [vmem:[#allocation2 + $0xac] sm:$0xff]
      %v1703 = vld [vmem:[#allocation2 + $0xb4] sm:$0xff]
      %v1704 = vld [vmem:[#allocation2 + $0xbc] sm:$0xff]
      %v1705 = vld [vmem:[#allocation2 + $0xc4] sm:$0xff]
      %v1706 = vld [vmem:[#allocation2 + $0xcc] sm:$0xff]
      %v1707 = vld [vmem:[#allocation2 + $0xd4] sm:$0xff]
      %v1708 = vld [vmem:[#allocation2 + $0xdc] sm:$0xff]
      %v1709 = vld [vmem:[#allocation2 + $0xe4] sm:$0xff]
      %v1710 = vld [vmem:[#allocation2 + $0xec] sm:$0xff]
      %v1711 = vld [vmem:[#allocation2 + $0xf4] sm:$0xff]
      %v1712 = vld [vmem:[#allocation2 + $0xfc] sm:$0xff]
      %v1713 = vld [vmem:[#allocation2 + $0x104] sm:$0xff]
      %v1714 = vld [vmem:[#allocation2 + $0x10c] sm:$0xff]
      %v1715 = vld [vmem:[#allocation2 + $0x114] sm:$0xff]
      %v1716 = vld [vmem:[#allocation2 + $0x11c] sm:$0xff]
      %v1717 = vld [vmem:[#allocation2 + $0x124] sm:$0xff]
      %v1718 = vld [vmem:[#allocation2 + $0x12c] sm:$0xff]
      %v1719 = vld [vmem:[#allocation2 + $0x134] sm:$0xff]
      %v1720 = vld [vmem:[#allocation2 + $0x13c] sm:$0xff]
      %1757 = vrot.lane.b32.xlu0 %v1685, 24
      %v1758 = vpop.permute.xlu0 %1757
      %1759 = vrot.lane.b32.xlu0 %v1686, 24
      %v1760 = vpop.permute.xlu0 %1759
      %1761 = vrot.lane.b32.xlu0 %v1687, 24
      %v1762 = vpop.permute.xlu0 %1761
      %1763 = vrot.lane.b32.xlu0 %v1688, 24
      %v1764 = vpop.permute.xlu0 %1763
      %1765 = vrot.lane.b32.xlu0 %v1689, 24
      %v1766 = vpop.permute.xlu0 %1765
      %1767 = vrot.lane.b32.xlu0 %v1690, 24
      %v1768 = vpop.permute.xlu0 %1767
      %1769 = vrot.lane.b32.xlu0 %v1691, 24
      %v1770 = vpop.permute.xlu0 %1769
      %1771 = vrot.lane.b32.xlu0 %v1692, 24
      %v1772 = vpop.permute.xlu0 %1771
      %1773 = vrot.lane.b32.xlu0 %v1693, 24
      %v1774 = vpop.permute.xlu0 %1773
      %1775 = vrot.lane.b32.xlu0 %v1694, 24
      %v1776 = vpop.permute.xlu0 %1775
      %1777 = vrot.lane.b32.xlu0 %v1695, 24
      %v1778 = vpop.permute.xlu0 %1777
      %1779 = vrot.lane.b32.xlu0 %v1696, 24
      %v1780 = vpop.permute.xlu0 %1779
      %1781 = vrot.lane.b32.xlu0 %v1697, 24
      %v1782 = vpop.permute.xlu0 %1781
      %1783 = vrot.lane.b32.xlu0 %v1698, 24
      %v1784 = vpop.permute.xlu0 %1783
      %1785 = vrot.lane.b32.xlu0 %v1699, 24
      %v1786 = vpop.permute.xlu0 %1785
      %1787 = vrot.lane.b32.xlu0 %v1700, 24
      %v1788 = vpop.permute.xlu0 %1787
      %1789 = vrot.lane.b32.xlu0 %v1701, 24
      %v1790 = vpop.permute.xlu0 %1789
      %1791 = vrot.lane.b32.xlu0 %v1702, 24
      %v1792 = vpop.permute.xlu0 %1791
      %1793 = vrot.lane.b32.xlu0 %v1703, 24
      %v1794 = vpop.permute.xlu0 %1793
      %1795 = vrot.lane.b32.xlu0 %v1704, 24
      %v1796 = vpop.permute.xlu0 %1795
      %1797 = vrot.lane.b32.xlu0 %v1705, 24
      %v1798 = vpop.permute.xlu0 %1797
      %1799 = vrot.lane.b32.xlu0 %v1706, 24
      %v1800 = vpop.permute.xlu0 %1799
      %1801 = vrot.lane.b32.xlu0 %v1707, 24
      %v1802 = vpop.permute.xlu0 %1801
      %1803 = vrot.lane.b32.xlu0 %v1708, 24
      %v1804 = vpop.permute.xlu0 %1803
      %1805 = vrot.lane.b32.xlu0 %v1709, 24
      %v1806 = vpop.permute.xlu0 %1805
      %1807 = vrot.lane.b32.xlu0 %v1710, 24
      %v1808 = vpop.permute.xlu0 %1807
      %1809 = vrot.lane.b32.xlu0 %v1711, 24
      %v1810 = vpop.permute.xlu0 %1809
      %1811 = vrot.lane.b32.xlu0 %v1712, 24
      %v1812 = vpop.permute.xlu0 %1811
      %1813 = vrot.lane.b32.xlu0 %v1713, 24
      %v1814 = vpop.permute.xlu0 %1813
      %1815 = vrot.lane.b32.xlu0 %v1714, 24
      %v1816 = vpop.permute.xlu0 %1815
      %1817 = vrot.lane.b32.xlu0 %v1715, 24
      %v1818 = vpop.permute.xlu0 %1817
      %1819 = vrot.lane.b32.xlu0 %v1716, 24
      %v1820 = vpop.permute.xlu0 %1819
      %1821 = vrot.lane.b32.xlu0 %v1717, 24
      %v1822 = vpop.permute.xlu0 %1821
      %1823 = vrot.lane.b32.xlu0 %v1718, 24
      %v1824 = vpop.permute.xlu0 %1823
      %1825 = vrot.lane.b32.xlu0 %v1719, 24
      %v1826 = vpop.permute.xlu0 %1825
      %1827 = vrot.lane.b32.xlu0 %v1720, 24
      %v1828 = vpop.permute.xlu0 %1827
      %vm1865 = vcmask 228544
      %1866 = vst.msk [vmem:[#allocation3] sm:$0xff] %vm1865, %v1758
      %1867 = vst.msk [vmem:[#allocation3 + $0x8] sm:$0xff] %vm1865, %v1760
      %1868 = vst.msk [vmem:[#allocation3 + $0x10] sm:$0xff] %vm1865, %v1762
      %1869 = vst.msk [vmem:[#allocation3 + $0x18] sm:$0xff] %vm1865, %v1764
      %1870 = vst.msk [vmem:[#allocation3 + $0x20] sm:$0xff] %vm1865, %v1766
      %1871 = vst.msk [vmem:[#allocation3 + $0x28] sm:$0xff] %vm1865, %v1768
      %1872 = vst.msk [vmem:[#allocation3 + $0x30] sm:$0xff] %vm1865, %v1770
      %1873 = vst.msk [vmem:[#allocation3 + $0x38] sm:$0xff] %vm1865, %v1772
      %1874 = vst.msk [vmem:[#allocation3 + $0x40] sm:$0xff] %vm1865, %v1774
      %1875 = vst.msk [vmem:[#allocation3 + $0x48] sm:$0xff] %vm1865, %v1776
      %1876 = vst.msk [vmem:[#allocation3 + $0x50] sm:$0xff] %vm1865, %v1778
      %1877 = vst.msk [vmem:[#allocation3 + $0x58] sm:$0xff] %vm1865, %v1780
      %1878 = vst.msk [vmem:[#allocation3 + $0x60] sm:$0xff] %vm1865, %v1782
      %1879 = vst.msk [vmem:[#allocation3 + $0x68] sm:$0xff] %vm1865, %v1784
      %1880 = vst.msk [vmem:[#allocation3 + $0x70] sm:$0xff] %vm1865, %v1786
      %1881 = vst.msk [vmem:[#allocation3 + $0x78] sm:$0xff] %vm1865, %v1788
      %1882 = vst.msk [vmem:[#allocation3 + $0x80] sm:$0xff] %vm1865, %v1790
      %1883 = vst.msk [vmem:[#allocation3 + $0x88] sm:$0xff] %vm1865, %v1792
      %1884 = vst.msk [vmem:[#allocation3 + $0x90] sm:$0xff] %vm1865, %v1794
      %1885 = vst.msk [vmem:[#allocation3 + $0x98] sm:$0xff] %vm1865, %v1796
      %1886 = vst.msk [vmem:[#allocation3 + $0xa0] sm:$0xff] %vm1865, %v1798
      %1887 = vst.msk [vmem:[#allocation3 + $0xa8] sm:$0xff] %vm1865, %v1800
      %1888 = vst.msk [vmem:[#allocation3 + $0xb0] sm:$0xff] %vm1865, %v1802
      %1889 = vst.msk [vmem:[#allocation3 + $0xb8] sm:$0xff] %vm1865, %v1804
      %1890 = vst.msk [vmem:[#allocation3 + $0xc0] sm:$0xff] %vm1865, %v1806
      %1891 = vst.msk [vmem:[#allocation3 + $0xc8] sm:$0xff] %vm1865, %v1808
      %1892 = vst.msk [vmem:[#allocation3 + $0xd0] sm:$0xff] %vm1865, %v1810
      %1893 = vst.msk [vmem:[#allocation3 + $0xd8] sm:$0xff] %vm1865, %v1812
      %1894 = vst.msk [vmem:[#allocation3 + $0xe0] sm:$0xff] %vm1865, %v1814
      %1895 = vst.msk [vmem:[#allocation3 + $0xe8] sm:$0xff] %vm1865, %v1816
      %1896 = vst.msk [vmem:[#allocation3 + $0xf0] sm:$0xff] %vm1865, %v1818
      %1897 = vst.msk [vmem:[#allocation3 + $0xf8] sm:$0xff] %vm1865, %v1820
      %1898 = vst.msk [vmem:[#allocation3 + $0x100] sm:$0xff] %vm1865, %v1822
      %1899 = vst.msk [vmem:[#allocation3 + $0x108] sm:$0xff] %vm1865, %v1824
      %1900 = vst.msk [vmem:[#allocation3 + $0x110] sm:$0xff] %vm1865, %v1826
      %1901 = vst.msk [vmem:[#allocation3 + $0x118] sm:$0xff] %vm1865, %v1828
      %v1902 = vld [vmem:[#allocation2 + $0x25] sm:$0xff]
      %v1903 = vld [vmem:[#allocation2 + $0x2d] sm:$0xff]
      %v1904 = vld [vmem:[#allocation2 + $0x35] sm:$0xff]
      %v1905 = vld [vmem:[#allocation2 + $0x3d] sm:$0xff]
      %v1906 = vld [vmem:[#allocation2 + $0x45] sm:$0xff]
      %v1907 = vld [vmem:[#allocation2 + $0x4d] sm:$0xff]
      %v1908 = vld [vmem:[#allocation2 + $0x55] sm:$0xff]
      %v1909 = vld [vmem:[#allocation2 + $0x5d] sm:$0xff]
      %v1910 = vld [vmem:[#allocation2 + $0x65] sm:$0xff]
      %v1911 = vld [vmem:[#allocation2 + $0x6d] sm:$0xff]
      %v1912 = vld [vmem:[#allocation2 + $0x75] sm:$0xff]
      %v1913 = vld [vmem:[#allocation2 + $0x7d] sm:$0xff]
      %v1914 = vld [vmem:[#allocation2 + $0x85] sm:$0xff]
      %v1915 = vld [vmem:[#allocation2 + $0x8d] sm:$0xff]
      %v1916 = vld [vmem:[#allocation2 + $0x95] sm:$0xff]
      %v1917 = vld [vmem:[#allocation2 + $0x9d] sm:$0xff]
      %v1918 = vld [vmem:[#allocation2 + $0xa5] sm:$0xff]
      %v1919 = vld [vmem:[#allocation2 + $0xad] sm:$0xff]
      %v1920 = vld [vmem:[#allocation2 + $0xb5] sm:$0xff]
      %v1921 = vld [vmem:[#allocation2 + $0xbd] sm:$0xff]
      %v1922 = vld [vmem:[#allocation2 + $0xc5] sm:$0xff]
      %v1923 = vld [vmem:[#allocation2 + $0xcd] sm:$0xff]
      %v1924 = vld [vmem:[#allocation2 + $0xd5] sm:$0xff]
      %v1925 = vld [vmem:[#allocation2 + $0xdd] sm:$0xff]
      %v1926 = vld [vmem:[#allocation2 + $0xe5] sm:$0xff]
      %v1927 = vld [vmem:[#allocation2 + $0xed] sm:$0xff]
      %v1928 = vld [vmem:[#allocation2 + $0xf5] sm:$0xff]
      %v1929 = vld [vmem:[#allocation2 + $0xfd] sm:$0xff]
      %v1930 = vld [vmem:[#allocation2 + $0x105] sm:$0xff]
      %v1931 = vld [vmem:[#allocation2 + $0x10d] sm:$0xff]
      %v1932 = vld [vmem:[#allocation2 + $0x115] sm:$0xff]
      %v1933 = vld [vmem:[#allocation2 + $0x11d] sm:$0xff]
      %v1934 = vld [vmem:[#allocation2 + $0x125] sm:$0xff]
      %v1935 = vld [vmem:[#allocation2 + $0x12d] sm:$0xff]
      %v1936 = vld [vmem:[#allocation2 + $0x135] sm:$0xff]
      %v1937 = vld [vmem:[#allocation2 + $0x13d] sm:$0xff]
      %1974 = vrot.lane.b32.xlu0 %v1902, 28
      %v1975 = vpop.permute.xlu0 %1974
      %1976 = vrot.lane.b32.xlu0 %v1903, 28
      %v1977 = vpop.permute.xlu0 %1976
      %1978 = vrot.lane.b32.xlu0 %v1904, 28
      %v1979 = vpop.permute.xlu0 %1978
      %1980 = vrot.lane.b32.xlu0 %v1905, 28
      %v1981 = vpop.permute.xlu0 %1980
      %1982 = vrot.lane.b32.xlu0 %v1906, 28
      %v1983 = vpop.permute.xlu0 %1982
      %1984 = vrot.lane.b32.xlu0 %v1907, 28
      %v1985 = vpop.permute.xlu0 %1984
      %1986 = vrot.lane.b32.xlu0 %v1908, 28
      %v1987 = vpop.permute.xlu0 %1986
      %1988 = vrot.lane.b32.xlu0 %v1909, 28
      %v1989 = vpop.permute.xlu0 %1988
      %1990 = vrot.lane.b32.xlu0 %v1910, 28
      %v1991 = vpop.permute.xlu0 %1990
      %1992 = vrot.lane.b32.xlu0 %v1911, 28
      %v1993 = vpop.permute.xlu0 %1992
      %1994 = vrot.lane.b32.xlu0 %v1912, 28
      %v1995 = vpop.permute.xlu0 %1994
      %1996 = vrot.lane.b32.xlu0 %v1913, 28
      %v1997 = vpop.permute.xlu0 %1996
      %1998 = vrot.lane.b32.xlu0 %v1914, 28
      %v1999 = vpop.permute.xlu0 %1998
      %2000 = vrot.lane.b32.xlu0 %v1915, 28
      %v2001 = vpop.permute.xlu0 %2000
      %2002 = vrot.lane.b32.xlu0 %v1916, 28
      %v2003 = vpop.permute.xlu0 %2002
      %2004 = vrot.lane.b32.xlu0 %v1917, 28
      %v2005 = vpop.permute.xlu0 %2004
      %2006 = vrot.lane.b32.xlu0 %v1918, 28
      %v2007 = vpop.permute.xlu0 %2006
      %2008 = vrot.lane.b32.xlu0 %v1919, 28
      %v2009 = vpop.permute.xlu0 %2008
      %2010 = vrot.lane.b32.xlu0 %v1920, 28
      %v2011 = vpop.permute.xlu0 %2010
      %2012 = vrot.lane.b32.xlu0 %v1921, 28
      %v2013 = vpop.permute.xlu0 %2012
      %2014 = vrot.lane.b32.xlu0 %v1922, 28
      %v2015 = vpop.permute.xlu0 %2014
      %2016 = vrot.lane.b32.xlu0 %v1923, 28
      %v2017 = vpop.permute.xlu0 %2016
      %2018 = vrot.lane.b32.xlu0 %v1924, 28
      %v2019 = vpop.permute.xlu0 %2018
      %2020 = vrot.lane.b32.xlu0 %v1925, 28
      %v2021 = vpop.permute.xlu0 %2020
      %2022 = vrot.lane.b32.xlu0 %v1926, 28
      %v2023 = vpop.permute.xlu0 %2022
      %2024 = vrot.lane.b32.xlu0 %v1927, 28
      %v2025 = vpop.permute.xlu0 %2024
      %2026 = vrot.lane.b32.xlu0 %v1928, 28
      %v2027 = vpop.permute.xlu0 %2026
      %2028 = vrot.lane.b32.xlu0 %v1929, 28
      %v2029 = vpop.permute.xlu0 %2028
      %2030 = vrot.lane.b32.xlu0 %v1930, 28
      %v2031 = vpop.permute.xlu0 %2030
      %2032 = vrot.lane.b32.xlu0 %v1931, 28
      %v2033 = vpop.permute.xlu0 %2032
      %2034 = vrot.lane.b32.xlu0 %v1932, 28
      %v2035 = vpop.permute.xlu0 %2034
      %2036 = vrot.lane.b32.xlu0 %v1933, 28
      %v2037 = vpop.permute.xlu0 %2036
      %2038 = vrot.lane.b32.xlu0 %v1934, 28
      %v2039 = vpop.permute.xlu0 %2038
      %2040 = vrot.lane.b32.xlu0 %v1935, 28
      %v2041 = vpop.permute.xlu0 %2040
      %2042 = vrot.lane.b32.xlu0 %v1936, 28
      %v2043 = vpop.permute.xlu0 %2042
      %2044 = vrot.lane.b32.xlu0 %v1937, 28
      %v2045 = vpop.permute.xlu0 %2044
      %vm2082 = vcmask 261344
      %2083 = vst.msk [vmem:[#allocation3] sm:$0xff] %vm2082, %v1975
      %2084 = vst.msk [vmem:[#allocation3 + $0x8] sm:$0xff] %vm2082, %v1977
      %2085 = vst.msk [vmem:[#allocation3 + $0x10] sm:$0xff] %vm2082, %v1979
      %2086 = vst.msk [vmem:[#allocation3 + $0x18] sm:$0xff] %vm2082, %v1981
      %2087 = vst.msk [vmem:[#allocation3 + $0x20] sm:$0xff] %vm2082, %v1983
      %2088 = vst.msk [vmem:[#allocation3 + $0x28] sm:$0xff] %vm2082, %v1985
      %2089 = vst.msk [vmem:[#allocation3 + $0x30] sm:$0xff] %vm2082, %v1987
      %2090 = vst.msk [vmem:[#allocation3 + $0x38] sm:$0xff] %vm2082, %v1989
      %2091 = vst.msk [vmem:[#allocation3 + $0x40] sm:$0xff] %vm2082, %v1991
      %2092 = vst.msk [vmem:[#allocation3 + $0x48] sm:$0xff] %vm2082, %v1993
      %2093 = vst.msk [vmem:[#allocation3 + $0x50] sm:$0xff] %vm2082, %v1995
      %2094 = vst.msk [vmem:[#allocation3 + $0x58] sm:$0xff] %vm2082, %v1997
      %2095 = vst.msk [vmem:[#allocation3 + $0x60] sm:$0xff] %vm2082, %v1999
      %2096 = vst.msk [vmem:[#allocation3 + $0x68] sm:$0xff] %vm2082, %v2001
      %2097 = vst.msk [vmem:[#allocation3 + $0x70] sm:$0xff] %vm2082, %v2003
      %2098 = vst.msk [vmem:[#allocation3 + $0x78] sm:$0xff] %vm2082, %v2005
      %2099 = vst.msk [vmem:[#allocation3 + $0x80] sm:$0xff] %vm2082, %v2007
      %2100 = vst.msk [vmem:[#allocation3 + $0x88] sm:$0xff] %vm2082, %v2009
      %2101 = vst.msk [vmem:[#allocation3 + $0x90] sm:$0xff] %vm2082, %v2011
      %2102 = vst.msk [vmem:[#allocation3 + $0x98] sm:$0xff] %vm2082, %v2013
      %2103 = vst.msk [vmem:[#allocation3 + $0xa0] sm:$0xff] %vm2082, %v2015
      %2104 = vst.msk [vmem:[#allocation3 + $0xa8] sm:$0xff] %vm2082, %v2017
      %2105 = vst.msk [vmem:[#allocation3 + $0xb0] sm:$0xff] %vm2082, %v2019
      %2106 = vst.msk [vmem:[#allocation3 + $0xb8] sm:$0xff] %vm2082, %v2021
      %2107 = vst.msk [vmem:[#allocation3 + $0xc0] sm:$0xff] %vm2082, %v2023
      %2108 = vst.msk [vmem:[#allocation3 + $0xc8] sm:$0xff] %vm2082, %v2025
      %2109 = vst.msk [vmem:[#allocation3 + $0xd0] sm:$0xff] %vm2082, %v2027
      %2110 = vst.msk [vmem:[#allocation3 + $0xd8] sm:$0xff] %vm2082, %v2029
      %2111 = vst.msk [vmem:[#allocation3 + $0xe0] sm:$0xff] %vm2082, %v2031
      %2112 = vst.msk [vmem:[#allocation3 + $0xe8] sm:$0xff] %vm2082, %v2033
      %2113 = vst.msk [vmem:[#allocation3 + $0xf0] sm:$0xff] %vm2082, %v2035
      %2114 = vst.msk [vmem:[#allocation3 + $0xf8] sm:$0xff] %vm2082, %v2037
      %2115 = vst.msk [vmem:[#allocation3 + $0x100] sm:$0xff] %vm2082, %v2039
      %2116 = vst.msk [vmem:[#allocation3 + $0x108] sm:$0xff] %vm2082, %v2041
      %2117 = vst.msk [vmem:[#allocation3 + $0x110] sm:$0xff] %vm2082, %v2043
      %2118 = vst.msk [vmem:[#allocation3 + $0x118] sm:$0xff] %vm2082, %v2045
      %v2119 = vld [vmem:[#allocation2 + $0x26] sm:$0xff]
      %v2120 = vld [vmem:[#allocation2 + $0x2e] sm:$0xff]
      %v2121 = vld [vmem:[#allocation2 + $0x36] sm:$0xff]
      %v2122 = vld [vmem:[#allocation2 + $0x3e] sm:$0xff]
      %v2123 = vld [vmem:[#allocation2 + $0x46] sm:$0xff]
      %v2124 = vld [vmem:[#allocation2 + $0x4e] sm:$0xff]
      %v2125 = vld [vmem:[#allocation2 + $0x56] sm:$0xff]
      %v2126 = vld [vmem:[#allocation2 + $0x5e] sm:$0xff]
      %v2127 = vld [vmem:[#allocation2 + $0x66] sm:$0xff]
      %v2128 = vld [vmem:[#allocation2 + $0x6e] sm:$0xff]
      %v2129 = vld [vmem:[#allocation2 + $0x76] sm:$0xff]
      %v2130 = vld [vmem:[#allocation2 + $0x7e] sm:$0xff]
      %v2131 = vld [vmem:[#allocation2 + $0x86] sm:$0xff]
      %v2132 = vld [vmem:[#allocation2 + $0x8e] sm:$0xff]
      %v2133 = vld [vmem:[#allocation2 + $0x96] sm:$0xff]
      %v2134 = vld [vmem:[#allocation2 + $0x9e] sm:$0xff]
      %v2135 = vld [vmem:[#allocation2 + $0xa6] sm:$0xff]
      %v2136 = vld [vmem:[#allocation2 + $0xae] sm:$0xff]
      %v2137 = vld [vmem:[#allocation2 + $0xb6] sm:$0xff]
      %v2138 = vld [vmem:[#allocation2 + $0xbe] sm:$0xff]
      %v2139 = vld [vmem:[#allocation2 + $0xc6] sm:$0xff]
      %v2140 = vld [vmem:[#allocation2 + $0xce] sm:$0xff]
      %v2141 = vld [vmem:[#allocation2 + $0xd6] sm:$0xff]
      %v2142 = vld [vmem:[#allocation2 + $0xde] sm:$0xff]
      %v2143 = vld [vmem:[#allocation2 + $0xe6] sm:$0xff]
      %v2144 = vld [vmem:[#allocation2 + $0xee] sm:$0xff]
      %v2145 = vld [vmem:[#allocation2 + $0xf6] sm:$0xff]
      %v2146 = vld [vmem:[#allocation2 + $0xfe] sm:$0xff]
      %v2147 = vld [vmem:[#allocation2 + $0x106] sm:$0xff]
      %v2148 = vld [vmem:[#allocation2 + $0x10e] sm:$0xff]
      %v2149 = vld [vmem:[#allocation2 + $0x116] sm:$0xff]
      %v2150 = vld [vmem:[#allocation2 + $0x11e] sm:$0xff]
      %v2151 = vld [vmem:[#allocation2 + $0x126] sm:$0xff]
      %v2152 = vld [vmem:[#allocation2 + $0x12e] sm:$0xff]
      %v2153 = vld [vmem:[#allocation2 + $0x136] sm:$0xff]
      %v2154 = vld [vmem:[#allocation2 + $0x13e] sm:$0xff]
      %2191 = vrot.lane.b32.xlu0 %v2119, 32
      %v2192 = vpop.permute.xlu0 %2191
      %2193 = vrot.lane.b32.xlu0 %v2120, 32
      %v2194 = vpop.permute.xlu0 %2193
      %2195 = vrot.lane.b32.xlu0 %v2121, 32
      %v2196 = vpop.permute.xlu0 %2195
      %2197 = vrot.lane.b32.xlu0 %v2122, 32
      %v2198 = vpop.permute.xlu0 %2197
      %2199 = vrot.lane.b32.xlu0 %v2123, 32
      %v2200 = vpop.permute.xlu0 %2199
      %2201 = vrot.lane.b32.xlu0 %v2124, 32
      %v2202 = vpop.permute.xlu0 %2201
      %2203 = vrot.lane.b32.xlu0 %v2125, 32
      %v2204 = vpop.permute.xlu0 %2203
      %2205 = vrot.lane.b32.xlu0 %v2126, 32
      %v2206 = vpop.permute.xlu0 %2205
      %2207 = vrot.lane.b32.xlu0 %v2127, 32
      %v2208 = vpop.permute.xlu0 %2207
      %2209 = vrot.lane.b32.xlu0 %v2128, 32
      %v2210 = vpop.permute.xlu0 %2209
      %2211 = vrot.lane.b32.xlu0 %v2129, 32
      %v2212 = vpop.permute.xlu0 %2211
      %2213 = vrot.lane.b32.xlu0 %v2130, 32
      %v2214 = vpop.permute.xlu0 %2213
      %2215 = vrot.lane.b32.xlu0 %v2131, 32
      %v2216 = vpop.permute.xlu0 %2215
      %2217 = vrot.lane.b32.xlu0 %v2132, 32
      %v2218 = vpop.permute.xlu0 %2217
      %2219 = vrot.lane.b32.xlu0 %v2133, 32
      %v2220 = vpop.permute.xlu0 %2219
      %2221 = vrot.lane.b32.xlu0 %v2134, 32
      %v2222 = vpop.permute.xlu0 %2221
      %2223 = vrot.lane.b32.xlu0 %v2135, 32
      %v2224 = vpop.permute.xlu0 %2223
      %2225 = vrot.lane.b32.xlu0 %v2136, 32
      %v2226 = vpop.permute.xlu0 %2225
      %2227 = vrot.lane.b32.xlu0 %v2137, 32
      %v2228 = vpop.permute.xlu0 %2227
      %2229 = vrot.lane.b32.xlu0 %v2138, 32
      %v2230 = vpop.permute.xlu0 %2229
      %2231 = vrot.lane.b32.xlu0 %v2139, 32
      %v2232 = vpop.permute.xlu0 %2231
      %2233 = vrot.lane.b32.xlu0 %v2140, 32
      %v2234 = vpop.permute.xlu0 %2233
      %2235 = vrot.lane.b32.xlu0 %v2141, 32
      %v2236 = vpop.permute.xlu0 %2235
      %2237 = vrot.lane.b32.xlu0 %v2142, 32
      %v2238 = vpop.permute.xlu0 %2237
      %2239 = vrot.lane.b32.xlu0 %v2143, 32
      %v2240 = vpop.permute.xlu0 %2239
      %2241 = vrot.lane.b32.xlu0 %v2144, 32
      %v2242 = vpop.permute.xlu0 %2241
      %2243 = vrot.lane.b32.xlu0 %v2145, 32
      %v2244 = vpop.permute.xlu0 %2243
      %2245 = vrot.lane.b32.xlu0 %v2146, 32
      %v2246 = vpop.permute.xlu0 %2245
      %2247 = vrot.lane.b32.xlu0 %v2147, 32
      %v2248 = vpop.permute.xlu0 %2247
      %2249 = vrot.lane.b32.xlu0 %v2148, 32
      %v2250 = vpop.permute.xlu0 %2249
      %2251 = vrot.lane.b32.xlu0 %v2149, 32
      %v2252 = vpop.permute.xlu0 %2251
      %2253 = vrot.lane.b32.xlu0 %v2150, 32
      %v2254 = vpop.permute.xlu0 %2253
      %2255 = vrot.lane.b32.xlu0 %v2151, 32
      %v2256 = vpop.permute.xlu0 %2255
      %2257 = vrot.lane.b32.xlu0 %v2152, 32
      %v2258 = vpop.permute.xlu0 %2257
      %2259 = vrot.lane.b32.xlu0 %v2153, 32
      %v2260 = vpop.permute.xlu0 %2259
      %2261 = vrot.lane.b32.xlu0 %v2154, 32
      %v2262 = vpop.permute.xlu0 %2261
      %vm2299 = vcmask 294144
      %2300 = vst.msk [vmem:[#allocation3] sm:$0xff] %vm2299, %v2192
      %2301 = vst.msk [vmem:[#allocation3 + $0x8] sm:$0xff] %vm2299, %v2194
      %2302 = vst.msk [vmem:[#allocation3 + $0x10] sm:$0xff] %vm2299, %v2196
      %2303 = vst.msk [vmem:[#allocation3 + $0x18] sm:$0xff] %vm2299, %v2198
      %2304 = vst.msk [vmem:[#allocation3 + $0x20] sm:$0xff] %vm2299, %v2200
      %2305 = vst.msk [vmem:[#allocation3 + $0x28] sm:$0xff] %vm2299, %v2202
      %2306 = vst.msk [vmem:[#allocation3 + $0x30] sm:$0xff] %vm2299, %v2204
      %2307 = vst.msk [vmem:[#allocation3 + $0x38] sm:$0xff] %vm2299, %v2206
      %2308 = vst.msk [vmem:[#allocation3 + $0x40] sm:$0xff] %vm2299, %v2208
      %2309 = vst.msk [vmem:[#allocation3 + $0x48] sm:$0xff] %vm2299, %v2210
      %2310 = vst.msk [vmem:[#allocation3 + $0x50] sm:$0xff] %vm2299, %v2212
      %2311 = vst.msk [vmem:[#allocation3 + $0x58] sm:$0xff] %vm2299, %v2214
      %2312 = vst.msk [vmem:[#allocation3 + $0x60] sm:$0xff] %vm2299, %v2216
      %2313 = vst.msk [vmem:[#allocation3 + $0x68] sm:$0xff] %vm2299, %v2218
      %2314 = vst.msk [vmem:[#allocation3 + $0x70] sm:$0xff] %vm2299, %v2220
      %2315 = vst.msk [vmem:[#allocation3 + $0x78] sm:$0xff] %vm2299, %v2222
      %2316 = vst.msk [vmem:[#allocation3 + $0x80] sm:$0xff] %vm2299, %v2224
      %2317 = vst.msk [vmem:[#allocation3 + $0x88] sm:$0xff] %vm2299, %v2226
      %2318 = vst.msk [vmem:[#allocation3 + $0x90] sm:$0xff] %vm2299, %v2228
      %2319 = vst.msk [vmem:[#allocation3 + $0x98] sm:$0xff] %vm2299, %v2230
      %2320 = vst.msk [vmem:[#allocation3 + $0xa0] sm:$0xff] %vm2299, %v2232
      %2321 = vst.msk [vmem:[#allocation3 + $0xa8] sm:$0xff] %vm2299, %v2234
      %2322 = vst.msk [vmem:[#allocation3 + $0xb0] sm:$0xff] %vm2299, %v2236
      %2323 = vst.msk [vmem:[#allocation3 + $0xb8] sm:$0xff] %vm2299, %v2238
      %2324 = vst.msk [vmem:[#allocation3 + $0xc0] sm:$0xff] %vm2299, %v2240
      %2325 = vst.msk [vmem:[#allocation3 + $0xc8] sm:$0xff] %vm2299, %v2242
      %2326 = vst.msk [vmem:[#allocation3 + $0xd0] sm:$0xff] %vm2299, %v2244
      %2327 = vst.msk [vmem:[#allocation3 + $0xd8] sm:$0xff] %vm2299, %v2246
      %2328 = vst.msk [vmem:[#allocation3 + $0xe0] sm:$0xff] %vm2299, %v2248
      %2329 = vst.msk [vmem:[#allocation3 + $0xe8] sm:$0xff] %vm2299, %v2250
      %2330 = vst.msk [vmem:[#allocation3 + $0xf0] sm:$0xff] %vm2299, %v2252
      %2331 = vst.msk [vmem:[#allocation3 + $0xf8] sm:$0xff] %vm2299, %v2254
      %2332 = vst.msk [vmem:[#allocation3 + $0x100] sm:$0xff] %vm2299, %v2256
      %2333 = vst.msk [vmem:[#allocation3 + $0x108] sm:$0xff] %vm2299, %v2258
      %2334 = vst.msk [vmem:[#allocation3 + $0x110] sm:$0xff] %vm2299, %v2260
      %2335 = vst.msk [vmem:[#allocation3 + $0x118] sm:$0xff] %vm2299, %v2262
      %v2336 = vld [vmem:[#allocation3] sm:$0xff]
      %v2337 = vld [vmem:[#allocation3 + $0x8] sm:$0xff]
      %v2338 = vld [vmem:[#allocation3 + $0x10] sm:$0xff]
      %v2339 = vld [vmem:[#allocation3 + $0x18] sm:$0xff]
      %v2340 = vld [vmem:[#allocation3 + $0x20] sm:$0xff]
      %v2341 = vld [vmem:[#allocation3 + $0x28] sm:$0xff]
      %v2342 = vld [vmem:[#allocation3 + $0x30] sm:$0xff]
      %v2343 = vld [vmem:[#allocation3 + $0x38] sm:$0xff]
      %v2344 = vld [vmem:[#allocation3 + $0x40] sm:$0xff]
      %v2345 = vld [vmem:[#allocation3 + $0x48] sm:$0xff]
      %v2346 = vld [vmem:[#allocation3 + $0x50] sm:$0xff]
      %v2347 = vld [vmem:[#allocation3 + $0x58] sm:$0xff]
      %v2348 = vld [vmem:[#allocation3 + $0x60] sm:$0xff]
      %v2349 = vld [vmem:[#allocation3 + $0x68] sm:$0xff]
      %v2350 = vld [vmem:[#allocation3 + $0x70] sm:$0xff]
      %v2351 = vld [vmem:[#allocation3 + $0x78] sm:$0xff]
      %v2352 = vld [vmem:[#allocation3 + $0x80] sm:$0xff]
      %v2353 = vld [vmem:[#allocation3 + $0x88] sm:$0xff]
      %v2354 = vld [vmem:[#allocation3 + $0x90] sm:$0xff]
      %v2355 = vld [vmem:[#allocation3 + $0x98] sm:$0xff]
      %v2356 = vld [vmem:[#allocation3 + $0xa0] sm:$0xff]
      %v2357 = vld [vmem:[#allocation3 + $0xa8] sm:$0xff]
      %v2358 = vld [vmem:[#allocation3 + $0xb0] sm:$0xff]
      %v2359 = vld [vmem:[#allocation3 + $0xb8] sm:$0xff]
      %v2360 = vld [vmem:[#allocation3 + $0xc0] sm:$0xff]
      %v2361 = vld [vmem:[#allocation3 + $0xc8] sm:$0xff]
      %v2362 = vld [vmem:[#allocation3 + $0xd0] sm:$0xff]
      %v2363 = vld [vmem:[#allocation3 + $0xd8] sm:$0xff]
      %v2364 = vld [vmem:[#allocation3 + $0xe0] sm:$0xff]
      %v2365 = vld [vmem:[#allocation3 + $0xe8] sm:$0xff]
      %v2366 = vld [vmem:[#allocation3 + $0xf0] sm:$0xff]
      %v2367 = vld [vmem:[#allocation3 + $0xf8] sm:$0xff]
      %v2368 = vld [vmem:[#allocation3 + $0x100] sm:$0xff]
      %v2369 = vld [vmem:[#allocation3 + $0x108] sm:$0xff]
      %v2370 = vld [vmem:[#allocation3 + $0x110] sm:$0xff]
      %v2371 = vld [vmem:[#allocation3 + $0x118] sm:$0xff]
      %v2372 = vpack.c.bf16 %v2337, %v2336
      %v2373 = vpack.c.bf16 %v2339, %v2338
      %v2374 = vpack.c.bf16 %v2341, %v2340
      %v2375 = vpack.c.bf16 %v2343, %v2342
      %v2376 = vpack.c.bf16 %v2345, %v2344
      %v2377 = vpack.c.bf16 %v2347, %v2346
      %v2378 = vpack.c.bf16 %v2349, %v2348
      %v2379 = vpack.c.bf16 %v2351, %v2350
      %v2380 = vpack.c.bf16 %v2353, %v2352
      %v2381 = vpack.c.bf16 %v2355, %v2354
      %v2382 = vpack.c.bf16 %v2357, %v2356
      %v2383 = vpack.c.bf16 %v2359, %v2358
      %v2384 = vpack.c.bf16 %v2361, %v2360
      %v2385 = vpack.c.bf16 %v2363, %v2362
      %v2386 = vpack.c.bf16 %v2365, %v2364
      %v2387 = vpack.c.bf16 %v2367, %v2366
      %v2388 = vpack.c.bf16 %v2369, %v2368
      %v2389 = vpack.c.bf16 %v2371, %v2370
      %v2390 = vld [vmem:[%s2] sm:$0xf]
      %v2391 = vld [vmem:[%s2 + $0x4] sm:$0xf]
      %v2392 = vld [vmem:[%s2 + $0x8] sm:$0xf]
      %v2393 = vld [vmem:[%s2 + $0xc] sm:$0xf]
      %v2394 = vld [vmem:[%s2 + $0x10] sm:$0x3]
      %v2395 = vld [vmem:[%s3] sm:$0x1]
      %v2397 = vperm.slane %v2395, 0
      %v2404 = vunpack.c.l.b16 %v2390
      %v2405 = vunpack.c.l.b16 %v2391
      %v2406 = vunpack.c.l.b16 %v2392
      %v2407 = vunpack.c.l.b16 %v2393
      %v2408 = vunpack.c.l.b16 %v2394
      %v2409 = vpack.c.b16 %v2405, %v2404
      %v2410 = vpack.c.b16 %v2407, %v2406
      %v2411 = vpack.c.b16 %v2408, %v2408
      %vm2414 = vcmask 293888
      %v2416 = vsel %vm2414, %v2372, 0
      %v2419 = vsel %vm2414, %v2373, 0
      %v2422 = vsel %vm2414, %v2374, 0
      %v2425 = vsel %vm2414, %v2375, 0
      %v2428 = vsel %vm2414, %v2376, 0
      %v2431 = vsel %vm2414, %v2377, 0
      %v2434 = vsel %vm2414, %v2378, 0
      %v2437 = vsel %vm2414, %v2379, 0
      %v2440 = vsel %vm2414, %v2380, 0
      %v2443 = vsel %vm2414, %v2381, 0
      %v2446 = vsel %vm2414, %v2382, 0
      %v2449 = vsel %vm2414, %v2383, 0
      %v2452 = vsel %vm2414, %v2384, 0
      %v2455 = vsel %vm2414, %v2385, 0
      %v2458 = vsel %vm2414, %v2386, 0
      %v2461 = vsel %vm2414, %v2387, 0
      %v2464 = vsel %vm2414, %v2388, 0
      %v2467 = vsel %vm2414, %v2389, 0
      %vm2469 = vcmask 1041408
      %v2471 = vsel %vm2469, %v2411, 0
      %2473 = vmatpush.bf16.msra.mxu0 0
      %2474 = vmatpush.bf16.msra.mxu0 0
      %2475 = vmatpush.bf16.msra.mxu0 0
      %2476 = vmatpush.bf16.msra.mxu0 0
      %2477 = vmatpush.bf16.msra.mxu0 0
      %2478 = vmatpush.bf16.msra.mxu0 %v2471
      %2479 = vmatpush.bf16.msra.mxu0 %v2410
      %2480 = vmatpush.bf16.msra.mxu0 %v2409
      %2481 = vmatmul.bf16.gmra.mxu0 %v2416
      %v2482 = vpop.f32.mrf.mxu0
      %v2483 = vadd.f32 %v2397, %v2482
      %v2484 = vpop.f32.mrf.mxu0
      %v2485 = vadd.f32 %v2397, %v2484
      %2486 = vmatmul.bf16.gmra.mxu0 %v2419
      %v2487 = vpop.f32.mrf.mxu0
      %v2488 = vadd.f32 %v2397, %v2487
      %v2489 = vpop.f32.mrf.mxu0
      %v2490 = vadd.f32 %v2397, %v2489
      %2491 = vmatmul.bf16.gmra.mxu0 %v2422
      %v2492 = vpop.f32.mrf.mxu0
      %v2493 = vadd.f32 %v2397, %v2492
      %v2494 = vpop.f32.mrf.mxu0
      %v2495 = vadd.f32 %v2397, %v2494
      %2496 = vmatmul.bf16.gmra.mxu0 %v2425
      %v2497 = vpop.f32.mrf.mxu0
      %v2498 = vadd.f32 %v2397, %v2497
      %v2499 = vpop.f32.mrf.mxu0
      %v2500 = vadd.f32 %v2397, %v2499
      %2501 = vmatmul.bf16.gmra.mxu0 %v2428
      %v2502 = vpop.f32.mrf.mxu0
      %v2503 = vadd.f32 %v2397, %v2502
      %v2504 = vpop.f32.mrf.mxu0
      %v2505 = vadd.f32 %v2397, %v2504
      %2506 = vmatmul.bf16.gmra.mxu0 %v2431
      %v2507 = vpop.f32.mrf.mxu0
      %v2508 = vadd.f32 %v2397, %v2507
      %v2509 = vpop.f32.mrf.mxu0
      %v2510 = vadd.f32 %v2397, %v2509
      %2511 = vmatmul.bf16.gmra.mxu0 %v2434
      %v2512 = vpop.f32.mrf.mxu0
      %v2513 = vadd.f32 %v2397, %v2512
      %v2514 = vpop.f32.mrf.mxu0
      %v2515 = vadd.f32 %v2397, %v2514
      %2516 = vmatmul.bf16.gmra.mxu0 %v2437
      %v2517 = vpop.f32.mrf.mxu0
      %v2518 = vadd.f32 %v2397, %v2517
      %v2519 = vpop.f32.mrf.mxu0
      %v2520 = vadd.f32 %v2397, %v2519
      %2521 = vmatmul.bf16.gmra.mxu0 %v2440
      %v2522 = vpop.f32.mrf.mxu0
      %v2523 = vadd.f32 %v2397, %v2522
      %v2524 = vpop.f32.mrf.mxu0
      %v2525 = vadd.f32 %v2397, %v2524
      %2526 = vmatmul.bf16.gmra.mxu0 %v2443
      %v2527 = vpop.f32.mrf.mxu0
      %v2528 = vadd.f32 %v2397, %v2527
      %v2529 = vpop.f32.mrf.mxu0
      %v2530 = vadd.f32 %v2397, %v2529
      %2531 = vmatmul.bf16.gmra.mxu0 %v2446
      %v2532 = vpop.f32.mrf.mxu0
      %v2533 = vadd.f32 %v2397, %v2532
      %v2534 = vpop.f32.mrf.mxu0
      %v2535 = vadd.f32 %v2397, %v2534
      %2536 = vmatmul.bf16.gmra.mxu0 %v2449
      %v2537 = vpop.f32.mrf.mxu0
      %v2538 = vadd.f32 %v2397, %v2537
      %v2539 = vpop.f32.mrf.mxu0
      %v2540 = vadd.f32 %v2397, %v2539
      %2541 = vmatmul.bf16.gmra.mxu0 %v2452
      %v2542 = vpop.f32.mrf.mxu0
      %v2543 = vadd.f32 %v2397, %v2542
      %v2544 = vpop.f32.mrf.mxu0
      %v2545 = vadd.f32 %v2397, %v2544
      %2546 = vmatmul.bf16.gmra.mxu0 %v2455
      %v2547 = vpop.f32.mrf.mxu0
      %v2548 = vadd.f32 %v2397, %v2547
      %v2549 = vpop.f32.mrf.mxu0
      %v2550 = vadd.f32 %v2397, %v2549
      %2551 = vmatmul.bf16.gmra.mxu0 %v2458
      %v2552 = vpop.f32.mrf.mxu0
      %v2553 = vadd.f32 %v2397, %v2552
      %v2554 = vpop.f32.mrf.mxu0
      %v2555 = vadd.f32 %v2397, %v2554
      %2556 = vmatmul.bf16.gmra.mxu0 %v2461
      %v2557 = vpop.f32.mrf.mxu0
      %v2558 = vadd.f32 %v2397, %v2557
      %v2559 = vpop.f32.mrf.mxu0
      %v2560 = vadd.f32 %v2397, %v2559
      %2561 = vmatmul.bf16.gmra.mxu0 %v2464
      %v2562 = vpop.f32.mrf.mxu0
      %v2563 = vadd.f32 %v2397, %v2562
      %v2564 = vpop.f32.mrf.mxu0
      %v2565 = vadd.f32 %v2397, %v2564
      %2566 = vmatmul.bf16.gmra.mxu0 %v2467
      %v2567 = vpop.f32.mrf.mxu0
      %v2568 = vadd.f32 %v2397, %v2567
      %v2569 = vpop.f32.mrf.mxu0
      %v2570 = vadd.f32 %v2397, %v2569
      %2571 = vdwg.mxu0
      %v2572 = vld [vmem:[%s4] sm:$0x1]
      %v2573 = vld [vmem:[%s5] sm:$0x1]
      %2575 = vset.pattern.permute.xlu0 0
      %2576 = vperm.xlu0 %2575, %v361
      %v2577 = vpop.permute.xlu0 %2576
      %2580 = vset.pattern.permute.xlu0 0
      %2581 = vperm.xlu0 %2580, %v362
      %v2582 = vpop.permute.xlu0 %2581
      %2585 = vset.pattern.permute.xlu0 0
      %2586 = vperm.xlu0 %2585, %v363
      %v2587 = vpop.permute.xlu0 %2586
      %2590 = vset.pattern.permute.xlu0 0
      %2591 = vperm.xlu0 %2590, %v364
      %v2592 = vpop.permute.xlu0 %2591
      %2595 = vset.pattern.permute.xlu0 0
      %2596 = vperm.xlu0 %2595, %v365
      %v2597 = vpop.permute.xlu0 %2596
      %2600 = vset.pattern.permute.xlu0 0
      %2601 = vperm.xlu0 %2600, %v366
      %v2602 = vpop.permute.xlu0 %2601
      %2605 = vset.pattern.permute.xlu0 0
      %2606 = vperm.xlu0 %2605, %v367
      %v2607 = vpop.permute.xlu0 %2606
      %2610 = vset.pattern.permute.xlu0 0
      %2611 = vperm.xlu0 %2610, %v368
      %v2612 = vpop.permute.xlu0 %2611
      %2615 = vset.pattern.permute.xlu0 0
      %2616 = vperm.xlu0 %2615, %v369
      %v2617 = vpop.permute.xlu0 %2616
      %2620 = vset.pattern.permute.xlu0 0
      %2621 = vperm.xlu0 %2620, %v370
      %v2622 = vpop.permute.xlu0 %2621
      %2625 = vset.pattern.permute.xlu0 0
      %2626 = vperm.xlu0 %2625, %v371
      %v2627 = vpop.permute.xlu0 %2626
      %2630 = vset.pattern.permute.xlu0 0
      %2631 = vperm.xlu0 %2630, %v372
      %v2632 = vpop.permute.xlu0 %2631
      %2635 = vset.pattern.permute.xlu0 0
      %2636 = vperm.xlu0 %2635, %v373
      %v2637 = vpop.permute.xlu0 %2636
      %2640 = vset.pattern.permute.xlu0 0
      %2641 = vperm.xlu0 %2640, %v374
      %v2642 = vpop.permute.xlu0 %2641
      %2645 = vset.pattern.permute.xlu0 0
      %2646 = vperm.xlu0 %2645, %v375
      %v2647 = vpop.permute.xlu0 %2646
      %2650 = vset.pattern.permute.xlu0 0
      %2651 = vperm.xlu0 %2650, %v376
      %v2652 = vpop.permute.xlu0 %2651
      %2655 = vset.pattern.permute.xlu0 0
      %2656 = vperm.xlu0 %2655, %v377
      %v2657 = vpop.permute.xlu0 %2656
      %2660 = vset.pattern.permute.xlu0 0
      %2661 = vperm.xlu0 %2660, %v378
      %v2662 = vpop.permute.xlu0 %2661
      %2665 = vset.pattern.permute.xlu0 0
      %2666 = vperm.xlu0 %2665, %v379
      %v2667 = vpop.permute.xlu0 %2666
      %2670 = vset.pattern.permute.xlu0 0
      %2671 = vperm.xlu0 %2670, %v380
      %v2672 = vpop.permute.xlu0 %2671
      %2675 = vset.pattern.permute.xlu0 0
      %2676 = vperm.xlu0 %2675, %v381
      %v2677 = vpop.permute.xlu0 %2676
      %2680 = vset.pattern.permute.xlu0 0
      %2681 = vperm.xlu0 %2680, %v382
      %v2682 = vpop.permute.xlu0 %2681
      %2685 = vset.pattern.permute.xlu0 0
      %2686 = vperm.xlu0 %2685, %v383
      %v2687 = vpop.permute.xlu0 %2686
      %2690 = vset.pattern.permute.xlu0 0
      %2691 = vperm.xlu0 %2690, %v384
      %v2692 = vpop.permute.xlu0 %2691
      %2695 = vset.pattern.permute.xlu0 0
      %2696 = vperm.xlu0 %2695, %v385
      %v2697 = vpop.permute.xlu0 %2696
      %2700 = vset.pattern.permute.xlu0 0
      %2701 = vperm.xlu0 %2700, %v386
      %v2702 = vpop.permute.xlu0 %2701
      %2705 = vset.pattern.permute.xlu0 0
      %2706 = vperm.xlu0 %2705, %v387
      %v2707 = vpop.permute.xlu0 %2706
      %2710 = vset.pattern.permute.xlu0 0
      %2711 = vperm.xlu0 %2710, %v388
      %v2712 = vpop.permute.xlu0 %2711
      %2715 = vset.pattern.permute.xlu0 0
      %2716 = vperm.xlu0 %2715, %v389
      %v2717 = vpop.permute.xlu0 %2716
      %2720 = vset.pattern.permute.xlu0 0
      %2721 = vperm.xlu0 %2720, %v390
      %v2722 = vpop.permute.xlu0 %2721
      %2725 = vset.pattern.permute.xlu0 0
      %2726 = vperm.xlu0 %2725, %v391
      %v2727 = vpop.permute.xlu0 %2726
      %2730 = vset.pattern.permute.xlu0 0
      %2731 = vperm.xlu0 %2730, %v392
      %v2732 = vpop.permute.xlu0 %2731
      %2735 = vset.pattern.permute.xlu0 0
      %2736 = vperm.xlu0 %2735, %v393
      %v2737 = vpop.permute.xlu0 %2736
      %2740 = vset.pattern.permute.xlu0 0
      %2741 = vperm.xlu0 %2740, %v394
      %v2742 = vpop.permute.xlu0 %2741
      %2745 = vset.pattern.permute.xlu0 0
      %2746 = vperm.xlu0 %2745, %v395
      %v2747 = vpop.permute.xlu0 %2746
      %2750 = vset.pattern.permute.xlu0 0
      %2751 = vperm.xlu0 %2750, %v396
      %v2752 = vpop.permute.xlu0 %2751
      %v2754 = vmul.f32 %v2483, %v2577
      %v2755 = vmul.f32 %v2485, %v2582
      %v2756 = vmul.f32 %v2488, %v2587
      %v2757 = vmul.f32 %v2490, %v2592
      %v2758 = vmul.f32 %v2493, %v2597
      %v2759 = vmul.f32 %v2495, %v2602
      %v2760 = vmul.f32 %v2498, %v2607
      %v2761 = vmul.f32 %v2500, %v2612
      %v2762 = vmul.f32 %v2503, %v2617
      %v2763 = vmul.f32 %v2505, %v2622
      %v2764 = vmul.f32 %v2508, %v2627
      %v2765 = vmul.f32 %v2510, %v2632
      %v2766 = vmul.f32 %v2513, %v2637
      %v2767 = vmul.f32 %v2515, %v2642
      %v2768 = vmul.f32 %v2518, %v2647
      %v2769 = vmul.f32 %v2520, %v2652
      %v2770 = vmul.f32 %v2523, %v2657
      %v2771 = vmul.f32 %v2525, %v2662
      %v2772 = vmul.f32 %v2528, %v2667
      %v2773 = vmul.f32 %v2530, %v2672
      %v2774 = vmul.f32 %v2533, %v2677
      %v2775 = vmul.f32 %v2535, %v2682
      %v2776 = vmul.f32 %v2538, %v2687
      %v2777 = vmul.f32 %v2540, %v2692
      %v2778 = vmul.f32 %v2543, %v2697
      %v2779 = vmul.f32 %v2545, %v2702
      %v2780 = vmul.f32 %v2548, %v2707
      %v2781 = vmul.f32 %v2550, %v2712
      %v2782 = vmul.f32 %v2553, %v2717
      %v2783 = vmul.f32 %v2555, %v2722
      %v2784 = vmul.f32 %v2558, %v2727
      %v2785 = vmul.f32 %v2560, %v2732
      %v2786 = vmul.f32 %v2563, %v2737
      %v2787 = vmul.f32 %v2565, %v2742
      %v2788 = vmul.f32 %v2568, %v2747
      %v2789 = vmul.f32 %v2570, %v2752
      %v2790 = vsel %vm483, %v2754, 0.0
      %v2791 = vsel %vm483, %v2755, 0.0
      %v2792 = vadd.f32 %v2790, %v2791
      %v2793 = vsel %vm483, %v2756, 0.0
      %v2794 = vadd.f32 %v2792, %v2793
      %v2795 = vsel %vm483, %v2757, 0.0
      %v2796 = vadd.f32 %v2794, %v2795
      %v2797 = vsel %vm483, %v2758, 0.0
      %v2798 = vadd.f32 %v2796, %v2797
      %v2799 = vsel %vm483, %v2759, 0.0
      %v2800 = vadd.f32 %v2798, %v2799
      %v2801 = vsel %vm483, %v2760, 0.0
      %v2802 = vadd.f32 %v2800, %v2801
      %v2803 = vsel %vm483, %v2761, 0.0
      %v2804 = vadd.f32 %v2802, %v2803
      %v2805 = vsel %vm483, %v2762, 0.0
      %v2806 = vadd.f32 %v2804, %v2805
      %v2807 = vsel %vm483, %v2763, 0.0
      %v2808 = vadd.f32 %v2806, %v2807
      %v2809 = vsel %vm483, %v2764, 0.0
      %v2810 = vadd.f32 %v2808, %v2809
      %v2811 = vsel %vm483, %v2765, 0.0
      %v2812 = vadd.f32 %v2810, %v2811
      %v2813 = vsel %vm483, %v2766, 0.0
      %v2814 = vadd.f32 %v2812, %v2813
      %v2815 = vsel %vm483, %v2767, 0.0
      %v2816 = vadd.f32 %v2814, %v2815
      %v2817 = vsel %vm483, %v2768, 0.0
      %v2818 = vadd.f32 %v2816, %v2817
      %v2819 = vsel %vm483, %v2769, 0.0
      %v2820 = vadd.f32 %v2818, %v2819
      %v2821 = vsel %vm483, %v2770, 0.0
      %v2822 = vadd.f32 %v2820, %v2821
      %v2823 = vsel %vm483, %v2771, 0.0
      %v2824 = vadd.f32 %v2822, %v2823
      %v2825 = vsel %vm483, %v2772, 0.0
      %v2826 = vadd.f32 %v2824, %v2825
      %v2827 = vsel %vm483, %v2773, 0.0
      %v2828 = vadd.f32 %v2826, %v2827
      %v2829 = vsel %vm483, %v2774, 0.0
      %v2830 = vadd.f32 %v2828, %v2829
      %v2831 = vsel %vm483, %v2775, 0.0
      %v2832 = vadd.f32 %v2830, %v2831
      %v2833 = vsel %vm483, %v2776, 0.0
      %v2834 = vadd.f32 %v2832, %v2833
      %v2835 = vsel %vm483, %v2777, 0.0
      %v2836 = vadd.f32 %v2834, %v2835
      %v2837 = vsel %vm483, %v2778, 0.0
      %v2838 = vadd.f32 %v2836, %v2837
      %v2839 = vsel %vm483, %v2779, 0.0
      %v2840 = vadd.f32 %v2838, %v2839
      %v2841 = vsel %vm483, %v2780, 0.0
      %v2842 = vadd.f32 %v2840, %v2841
      %v2843 = vsel %vm483, %v2781, 0.0
      %v2844 = vadd.f32 %v2842, %v2843
      %v2845 = vsel %vm483, %v2782, 0.0
      %v2846 = vadd.f32 %v2844, %v2845
      %v2847 = vsel %vm483, %v2783, 0.0
      %v2848 = vadd.f32 %v2846, %v2847
      %v2849 = vsel %vm483, %v2784, 0.0
      %v2850 = vadd.f32 %v2848, %v2849
      %v2851 = vsel %vm483, %v2785, 0.0
      %v2852 = vadd.f32 %v2850, %v2851
      %v2853 = vsel %vm483, %v2786, 0.0
      %v2854 = vadd.f32 %v2852, %v2853
      %v2855 = vsel %vm483, %v2787, 0.0
      %v2856 = vadd.f32 %v2854, %v2855
      %v2857 = vsel %vm483, %v2788, 0.0
      %v2858 = vadd.f32 %v2856, %v2857
      %v2859 = vsel %vm483, %v2789, 0.0
      %v2860 = vadd.f32 %v2858, %v2859
      %v2861 = vrot.slane %v2860, 4
      %v2862 = vadd.f32 %v2860, %v2861
      %v2863 = vrot.slane %v2862, 2
      %v2864 = vadd.f32 %v2862, %v2863
      %v2865 = vrot.slane %v2864, 1
      %v2866 = vadd.f32 %v2864, %v2865
      %v2867 = vmul.f32 %v2754, %v2483
      %v2868 = vmul.f32 %v2755, %v2485
      %v2869 = vmul.f32 %v2756, %v2488
      %v2870 = vmul.f32 %v2757, %v2490
      %v2871 = vmul.f32 %v2758, %v2493
      %v2872 = vmul.f32 %v2759, %v2495
      %v2873 = vmul.f32 %v2760, %v2498
      %v2874 = vmul.f32 %v2761, %v2500
      %v2875 = vmul.f32 %v2762, %v2503
      %v2876 = vmul.f32 %v2763, %v2505
      %v2877 = vmul.f32 %v2764, %v2508
      %v2878 = vmul.f32 %v2765, %v2510
      %v2879 = vmul.f32 %v2766, %v2513
      %v2880 = vmul.f32 %v2767, %v2515
      %v2881 = vmul.f32 %v2768, %v2518
      %v2882 = vmul.f32 %v2769, %v2520
      %v2883 = vmul.f32 %v2770, %v2523
      %v2884 = vmul.f32 %v2771, %v2525
      %v2885 = vmul.f32 %v2772, %v2528
      %v2886 = vmul.f32 %v2773, %v2530
      %v2887 = vmul.f32 %v2774, %v2533
      %v2888 = vmul.f32 %v2775, %v2535
      %v2889 = vmul.f32 %v2776, %v2538
      %v2890 = vmul.f32 %v2777, %v2540
      %v2891 = vmul.f32 %v2778, %v2543
      %v2892 = vmul.f32 %v2779, %v2545
      %v2893 = vmul.f32 %v2780, %v2548
      %v2894 = vmul.f32 %v2781, %v2550
      %v2895 = vmul.f32 %v2782, %v2553
      %v2896 = vmul.f32 %v2783, %v2555
      %v2897 = vmul.f32 %v2784, %v2558
      %v2898 = vmul.f32 %v2785, %v2560
      %v2899 = vmul.f32 %v2786, %v2563
      %v2900 = vmul.f32 %v2787, %v2565
      %v2901 = vmul.f32 %v2788, %v2568
      %v2902 = vmul.f32 %v2789, %v2570
      %v2903 = vsel %vm483, %v2867, 0.0
      %v2904 = vsel %vm483, %v2868, 0.0
      %v2905 = vadd.f32 %v2903, %v2904
      %v2906 = vsel %vm483, %v2869, 0.0
      %v2907 = vadd.f32 %v2905, %v2906
      %v2908 = vsel %vm483, %v2870, 0.0
      %v2909 = vadd.f32 %v2907, %v2908
      %v2910 = vsel %vm483, %v2871, 0.0
      %v2911 = vadd.f32 %v2909, %v2910
      %v2912 = vsel %vm483, %v2872, 0.0
      %v2913 = vadd.f32 %v2911, %v2912
      %v2914 = vsel %vm483, %v2873, 0.0
      %v2915 = vadd.f32 %v2913, %v2914
      %v2916 = vsel %vm483, %v2874, 0.0
      %v2917 = vadd.f32 %v2915, %v2916
      %v2918 = vsel %vm483, %v2875, 0.0
      %v2919 = vadd.f32 %v2917, %v2918
      %v2920 = vsel %vm483, %v2876, 0.0
      %v2921 = vadd.f32 %v2919, %v2920
      %v2922 = vsel %vm483, %v2877, 0.0
      %v2923 = vadd.f32 %v2921, %v2922
      %v2924 = vsel %vm483, %v2878, 0.0
      %v2925 = vadd.f32 %v2923, %v2924
      %v2926 = vsel %vm483, %v2879, 0.0
      %v2927 = vadd.f32 %v2925, %v2926
      %v2928 = vsel %vm483, %v2880, 0.0
      %v2929 = vadd.f32 %v2927, %v2928
      %v2930 = vsel %vm483, %v2881, 0.0
      %v2931 = vadd.f32 %v2929, %v2930
      %v2932 = vsel %vm483, %v2882, 0.0
      %v2933 = vadd.f32 %v2931, %v2932
      %v2934 = vsel %vm483, %v2883, 0.0
      %v2935 = vadd.f32 %v2933, %v2934
      %v2936 = vsel %vm483, %v2884, 0.0
      %v2937 = vadd.f32 %v2935, %v2936
      %v2938 = vsel %vm483, %v2885, 0.0
      %v2939 = vadd.f32 %v2937, %v2938
      %v2940 = vsel %vm483, %v2886, 0.0
      %v2941 = vadd.f32 %v2939, %v2940
      %v2942 = vsel %vm483, %v2887, 0.0
      %v2943 = vadd.f32 %v2941, %v2942
      %v2944 = vsel %vm483, %v2888, 0.0
      %v2945 = vadd.f32 %v2943, %v2944
      %v2946 = vsel %vm483, %v2889, 0.0
      %v2947 = vadd.f32 %v2945, %v2946
      %v2948 = vsel %vm483, %v2890, 0.0
      %v2949 = vadd.f32 %v2947, %v2948
      %v2950 = vsel %vm483, %v2891, 0.0
      %v2951 = vadd.f32 %v2949, %v2950
      %v2952 = vsel %vm483, %v2892, 0.0
      %v2953 = vadd.f32 %v2951, %v2952
      %v2954 = vsel %vm483, %v2893, 0.0
      %v2955 = vadd.f32 %v2953, %v2954
      %v2956 = vsel %vm483, %v2894, 0.0
      %v2957 = vadd.f32 %v2955, %v2956
      %v2958 = vsel %vm483, %v2895, 0.0
      %v2959 = vadd.f32 %v2957, %v2958
      %v2960 = vsel %vm483, %v2896, 0.0
      %v2961 = vadd.f32 %v2959, %v2960
      %v2962 = vsel %vm483, %v2897, 0.0
      %v2963 = vadd.f32 %v2961, %v2962
      %v2964 = vsel %vm483, %v2898, 0.0
      %v2965 = vadd.f32 %v2963, %v2964
      %v2966 = vsel %vm483, %v2899, 0.0
      %v2967 = vadd.f32 %v2965, %v2966
      %v2968 = vsel %vm483, %v2900, 0.0
      %v2969 = vadd.f32 %v2967, %v2968
      %v2970 = vsel %vm483, %v2901, 0.0
      %v2971 = vadd.f32 %v2969, %v2970
      %v2972 = vsel %vm483, %v2902, 0.0
      %v2973 = vadd.f32 %v2971, %v2972
      %v2974 = vrot.slane %v2973, 4
      %v2975 = vadd.f32 %v2973, %v2974
      %v2976 = vrot.slane %v2975, 2
      %v2977 = vadd.f32 %v2975, %v2976
      %v2978 = vrot.slane %v2977, 1
      %v2979 = vadd.f32 %v2977, %v2978
      %v2980 = vmul.f32 %v2866, 0.00390625
      %v2981 = vmul.f32 %v2979, 0.00390625
      %v2982 = vmul.f32 %v2980, %v2980
      %v2983 = vsub.f32 %v2981, %v2982
      %v2984 = vmax.f32 %v2983, 0.0
      %v2985 = vsub.f32 %v2483, %v2980
      %v2986 = vsub.f32 %v2485, %v2980
      %v2987 = vsub.f32 %v2488, %v2980
      %v2988 = vsub.f32 %v2490, %v2980
      %v2989 = vsub.f32 %v2493, %v2980
      %v2990 = vsub.f32 %v2495, %v2980
      %v2991 = vsub.f32 %v2498, %v2980
      %v2992 = vsub.f32 %v2500, %v2980
      %v2993 = vsub.f32 %v2503, %v2980
      %v2994 = vsub.f32 %v2505, %v2980
      %v2995 = vsub.f32 %v2508, %v2980
      %v2996 = vsub.f32 %v2510, %v2980
      %v2997 = vsub.f32 %v2513, %v2980
      %v2998 = vsub.f32 %v2515, %v2980
      %v2999 = vsub.f32 %v2518, %v2980
      %v3000 = vsub.f32 %v2520, %v2980
      %v3001 = vsub.f32 %v2523, %v2980
      %v3002 = vsub.f32 %v2525, %v2980
      %v3003 = vsub.f32 %v2528, %v2980
      %v3004 = vsub.f32 %v2530, %v2980
      %v3005 = vsub.f32 %v2533, %v2980
      %v3006 = vsub.f32 %v2535, %v2980
      %v3007 = vsub.f32 %v2538, %v2980
      %v3008 = vsub.f32 %v2540, %v2980
      %v3009 = vsub.f32 %v2543, %v2980
      %v3010 = vsub.f32 %v2545, %v2980
      %v3011 = vsub.f32 %v2548, %v2980
      %v3012 = vsub.f32 %v2550, %v2980
      %v3013 = vsub.f32 %v2553, %v2980
      %v3014 = vsub.f32 %v2555, %v2980
      %v3015 = vsub.f32 %v2558, %v2980
      %v3016 = vsub.f32 %v2560, %v2980
      %v3017 = vsub.f32 %v2563, %v2980
      %v3018 = vsub.f32 %v2565, %v2980
      %v3019 = vsub.f32 %v2568, %v2980
      %v3020 = vsub.f32 %v2570, %v2980
      %v3021 = vadd.f32 %v2984, 1e-05
      %v3022 = vrsqrt.pop %v3021
      %v3023 = vmul.f32 %v3022, %v3021
      %v3024 = vmul.f32 %v3023, %v3022
      %v3025 = vmul.f32 0.5, %v3024
      %v3026 = vsub.f32 1.5, %v3025
      %v3027 = vmul.f32 %v3022, %v3026
      %vm3028 = vweird.f32 %v3021
      %vm3029 = vweird.f32 %v3022
      %vm3030 = vmor %vm3028, %vm3029
      %v3031 = vsel %vm3030, %v3022, %v3027
      %v3032 = vmul.f32 %v2985, %v3031
      %v3033 = vmul.f32 %v2986, %v3031
      %v3034 = vmul.f32 %v2987, %v3031
      %v3035 = vmul.f32 %v2988, %v3031
      %v3036 = vmul.f32 %v2989, %v3031
      %v3037 = vmul.f32 %v2990, %v3031
      %v3038 = vmul.f32 %v2991, %v3031
      %v3039 = vmul.f32 %v2992, %v3031
      %v3040 = vmul.f32 %v2993, %v3031
      %v3041 = vmul.f32 %v2994, %v3031
      %v3042 = vmul.f32 %v2995, %v3031
      %v3043 = vmul.f32 %v2996, %v3031
      %v3044 = vmul.f32 %v2997, %v3031
      %v3045 = vmul.f32 %v2998, %v3031
      %v3046 = vmul.f32 %v2999, %v3031
      %v3047 = vmul.f32 %v3000, %v3031
      %v3048 = vmul.f32 %v3001, %v3031
      %v3049 = vmul.f32 %v3002, %v3031
      %v3050 = vmul.f32 %v3003, %v3031
      %v3051 = vmul.f32 %v3004, %v3031
      %v3052 = vmul.f32 %v3005, %v3031
      %v3053 = vmul.f32 %v3006, %v3031
      %v3054 = vmul.f32 %v3007, %v3031
      %v3055 = vmul.f32 %v3008, %v3031
      %v3056 = vmul.f32 %v3009, %v3031
      %v3057 = vmul.f32 %v3010, %v3031
      %v3058 = vmul.f32 %v3011, %v3031
      %v3059 = vmul.f32 %v3012, %v3031
      %v3060 = vmul.f32 %v3013, %v3031
      %v3061 = vmul.f32 %v3014, %v3031
      %v3062 = vmul.f32 %v3015, %v3031
      %v3063 = vmul.f32 %v3016, %v3031
      %v3064 = vmul.f32 %v3017, %v3031
      %v3065 = vmul.f32 %v3018, %v3031
      %v3066 = vmul.f32 %v3019, %v3031
      %v3067 = vmul.f32 %v3020, %v3031
      %v3069 = vperm.slane %v2572, 0
      %v3071 = vmul.f32 %v3032, %v3069
      %v3072 = vmul.f32 %v3033, %v3069
      %v3073 = vmul.f32 %v3034, %v3069
      %v3074 = vmul.f32 %v3035, %v3069
      %v3075 = vmul.f32 %v3036, %v3069
      %v3076 = vmul.f32 %v3037, %v3069
      %v3077 = vmul.f32 %v3038, %v3069
      %v3078 = vmul.f32 %v3039, %v3069
      %v3079 = vmul.f32 %v3040, %v3069
      %v3080 = vmul.f32 %v3041, %v3069
      %v3081 = vmul.f32 %v3042, %v3069
      %v3082 = vmul.f32 %v3043, %v3069
      %v3083 = vmul.f32 %v3044, %v3069
      %v3084 = vmul.f32 %v3045, %v3069
      %v3085 = vmul.f32 %v3046, %v3069
      %v3086 = vmul.f32 %v3047, %v3069
      %v3087 = vmul.f32 %v3048, %v3069
      %v3088 = vmul.f32 %v3049, %v3069
      %v3089 = vmul.f32 %v3050, %v3069
      %v3090 = vmul.f32 %v3051, %v3069
      %v3091 = vmul.f32 %v3052, %v3069
      %v3092 = vmul.f32 %v3053, %v3069
      %v3093 = vmul.f32 %v3054, %v3069
      %v3094 = vmul.f32 %v3055, %v3069
      %v3095 = vmul.f32 %v3056, %v3069
      %v3096 = vmul.f32 %v3057, %v3069
      %v3097 = vmul.f32 %v3058, %v3069
      %v3098 = vmul.f32 %v3059, %v3069
      %v3099 = vmul.f32 %v3060, %v3069
      %v3100 = vmul.f32 %v3061, %v3069
      %v3101 = vmul.f32 %v3062, %v3069
      %v3102 = vmul.f32 %v3063, %v3069
      %v3103 = vmul.f32 %v3064, %v3069
      %v3104 = vmul.f32 %v3065, %v3069
      %v3105 = vmul.f32 %v3066, %v3069
      %v3106 = vmul.f32 %v3067, %v3069
      %v3108 = vperm.slane %v2573, 0
      %v3110 = vadd.f32 %v3071, %v3108
      %v3111 = vadd.f32 %v3072, %v3108
      %v3112 = vadd.f32 %v3073, %v3108
      %v3113 = vadd.f32 %v3074, %v3108
      %v3114 = vadd.f32 %v3075, %v3108
      %v3115 = vadd.f32 %v3076, %v3108
      %v3116 = vadd.f32 %v3077, %v3108
      %v3117 = vadd.f32 %v3078, %v3108
      %v3118 = vadd.f32 %v3079, %v3108
      %v3119 = vadd.f32 %v3080, %v3108
      %v3120 = vadd.f32 %v3081, %v3108
      %v3121 = vadd.f32 %v3082, %v3108
      %v3122 = vadd.f32 %v3083, %v3108
      %v3123 = vadd.f32 %v3084, %v3108
      %v3124 = vadd.f32 %v3085, %v3108
      %v3125 = vadd.f32 %v3086, %v3108
      %v3126 = vadd.f32 %v3087, %v3108
      %v3127 = vadd.f32 %v3088, %v3108
      %v3128 = vadd.f32 %v3089, %v3108
      %v3129 = vadd.f32 %v3090, %v3108
      %v3130 = vadd.f32 %v3091, %v3108
      %v3131 = vadd.f32 %v3092, %v3108
      %v3132 = vadd.f32 %v3093, %v3108
      %v3133 = vadd.f32 %v3094, %v3108
      %v3134 = vadd.f32 %v3095, %v3108
      %v3135 = vadd.f32 %v3096, %v3108
      %v3136 = vadd.f32 %v3097, %v3108
      %v3137 = vadd.f32 %v3098, %v3108
      %v3138 = vadd.f32 %v3099, %v3108
      %v3139 = vadd.f32 %v3100, %v3108
      %v3140 = vadd.f32 %v3101, %v3108
      %v3141 = vadd.f32 %v3102, %v3108
      %v3142 = vadd.f32 %v3103, %v3108
      %v3143 = vadd.f32 %v3104, %v3108
      %v3144 = vadd.f32 %v3105, %v3108
      %v3145 = vadd.f32 %v3106, %v3108
      %vm3146 = vcmp.ge.f32.partialorder %v3110, 0.0
      %vm3147 = vcmp.ge.f32.partialorder %v3111, 0.0
      %vm3148 = vcmp.ge.f32.partialorder %v3112, 0.0
      %vm3149 = vcmp.ge.f32.partialorder %v3113, 0.0
      %vm3150 = vcmp.ge.f32.partialorder %v3114, 0.0
      %vm3151 = vcmp.ge.f32.partialorder %v3115, 0.0
      %vm3152 = vcmp.ge.f32.partialorder %v3116, 0.0
      %vm3153 = vcmp.ge.f32.partialorder %v3117, 0.0
      %vm3154 = vcmp.ge.f32.partialorder %v3118, 0.0
      %vm3155 = vcmp.ge.f32.partialorder %v3119, 0.0
      %vm3156 = vcmp.ge.f32.partialorder %v3120, 0.0
      %vm3157 = vcmp.ge.f32.partialorder %v3121, 0.0
      %vm3158 = vcmp.ge.f32.partialorder %v3122, 0.0
      %vm3159 = vcmp.ge.f32.partialorder %v3123, 0.0
      %vm3160 = vcmp.ge.f32.partialorder %v3124, 0.0
      %vm3161 = vcmp.ge.f32.partialorder %v3125, 0.0
      %vm3162 = vcmp.ge.f32.partialorder %v3126, 0.0
      %vm3163 = vcmp.ge.f32.partialorder %v3127, 0.0
      %vm3164 = vcmp.ge.f32.partialorder %v3128, 0.0
      %vm3165 = vcmp.ge.f32.partialorder %v3129, 0.0
      %vm3166 = vcmp.ge.f32.partialorder %v3130, 0.0
      %vm3167 = vcmp.ge.f32.partialorder %v3131, 0.0
      %vm3168 = vcmp.ge.f32.partialorder %v3132, 0.0
      %vm3169 = vcmp.ge.f32.partialorder %v3133, 0.0
      %vm3170 = vcmp.ge.f32.partialorder %v3134, 0.0
      %vm3171 = vcmp.ge.f32.partialorder %v3135, 0.0
      %vm3172 = vcmp.ge.f32.partialorder %v3136, 0.0
      %vm3173 = vcmp.ge.f32.partialorder %v3137, 0.0
      %vm3174 = vcmp.ge.f32.partialorder %v3138, 0.0
      %vm3175 = vcmp.ge.f32.partialorder %v3139, 0.0
      %vm3176 = vcmp.ge.f32.partialorder %v3140, 0.0
      %vm3177 = vcmp.ge.f32.partialorder %v3141, 0.0
      %vm3178 = vcmp.ge.f32.partialorder %v3142, 0.0
      %vm3179 = vcmp.ge.f32.partialorder %v3143, 0.0
      %vm3180 = vcmp.ge.f32.partialorder %v3144, 0.0
      %vm3181 = vcmp.ge.f32.partialorder %v3145, 0.0
      %v3182 = vmul.f32 %v3110, 0.25
      %v3183 = vmul.f32 %v3111, 0.25
      %v3184 = vmul.f32 %v3112, 0.25
      %v3185 = vmul.f32 %v3113, 0.25
      %v3186 = vmul.f32 %v3114, 0.25
      %v3187 = vmul.f32 %v3115, 0.25
      %v3188 = vmul.f32 %v3116, 0.25
      %v3189 = vmul.f32 %v3117, 0.25
      %v3190 = vmul.f32 %v3118, 0.25
      %v3191 = vmul.f32 %v3119, 0.25
      %v3192 = vmul.f32 %v3120, 0.25
      %v3193 = vmul.f32 %v3121, 0.25
      %v3194 = vmul.f32 %v3122, 0.25
      %v3195 = vmul.f32 %v3123, 0.25
      %v3196 = vmul.f32 %v3124, 0.25
      %v3197 = vmul.f32 %v3125, 0.25
      %v3198 = vmul.f32 %v3126, 0.25
      %v3199 = vmul.f32 %v3127, 0.25
      %v3200 = vmul.f32 %v3128, 0.25
      %v3201 = vmul.f32 %v3129, 0.25
      %v3202 = vmul.f32 %v3130, 0.25
      %v3203 = vmul.f32 %v3131, 0.25
      %v3204 = vmul.f32 %v3132, 0.25
      %v3205 = vmul.f32 %v3133, 0.25
      %v3206 = vmul.f32 %v3134, 0.25
      %v3207 = vmul.f32 %v3135, 0.25
      %v3208 = vmul.f32 %v3136, 0.25
      %v3209 = vmul.f32 %v3137, 0.25
      %v3210 = vmul.f32 %v3138, 0.25
      %v3211 = vmul.f32 %v3139, 0.25
      %v3212 = vmul.f32 %v3140, 0.25
      %v3213 = vmul.f32 %v3141, 0.25
      %v3214 = vmul.f32 %v3142, 0.25
      %v3215 = vmul.f32 %v3143, 0.25
      %v3216 = vmul.f32 %v3144, 0.25
      %v3217 = vmul.f32 %v3145, 0.25
      %v3218 = vsel %vm3146, %v3110, %v3182
      %v3219 = vsel %vm3147, %v3111, %v3183
      %v3220 = vsel %vm3148, %v3112, %v3184
      %v3221 = vsel %vm3149, %v3113, %v3185
      %v3222 = vsel %vm3150, %v3114, %v3186
      %v3223 = vsel %vm3151, %v3115, %v3187
      %v3224 = vsel %vm3152, %v3116, %v3188
      %v3225 = vsel %vm3153, %v3117, %v3189
      %v3226 = vsel %vm3154, %v3118, %v3190
      %v3227 = vsel %vm3155, %v3119, %v3191
      %v3228 = vsel %vm3156, %v3120, %v3192
      %v3229 = vsel %vm3157, %v3121, %v3193
      %v3230 = vsel %vm3158, %v3122, %v3194
      %v3231 = vsel %vm3159, %v3123, %v3195
      %v3232 = vsel %vm3160, %v3124, %v3196
      %v3233 = vsel %vm3161, %v3125, %v3197
      %v3234 = vsel %vm3162, %v3126, %v3198
      %v3235 = vsel %vm3163, %v3127, %v3199
      %v3236 = vsel %vm3164, %v3128, %v3200
      %v3237 = vsel %vm3165, %v3129, %v3201
      %v3238 = vsel %vm3166, %v3130, %v3202
      %v3239 = vsel %vm3167, %v3131, %v3203
      %v3240 = vsel %vm3168, %v3132, %v3204
      %v3241 = vsel %vm3169, %v3133, %v3205
      %v3242 = vsel %vm3170, %v3134, %v3206
      %v3243 = vsel %vm3171, %v3135, %v3207
      %v3244 = vsel %vm3172, %v3136, %v3208
      %v3245 = vsel %vm3173, %v3137, %v3209
      %v3246 = vsel %vm3174, %v3138, %v3210
      %v3247 = vsel %vm3175, %v3139, %v3211
      %v3248 = vsel %vm3176, %v3140, %v3212
      %v3249 = vsel %vm3177, %v3141, %v3213
      %v3250 = vsel %vm3178, %v3142, %v3214
      %v3251 = vsel %vm3179, %v3143, %v3215
      %v3252 = vsel %vm3180, %v3144, %v3216
      %v3253 = vsel %vm3181, %v3145, %v3217
      %v3254 = vmul.f32 %v3218, %v2577
      %v3255 = vmul.f32 %v3219, %v2582
      %v3256 = vmul.f32 %v3220, %v2587
      %v3257 = vmul.f32 %v3221, %v2592
      %v3258 = vmul.f32 %v3222, %v2597
      %v3259 = vmul.f32 %v3223, %v2602
      %v3260 = vmul.f32 %v3224, %v2607
      %v3261 = vmul.f32 %v3225, %v2612
      %v3262 = vmul.f32 %v3226, %v2617
      %v3263 = vmul.f32 %v3227, %v2622
      %v3264 = vmul.f32 %v3228, %v2627
      %v3265 = vmul.f32 %v3229, %v2632
      %v3266 = vmul.f32 %v3230, %v2637
      %v3267 = vmul.f32 %v3231, %v2642
      %v3268 = vmul.f32 %v3232, %v2647
      %v3269 = vmul.f32 %v3233, %v2652
      %v3270 = vmul.f32 %v3234, %v2657
      %v3271 = vmul.f32 %v3235, %v2662
      %v3272 = vmul.f32 %v3236, %v2667
      %v3273 = vmul.f32 %v3237, %v2672
      %v3274 = vmul.f32 %v3238, %v2677
      %v3275 = vmul.f32 %v3239, %v2682
      %v3276 = vmul.f32 %v3240, %v2687
      %v3277 = vmul.f32 %v3241, %v2692
      %v3278 = vmul.f32 %v3242, %v2697
      %v3279 = vmul.f32 %v3243, %v2702
      %v3280 = vmul.f32 %v3244, %v2707
      %v3281 = vmul.f32 %v3245, %v2712
      %v3282 = vmul.f32 %v3246, %v2717
      %v3283 = vmul.f32 %v3247, %v2722
      %v3284 = vmul.f32 %v3248, %v2727
      %v3285 = vmul.f32 %v3249, %v2732
      %v3286 = vmul.f32 %v3250, %v2737
      %v3287 = vmul.f32 %v3251, %v2742
      %v3288 = vmul.f32 %v3252, %v2747
      %v3289 = vmul.f32 %v3253, %v2752
      %v3290 = vld [vmem:[#allocation2 + $0x13] sm:$0xff]
      %v3291 = vld [vmem:[#allocation2 + $0x1b] sm:$0xff]
      %v3292 = vld [vmem:[#allocation2 + $0x23] sm:$0xff]
      %v3293 = vld [vmem:[#allocation2 + $0x2b] sm:$0xff]
      %v3294 = vld [vmem:[#allocation2 + $0x33] sm:$0xff]
      %v3295 = vld [vmem:[#allocation2 + $0x3b] sm:$0xff]
      %v3296 = vld [vmem:[#allocation2 + $0x43] sm:$0xff]
      %v3297 = vld [vmem:[#allocation2 + $0x4b] sm:$0xff]
      %v3298 = vld [vmem:[#allocation2 + $0x53] sm:$0xff]
      %v3299 = vld [vmem:[#allocation2 + $0x5b] sm:$0xff]
      %v3300 = vld [vmem:[#allocation2 + $0x63] sm:$0xff]
      %v3301 = vld [vmem:[#allocation2 + $0x6b] sm:$0xff]
      %v3302 = vld [vmem:[#allocation2 + $0x73] sm:$0xff]
      %v3303 = vld [vmem:[#allocation2 + $0x7b] sm:$0xff]
      %v3304 = vld [vmem:[#allocation2 + $0x83] sm:$0xff]
      %v3305 = vld [vmem:[#allocation2 + $0x8b] sm:$0xff]
      %v3306 = vld [vmem:[#allocation2 + $0x93] sm:$0xff]
      %v3307 = vld [vmem:[#allocation2 + $0x9b] sm:$0xff]
      %v3308 = vld [vmem:[#allocation2 + $0xa3] sm:$0xff]
      %v3309 = vld [vmem:[#allocation2 + $0xab] sm:$0xff]
      %v3310 = vld [vmem:[#allocation2 + $0xb3] sm:$0xff]
      %v3311 = vld [vmem:[#allocation2 + $0xbb] sm:$0xff]
      %v3312 = vld [vmem:[#allocation2 + $0xc3] sm:$0xff]
      %v3313 = vld [vmem:[#allocation2 + $0xcb] sm:$0xff]
      %v3314 = vld [vmem:[#allocation2 + $0xd3] sm:$0xff]
      %v3315 = vld [vmem:[#allocation2 + $0xdb] sm:$0xff]
      %v3316 = vld [vmem:[#allocation2 + $0xe3] sm:$0xff]
      %v3317 = vld [vmem:[#allocation2 + $0xeb] sm:$0xff]
      %v3318 = vld [vmem:[#allocation2 + $0xf3] sm:$0xff]
      %v3319 = vld [vmem:[#allocation2 + $0xfb] sm:$0xff]
      %v3320 = vld [vmem:[#allocation2 + $0x103] sm:$0xff]
      %v3321 = vld [vmem:[#allocation2 + $0x10b] sm:$0xff]
      %v3322 = vld [vmem:[#allocation2 + $0x113] sm:$0xff]
      %v3323 = vld [vmem:[#allocation2 + $0x11b] sm:$0xff]
      %v3324 = vld [vmem:[#allocation2 + $0x123] sm:$0xff]
      %v3325 = vld [vmem:[#allocation2 + $0x12b] sm:$0xff]
      %3326 = vst.msk [vmem:[#allocation5] sm:$0xff] %vm483, 0.0
      %3327 = vst.msk [vmem:[#allocation5 + $0x8] sm:$0xff] %vm483, 0.0
      %3328 = vst.msk [vmem:[#allocation5 + $0x10] sm:$0xff] %vm483, 0.0
      %3329 = vst.msk [vmem:[#allocation5 + $0x18] sm:$0xff] %vm483, 0.0
      %3330 = vst.msk [vmem:[#allocation5 + $0x20] sm:$0xff] %vm483, 0.0
      %3331 = vst.msk [vmem:[#allocation5 + $0x28] sm:$0xff] %vm483, 0.0
      %3332 = vst.msk [vmem:[#allocation5 + $0x30] sm:$0xff] %vm483, 0.0
      %3333 = vst.msk [vmem:[#allocation5 + $0x38] sm:$0xff] %vm483, 0.0
      %3334 = vst.msk [vmem:[#allocation5 + $0x40] sm:$0xff] %vm483, 0.0
      %3335 = vst.msk [vmem:[#allocation5 + $0x48] sm:$0xff] %vm483, 0.0
      %3336 = vst.msk [vmem:[#allocation5 + $0x50] sm:$0xff] %vm483, 0.0
      %3337 = vst.msk [vmem:[#allocation5 + $0x58] sm:$0xff] %vm483, 0.0
      %3338 = vst.msk [vmem:[#allocation5 + $0x60] sm:$0xff] %vm483, 0.0
      %3339 = vst.msk [vmem:[#allocation5 + $0x68] sm:$0xff] %vm483, 0.0
      %3340 = vst.msk [vmem:[#allocation5 + $0x70] sm:$0xff] %vm483, 0.0
      %3341 = vst.msk [vmem:[#allocation5 + $0x78] sm:$0xff] %vm483, 0.0
      %3342 = vst.msk [vmem:[#allocation5 + $0x80] sm:$0xff] %vm483, 0.0
      %3343 = vst.msk [vmem:[#allocation5 + $0x88] sm:$0xff] %vm483, 0.0
      %3344 = vst.msk [vmem:[#allocation5 + $0x90] sm:$0xff] %vm483, 0.0
      %3345 = vst.msk [vmem:[#allocation5 + $0x98] sm:$0xff] %vm483, 0.0
      %3346 = vst.msk [vmem:[#allocation5 + $0xa0] sm:$0xff] %vm483, 0.0
      %3347 = vst.msk [vmem:[#allocation5 + $0xa8] sm:$0xff] %vm483, 0.0
      %3348 = vst.msk [vmem:[#allocation5 + $0xb0] sm:$0xff] %vm483, 0.0
      %3349 = vst.msk [vmem:[#allocation5 + $0xb8] sm:$0xff] %vm483, 0.0
      %3350 = vst.msk [vmem:[#allocation5 + $0xc0] sm:$0xff] %vm483, 0.0
      %3351 = vst.msk [vmem:[#allocation5 + $0xc8] sm:$0xff] %vm483, 0.0
      %3352 = vst.msk [vmem:[#allocation5 + $0xd0] sm:$0xff] %vm483, 0.0
      %3353 = vst.msk [vmem:[#allocation5 + $0xd8] sm:$0xff] %vm483, 0.0
      %3354 = vst.msk [vmem:[#allocation5 + $0xe0] sm:$0xff] %vm483, 0.0
      %3355 = vst.msk [vmem:[#allocation5 + $0xe8] sm:$0xff] %vm483, 0.0
      %3356 = vst.msk [vmem:[#allocation5 + $0xf0] sm:$0xff] %vm483, 0.0
      %3357 = vst.msk [vmem:[#allocation5 + $0xf8] sm:$0xff] %vm483, 0.0
      %3358 = vst.msk [vmem:[#allocation5 + $0x100] sm:$0xff] %vm483, 0.0
      %3359 = vst.msk [vmem:[#allocation5 + $0x108] sm:$0xff] %vm483, 0.0
      %3360 = vst.msk [vmem:[#allocation5 + $0x110] sm:$0xff] %vm483, 0.0
      %3361 = vst.msk [vmem:[#allocation5 + $0x118] sm:$0xff] %vm483, 0.0
      %3362 = vst.msk [vmem:[#allocation5 + $0x120] sm:$0xff] %vm483, 0.0
      %3363 = vst.msk [vmem:[#allocation5 + $0x128] sm:$0xff] %vm483, 0.0
      %3364 = vst.msk [vmem:[#allocation5 + $0x130] sm:$0xff] %vm483, 0.0
      %3365 = vst.msk [vmem:[#allocation5 + $0x138] sm:$0xff] %vm483, 0.0
      %3366 = vst.msk [vmem:[#allocation5 + $0x140] sm:$0xff] %vm483, 0.0
      %3367 = vst.msk [vmem:[#allocation5 + $0x148] sm:$0xff] %vm483, 0.0
      %3368 = vst.msk [vmem:[#allocation5 + $0x150] sm:$0x3f] %vm526, 0.0
      %3369 = vst.msk [vmem:[#allocation5 + $0x13] sm:$0xff] %vm483, %v3254
      %3370 = vst.msk [vmem:[#allocation5 + $0x1b] sm:$0xff] %vm483, %v3255
      %3371 = vst.msk [vmem:[#allocation5 + $0x23] sm:$0xff] %vm483, %v3256
      %3372 = vst.msk [vmem:[#allocation5 + $0x2b] sm:$0xff] %vm483, %v3257
      %3373 = vst.msk [vmem:[#allocation5 + $0x33] sm:$0xff] %vm483, %v3258
      %3374 = vst.msk [vmem:[#allocation5 + $0x3b] sm:$0xff] %vm483, %v3259
      %3375 = vst.msk [vmem:[#allocation5 + $0x43] sm:$0xff] %vm483, %v3260
      %3376 = vst.msk [vmem:[#allocation5 + $0x4b] sm:$0xff] %vm483, %v3261
      %3377 = vst.msk [vmem:[#allocation5 + $0x53] sm:$0xff] %vm483, %v3262
      %3378 = vst.msk [vmem:[#allocation5 + $0x5b] sm:$0xff] %vm483, %v3263
      %3379 = vst.msk [vmem:[#allocation5 + $0x63] sm:$0xff] %vm483, %v3264
      %3380 = vst.msk [vmem:[#allocation5 + $0x6b] sm:$0xff] %vm483, %v3265
      %3381 = vst.msk [vmem:[#allocation5 + $0x73] sm:$0xff] %vm483, %v3266
      %3382 = vst.msk [vmem:[#allocation5 + $0x7b] sm:$0xff] %vm483, %v3267
      %3383 = vst.msk [vmem:[#allocation5 + $0x83] sm:$0xff] %vm483, %v3268
      %3384 = vst.msk [vmem:[#allocation5 + $0x8b] sm:$0xff] %vm483, %v3269
      %3385 = vst.msk [vmem:[#allocation5 + $0x93] sm:$0xff] %vm483, %v3270
      %3386 = vst.msk [vmem:[#allocation5 + $0x9b] sm:$0xff] %vm483, %v3271
      %3387 = vst.msk [vmem:[#allocation5 + $0xa3] sm:$0xff] %vm483, %v3272
      %3388 = vst.msk [vmem:[#allocation5 + $0xab] sm:$0xff] %vm483, %v3273
      %3389 = vst.msk [vmem:[#allocation5 + $0xb3] sm:$0xff] %vm483, %v3274
      %3390 = vst.msk [vmem:[#allocation5 + $0xbb] sm:$0xff] %vm483, %v3275
      %3391 = vst.msk [vmem:[#allocation5 + $0xc3] sm:$0xff] %vm483, %v3276
      %3392 = vst.msk [vmem:[#allocation5 + $0xcb] sm:$0xff] %vm483, %v3277
      %3393 = vst.msk [vmem:[#allocation5 + $0xd3] sm:$0xff] %vm483, %v3278
      %3394 = vst.msk [vmem:[#allocation5 + $0xdb] sm:$0xff] %vm483, %v3279
      %3395 = vst.msk [vmem:[#allocation5 + $0xe3] sm:$0xff] %vm483, %v3280
      %3396 = vst.msk [vmem:[#allocation5 + $0xeb] sm:$0xff] %vm483, %v3281
      %3397 = vst.msk [vmem:[#allocation5 + $0xf3] sm:$0xff] %vm483, %v3282
      %3398 = vst.msk [vmem:[#allocation5 + $0xfb] sm:$0xff] %vm483, %v3283
      %3399 = vst.msk [vmem:[#allocation5 + $0x103] sm:$0xff] %vm483, %v3284
      %3400 = vst.msk [vmem:[#allocation5 + $0x10b] sm:$0xff] %vm483, %v3285
      %3401 = vst.msk [vmem:[#allocation5 + $0x113] sm:$0xff] %vm483, %v3286
      %3402 = vst.msk [vmem:[#allocation5 + $0x11b] sm:$0xff] %vm483, %v3287
      %3403 = vst.msk [vmem:[#allocation5 + $0x123] sm:$0xff] %vm483, %v3288
      %3404 = vst.msk [vmem:[#allocation5 + $0x12b] sm:$0xff] %vm483, %v3289
      %v3405 = vld [vmem:[#allocation5] sm:$0xff]
      %v3406 = vld [vmem:[#allocation5 + $0x8] sm:$0xff]
      %v3407 = vld [vmem:[#allocation5 + $0x10] sm:$0xff]
      %v3408 = vld [vmem:[#allocation5 + $0x18] sm:$0xff]
      %v3409 = vld [vmem:[#allocation5 + $0x20] sm:$0xff]
      %v3410 = vld [vmem:[#allocation5 + $0x28] sm:$0xff]
      %v3411 = vld [vmem:[#allocation5 + $0x30] sm:$0xff]
      %v3412 = vld [vmem:[#allocation5 + $0x38] sm:$0xff]
      %v3413 = vld [vmem:[#allocation5 + $0x40] sm:$0xff]
      %v3414 = vld [vmem:[#allocation5 + $0x48] sm:$0xff]
      %v3415 = vld [vmem:[#allocation5 + $0x50] sm:$0xff]
      %v3416 = vld [vmem:[#allocation5 + $0x58] sm:$0xff]
      %v3417 = vld [vmem:[#allocation5 + $0x60] sm:$0xff]
      %v3418 = vld [vmem:[#allocation5 + $0x68] sm:$0xff]
      %v3419 = vld [vmem:[#allocation5 + $0x70] sm:$0xff]
      %v3420 = vld [vmem:[#allocation5 + $0x78] sm:$0xff]
      %v3421 = vld [vmem:[#allocation5 + $0x80] sm:$0xff]
      %v3422 = vld [vmem:[#allocation5 + $0x88] sm:$0xff]
      %v3423 = vld [vmem:[#allocation5 + $0x90] sm:$0xff]
      %v3424 = vld [vmem:[#allocation5 + $0x98] sm:$0xff]
      %v3425 = vld [vmem:[#allocation5 + $0xa0] sm:$0xff]
      %v3426 = vld [vmem:[#allocation5 + $0xa8] sm:$0xff]
      %v3427 = vld [vmem:[#allocation5 + $0xb0] sm:$0xff]
      %v3428 = vld [vmem:[#allocation5 + $0xb8] sm:$0xff]
      %v3429 = vld [vmem:[#allocation5 + $0xc0] sm:$0xff]
      %v3430 = vld [vmem:[#allocation5 + $0xc8] sm:$0xff]
      %v3431 = vld [vmem:[#allocation5 + $0xd0] sm:$0xff]
      %v3432 = vld [vmem:[#allocation5 + $0xd8] sm:$0xff]
      %v3433 = vld [vmem:[#allocation5 + $0xe0] sm:$0xff]
      %v3434 = vld [vmem:[#allocation5 + $0xe8] sm:$0xff]
      %v3435 = vld [vmem:[#allocation5 + $0xf0] sm:$0xff]
      %v3436 = vld [vmem:[#allocation5 + $0xf8] sm:$0xff]
      %v3437 = vld [vmem:[#allocation5 + $0x100] sm:$0xff]
      %v3438 = vld [vmem:[#allocation5 + $0x108] sm:$0xff]
      %v3439 = vld [vmem:[#allocation5 + $0x110] sm:$0xff]
      %v3440 = vld [vmem:[#allocation5 + $0x118] sm:$0xff]
      %3441 = vst.msk [vmem:[#allocation4] sm:$0xff] %vm483, %v3405
      %3442 = vst.msk [vmem:[#allocation4 + $0x8] sm:$0xff] %vm483, %v3406
      %3443 = vst.msk [vmem:[#allocation4 + $0x10] sm:$0xff] %vm483, %v3407
      %3444 = vst.msk [vmem:[#allocation4 + $0x18] sm:$0xff] %vm483, %v3408
      %3445 = vst.msk [vmem:[#allocation4 + $0x20] sm:$0xff] %vm483, %v3409
      %3446 = vst.msk [vmem:[#allocation4 + $0x28] sm:$0xff] %vm483, %v3410
      %3447 = vst.msk [vmem:[#allocation4 + $0x30] sm:$0xff] %vm483, %v3411
      %3448 = vst.msk [vmem:[#allocation4 + $0x38] sm:$0xff] %vm483, %v3412
      %3449 = vst.msk [vmem:[#allocation4 + $0x40] sm:$0xff] %vm483, %v3413
      %3450 = vst.msk [vmem:[#allocation4 + $0x48] sm:$0xff] %vm483, %v3414
      %3451 = vst.msk [vmem:[#allocation4 + $0x50] sm:$0xff] %vm483, %v3415
      %3452 = vst.msk [vmem:[#allocation4 + $0x58] sm:$0xff] %vm483, %v3416
      %3453 = vst.msk [vmem:[#allocation4 + $0x60] sm:$0xff] %vm483, %v3417
      %3454 = vst.msk [vmem:[#allocation4 + $0x68] sm:$0xff] %vm483, %v3418
      %3455 = vst.msk [vmem:[#allocation4 + $0x70] sm:$0xff] %vm483, %v3419
      %3456 = vst.msk [vmem:[#allocation4 + $0x78] sm:$0xff] %vm483, %v3420
      %3457 = vst.msk [vmem:[#allocation4 + $0x80] sm:$0xff] %vm483, %v3421
      %3458 = vst.msk [vmem:[#allocation4 + $0x88] sm:$0xff] %vm483, %v3422
      %3459 = vst.msk [vmem:[#allocation4 + $0x90] sm:$0xff] %vm483, %v3423
      %3460 = vst.msk [vmem:[#allocation4 + $0x98] sm:$0xff] %vm483, %v3424
      %3461 = vst.msk [vmem:[#allocation4 + $0xa0] sm:$0xff] %vm483, %v3425
      %3462 = vst.msk [vmem:[#allocation4 + $0xa8] sm:$0xff] %vm483, %v3426
      %3463 = vst.msk [vmem:[#allocation4 + $0xb0] sm:$0xff] %vm483, %v3427
      %3464 = vst.msk [vmem:[#allocation4 + $0xb8] sm:$0xff] %vm483, %v3428
      %3465 = vst.msk [vmem:[#allocation4 + $0xc0] sm:$0xff] %vm483, %v3429
      %3466 = vst.msk [vmem:[#allocation4 + $0xc8] sm:$0xff] %vm483, %v3430
      %3467 = vst.msk [vmem:[#allocation4 + $0xd0] sm:$0xff] %vm483, %v3431
      %3468 = vst.msk [vmem:[#allocation4 + $0xd8] sm:$0xff] %vm483, %v3432
      %3469 = vst.msk [vmem:[#allocation4 + $0xe0] sm:$0xff] %vm483, %v3433
      %3470 = vst.msk [vmem:[#allocation4 + $0xe8] sm:$0xff] %vm483, %v3434
      %3471 = vst.msk [vmem:[#allocation4 + $0xf0] sm:$0xff] %vm483, %v3435
      %3472 = vst.msk [vmem:[#allocation4 + $0xf8] sm:$0xff] %vm483, %v3436
      %3473 = vst.msk [vmem:[#allocation4 + $0x100] sm:$0xff] %vm483, %v3437
      %3474 = vst.msk [vmem:[#allocation4 + $0x108] sm:$0xff] %vm483, %v3438
      %3475 = vst.msk [vmem:[#allocation4 + $0x110] sm:$0xff] %vm483, %v3439
      %3476 = vst.msk [vmem:[#allocation4 + $0x118] sm:$0xff] %vm483, %v3440
      %v3477 = vld [vmem:[#allocation5 + $0x1] sm:$0xff]
      %v3478 = vld [vmem:[#allocation5 + $0x9] sm:$0xff]
      %v3479 = vld [vmem:[#allocation5 + $0x11] sm:$0xff]
      %v3480 = vld [vmem:[#allocation5 + $0x19] sm:$0xff]
      %v3481 = vld [vmem:[#allocation5 + $0x21] sm:$0xff]
      %v3482 = vld [vmem:[#allocation5 + $0x29] sm:$0xff]
      %v3483 = vld [vmem:[#allocation5 + $0x31] sm:$0xff]
      %v3484 = vld [vmem:[#allocation5 + $0x39] sm:$0xff]
      %v3485 = vld [vmem:[#allocation5 + $0x41] sm:$0xff]
      %v3486 = vld [vmem:[#allocation5 + $0x49] sm:$0xff]
      %v3487 = vld [vmem:[#allocation5 + $0x51] sm:$0xff]
      %v3488 = vld [vmem:[#allocation5 + $0x59] sm:$0xff]
      %v3489 = vld [vmem:[#allocation5 + $0x61] sm:$0xff]
      %v3490 = vld [vmem:[#allocation5 + $0x69] sm:$0xff]
      %v3491 = vld [vmem:[#allocation5 + $0x71] sm:$0xff]
      %v3492 = vld [vmem:[#allocation5 + $0x79] sm:$0xff]
      %v3493 = vld [vmem:[#allocation5 + $0x81] sm:$0xff]
      %v3494 = vld [vmem:[#allocation5 + $0x89] sm:$0xff]
      %v3495 = vld [vmem:[#allocation5 + $0x91] sm:$0xff]
      %v3496 = vld [vmem:[#allocation5 + $0x99] sm:$0xff]
      %v3497 = vld [vmem:[#allocation5 + $0xa1] sm:$0xff]
      %v3498 = vld [vmem:[#allocation5 + $0xa9] sm:$0xff]
      %v3499 = vld [vmem:[#allocation5 + $0xb1] sm:$0xff]
      %v3500 = vld [vmem:[#allocation5 + $0xb9] sm:$0xff]
      %v3501 = vld [vmem:[#allocation5 + $0xc1] sm:$0xff]
      %v3502 = vld [vmem:[#allocation5 + $0xc9] sm:$0xff]
      %v3503 = vld [vmem:[#allocation5 + $0xd1] sm:$0xff]
      %v3504 = vld [vmem:[#allocation5 + $0xd9] sm:$0xff]
      %v3505 = vld [vmem:[#allocation5 + $0xe1] sm:$0xff]
      %v3506 = vld [vmem:[#allocation5 + $0xe9] sm:$0xff]
      %v3507 = vld [vmem:[#allocation5 + $0xf1] sm:$0xff]
      %v3508 = vld [vmem:[#allocation5 + $0xf9] sm:$0xff]
      %v3509 = vld [vmem:[#allocation5 + $0x101] sm:$0xff]
      %v3510 = vld [vmem:[#allocation5 + $0x109] sm:$0xff]
      %v3511 = vld [vmem:[#allocation5 + $0x111] sm:$0xff]
      %v3512 = vld [vmem:[#allocation5 + $0x119] sm:$0xff]
      %3549 = vrot.lane.b32.xlu0 %v3477, 4
      %v3550 = vpop.permute.xlu0 %3549
      %3551 = vrot.lane.b32.xlu0 %v3478, 4
      %v3552 = vpop.permute.xlu0 %3551
      %3553 = vrot.lane.b32.xlu0 %v3479, 4
      %v3554 = vpop.permute.xlu0 %3553
      %3555 = vrot.lane.b32.xlu0 %v3480, 4
      %v3556 = vpop.permute.xlu0 %3555
      %3557 = vrot.lane.b32.xlu0 %v3481, 4
      %v3558 = vpop.permute.xlu0 %3557
      %3559 = vrot.lane.b32.xlu0 %v3482, 4
      %v3560 = vpop.permute.xlu0 %3559
      %3561 = vrot.lane.b32.xlu0 %v3483, 4
      %v3562 = vpop.permute.xlu0 %3561
      %3563 = vrot.lane.b32.xlu0 %v3484, 4
      %v3564 = vpop.permute.xlu0 %3563
      %3565 = vrot.lane.b32.xlu0 %v3485, 4
      %v3566 = vpop.permute.xlu0 %3565
      %3567 = vrot.lane.b32.xlu0 %v3486, 4
      %v3568 = vpop.permute.xlu0 %3567
      %3569 = vrot.lane.b32.xlu0 %v3487, 4
      %v3570 = vpop.permute.xlu0 %3569
      %3571 = vrot.lane.b32.xlu0 %v3488, 4
      %v3572 = vpop.permute.xlu0 %3571
      %3573 = vrot.lane.b32.xlu0 %v3489, 4
      %v3574 = vpop.permute.xlu0 %3573
      %3575 = vrot.lane.b32.xlu0 %v3490, 4
      %v3576 = vpop.permute.xlu0 %3575
      %3577 = vrot.lane.b32.xlu0 %v3491, 4
      %v3578 = vpop.permute.xlu0 %3577
      %3579 = vrot.lane.b32.xlu0 %v3492, 4
      %v3580 = vpop.permute.xlu0 %3579
      %3581 = vrot.lane.b32.xlu0 %v3493, 4
      %v3582 = vpop.permute.xlu0 %3581
      %3583 = vrot.lane.b32.xlu0 %v3494, 4
      %v3584 = vpop.permute.xlu0 %3583
      %3585 = vrot.lane.b32.xlu0 %v3495, 4
      %v3586 = vpop.permute.xlu0 %3585
      %3587 = vrot.lane.b32.xlu0 %v3496, 4
      %v3588 = vpop.permute.xlu0 %3587
      %3589 = vrot.lane.b32.xlu0 %v3497, 4
      %v3590 = vpop.permute.xlu0 %3589
      %3591 = vrot.lane.b32.xlu0 %v3498, 4
      %v3592 = vpop.permute.xlu0 %3591
      %3593 = vrot.lane.b32.xlu0 %v3499, 4
      %v3594 = vpop.permute.xlu0 %3593
      %3595 = vrot.lane.b32.xlu0 %v3500, 4
      %v3596 = vpop.permute.xlu0 %3595
      %3597 = vrot.lane.b32.xlu0 %v3501, 4
      %v3598 = vpop.permute.xlu0 %3597
      %3599 = vrot.lane.b32.xlu0 %v3502, 4
      %v3600 = vpop.permute.xlu0 %3599
      %3601 = vrot.lane.b32.xlu0 %v3503, 4
      %v3602 = vpop.permute.xlu0 %3601
      %3603 = vrot.lane.b32.xlu0 %v3504, 4
      %v3604 = vpop.permute.xlu0 %3603
      %3605 = vrot.lane.b32.xlu0 %v3505, 4
      %v3606 = vpop.permute.xlu0 %3605
      %3607 = vrot.lane.b32.xlu0 %v3506, 4
      %v3608 = vpop.permute.xlu0 %3607
      %3609 = vrot.lane.b32.xlu0 %v3507, 4
      %v3610 = vpop.permute.xlu0 %3609
      %3611 = vrot.lane.b32.xlu0 %v3508, 4
      %v3612 = vpop.permute.xlu0 %3611
      %3613 = vrot.lane.b32.xlu0 %v3509, 4
      %v3614 = vpop.permute.xlu0 %3613
      %3615 = vrot.lane.b32.xlu0 %v3510, 4
      %v3616 = vpop.permute.xlu0 %3615
      %3617 = vrot.lane.b32.xlu0 %v3511, 4
      %v3618 = vpop.permute.xlu0 %3617
      %3619 = vrot.lane.b32.xlu0 %v3512, 4
      %v3620 = vpop.permute.xlu0 %3619
      %3657 = vst.msk [vmem:[#allocation4] sm:$0xff] %vm780, %v3550
      %3658 = vst.msk [vmem:[#allocation4 + $0x8] sm:$0xff] %vm780, %v3552
      %3659 = vst.msk [vmem:[#allocation4 + $0x10] sm:$0xff] %vm780, %v3554
      %3660 = vst.msk [vmem:[#allocation4 + $0x18] sm:$0xff] %vm780, %v3556
      %3661 = vst.msk [vmem:[#allocation4 + $0x20] sm:$0xff] %vm780, %v3558
      %3662 = vst.msk [vmem:[#allocation4 + $0x28] sm:$0xff] %vm780, %v3560
      %3663 = vst.msk [vmem:[#allocation4 + $0x30] sm:$0xff] %vm780, %v3562
      %3664 = vst.msk [vmem:[#allocation4 + $0x38] sm:$0xff] %vm780, %v3564
      %3665 = vst.msk [vmem:[#allocation4 + $0x40] sm:$0xff] %vm780, %v3566
      %3666 = vst.msk [vmem:[#allocation4 + $0x48] sm:$0xff] %vm780, %v3568
      %3667 = vst.msk [vmem:[#allocation4 + $0x50] sm:$0xff] %vm780, %v3570
      %3668 = vst.msk [vmem:[#allocation4 + $0x58] sm:$0xff] %vm780, %v3572
      %3669 = vst.msk [vmem:[#allocation4 + $0x60] sm:$0xff] %vm780, %v3574
      %3670 = vst.msk [vmem:[#allocation4 + $0x68] sm:$0xff] %vm780, %v3576
      %3671 = vst.msk [vmem:[#allocation4 + $0x70] sm:$0xff] %vm780, %v3578
      %3672 = vst.msk [vmem:[#allocation4 + $0x78] sm:$0xff] %vm780, %v3580
      %3673 = vst.msk [vmem:[#allocation4 + $0x80] sm:$0xff] %vm780, %v3582
      %3674 = vst.msk [vmem:[#allocation4 + $0x88] sm:$0xff] %vm780, %v3584
      %3675 = vst.msk [vmem:[#allocation4 + $0x90] sm:$0xff] %vm780, %v3586
      %3676 = vst.msk [vmem:[#allocation4 + $0x98] sm:$0xff] %vm780, %v3588
      %3677 = vst.msk [vmem:[#allocation4 + $0xa0] sm:$0xff] %vm780, %v3590
      %3678 = vst.msk [vmem:[#allocation4 + $0xa8] sm:$0xff] %vm780, %v3592
      %3679 = vst.msk [vmem:[#allocation4 + $0xb0] sm:$0xff] %vm780, %v3594
      %3680 = vst.msk [vmem:[#allocation4 + $0xb8] sm:$0xff] %vm780, %v3596
      %3681 = vst.msk [vmem:[#allocation4 + $0xc0] sm:$0xff] %vm780, %v3598
      %3682 = vst.msk [vmem:[#allocation4 + $0xc8] sm:$0xff] %vm780, %v3600
      %3683 = vst.msk [vmem:[#allocation4 + $0xd0] sm:$0xff] %vm780, %v3602
      %3684 = vst.msk [vmem:[#allocation4 + $0xd8] sm:$0xff] %vm780, %v3604
      %3685 = vst.msk [vmem:[#allocation4 + $0xe0] sm:$0xff] %vm780, %v3606
      %3686 = vst.msk [vmem:[#allocation4 + $0xe8] sm:$0xff] %vm780, %v3608
      %3687 = vst.msk [vmem:[#allocation4 + $0xf0] sm:$0xff] %vm780, %v3610
      %3688 = vst.msk [vmem:[#allocation4 + $0xf8] sm:$0xff] %vm780, %v3612
      %3689 = vst.msk [vmem:[#allocation4 + $0x100] sm:$0xff] %vm780, %v3614
      %3690 = vst.msk [vmem:[#allocation4 + $0x108] sm:$0xff] %vm780, %v3616
      %3691 = vst.msk [vmem:[#allocation4 + $0x110] sm:$0xff] %vm780, %v3618
      %3692 = vst.msk [vmem:[#allocation4 + $0x118] sm:$0xff] %vm780, %v3620
      %v3693 = vld [vmem:[#allocation5 + $0x2] sm:$0xff]
      %v3694 = vld [vmem:[#allocation5 + $0xa] sm:$0xff]
      %v3695 = vld [vmem:[#allocation5 + $0x12] sm:$0xff]
      %v3696 = vld [vmem:[#allocation5 + $0x1a] sm:$0xff]
      %v3697 = vld [vmem:[#allocation5 + $0x22] sm:$0xff]
      %v3698 = vld [vmem:[#allocation5 + $0x2a] sm:$0xff]
      %v3699 = vld [vmem:[#allocation5 + $0x32] sm:$0xff]
      %v3700 = vld [vmem:[#allocation5 + $0x3a] sm:$0xff]
      %v3701 = vld [vmem:[#allocation5 + $0x42] sm:$0xff]
      %v3702 = vld [vmem:[#allocation5 + $0x4a] sm:$0xff]
      %v3703 = vld [vmem:[#allocation5 + $0x52] sm:$0xff]
      %v3704 = vld [vmem:[#allocation5 + $0x5a] sm:$0xff]
      %v3705 = vld [vmem:[#allocation5 + $0x62] sm:$0xff]
      %v3706 = vld [vmem:[#allocation5 + $0x6a] sm:$0xff]
      %v3707 = vld [vmem:[#allocation5 + $0x72] sm:$0xff]
      %v3708 = vld [vmem:[#allocation5 + $0x7a] sm:$0xff]
      %v3709 = vld [vmem:[#allocation5 + $0x82] sm:$0xff]
      %v3710 = vld [vmem:[#allocation5 + $0x8a] sm:$0xff]
      %v3711 = vld [vmem:[#allocation5 + $0x92] sm:$0xff]
      %v3712 = vld [vmem:[#allocation5 + $0x9a] sm:$0xff]
      %v3713 = vld [vmem:[#allocation5 + $0xa2] sm:$0xff]
      %v3714 = vld [vmem:[#allocation5 + $0xaa] sm:$0xff]
      %v3715 = vld [vmem:[#allocation5 + $0xb2] sm:$0xff]
      %v3716 = vld [vmem:[#allocation5 + $0xba] sm:$0xff]
      %v3717 = vld [vmem:[#allocation5 + $0xc2] sm:$0xff]
      %v3718 = vld [vmem:[#allocation5 + $0xca] sm:$0xff]
      %v3719 = vld [vmem:[#allocation5 + $0xd2] sm:$0xff]
      %v3720 = vld [vmem:[#allocation5 + $0xda] sm:$0xff]
      %v3721 = vld [vmem:[#allocation5 + $0xe2] sm:$0xff]
      %v3722 = vld [vmem:[#allocation5 + $0xea] sm:$0xff]
      %v3723 = vld [vmem:[#allocation5 + $0xf2] sm:$0xff]
      %v3724 = vld [vmem:[#allocation5 + $0xfa] sm:$0xff]
      %v3725 = vld [vmem:[#allocation5 + $0x102] sm:$0xff]
      %v3726 = vld [vmem:[#allocation5 + $0x10a] sm:$0xff]
      %v3727 = vld [vmem:[#allocation5 + $0x112] sm:$0xff]
      %v3728 = vld [vmem:[#allocation5 + $0x11a] sm:$0xff]
      %3765 = vrot.lane.b32.xlu0 %v3693, 8
      %v3766 = vpop.permute.xlu0 %3765
      %3767 = vrot.lane.b32.xlu0 %v3694, 8
      %v3768 = vpop.permute.xlu0 %3767
      %3769 = vrot.lane.b32.xlu0 %v3695, 8
      %v3770 = vpop.permute.xlu0 %3769
      %3771 = vrot.lane.b32.xlu0 %v3696, 8
      %v3772 = vpop.permute.xlu0 %3771
      %3773 = vrot.lane.b32.xlu0 %v3697, 8
      %v3774 = vpop.permute.xlu0 %3773
      %3775 = vrot.lane.b32.xlu0 %v3698, 8
      %v3776 = vpop.permute.xlu0 %3775
      %3777 = vrot.lane.b32.xlu0 %v3699, 8
      %v3778 = vpop.permute.xlu0 %3777
      %3779 = vrot.lane.b32.xlu0 %v3700, 8
      %v3780 = vpop.permute.xlu0 %3779
      %3781 = vrot.lane.b32.xlu0 %v3701, 8
      %v3782 = vpop.permute.xlu0 %3781
      %3783 = vrot.lane.b32.xlu0 %v3702, 8
      %v3784 = vpop.permute.xlu0 %3783
      %3785 = vrot.lane.b32.xlu0 %v3703, 8
      %v3786 = vpop.permute.xlu0 %3785
      %3787 = vrot.lane.b32.xlu0 %v3704, 8
      %v3788 = vpop.permute.xlu0 %3787
      %3789 = vrot.lane.b32.xlu0 %v3705, 8
      %v3790 = vpop.permute.xlu0 %3789
      %3791 = vrot.lane.b32.xlu0 %v3706, 8
      %v3792 = vpop.permute.xlu0 %3791
      %3793 = vrot.lane.b32.xlu0 %v3707, 8
      %v3794 = vpop.permute.xlu0 %3793
      %3795 = vrot.lane.b32.xlu0 %v3708, 8
      %v3796 = vpop.permute.xlu0 %3795
      %3797 = vrot.lane.b32.xlu0 %v3709, 8
      %v3798 = vpop.permute.xlu0 %3797
      %3799 = vrot.lane.b32.xlu0 %v3710, 8
      %v3800 = vpop.permute.xlu0 %3799
      %3801 = vrot.lane.b32.xlu0 %v3711, 8
      %v3802 = vpop.permute.xlu0 %3801
      %3803 = vrot.lane.b32.xlu0 %v3712, 8
      %v3804 = vpop.permute.xlu0 %3803
      %3805 = vrot.lane.b32.xlu0 %v3713, 8
      %v3806 = vpop.permute.xlu0 %3805
      %3807 = vrot.lane.b32.xlu0 %v3714, 8
      %v3808 = vpop.permute.xlu0 %3807
      %3809 = vrot.lane.b32.xlu0 %v3715, 8
      %v3810 = vpop.permute.xlu0 %3809
      %3811 = vrot.lane.b32.xlu0 %v3716, 8
      %v3812 = vpop.permute.xlu0 %3811
      %3813 = vrot.lane.b32.xlu0 %v3717, 8
      %v3814 = vpop.permute.xlu0 %3813
      %3815 = vrot.lane.b32.xlu0 %v3718, 8
      %v3816 = vpop.permute.xlu0 %3815
      %3817 = vrot.lane.b32.xlu0 %v3719, 8
      %v3818 = vpop.permute.xlu0 %3817
      %3819 = vrot.lane.b32.xlu0 %v3720, 8
      %v3820 = vpop.permute.xlu0 %3819
      %3821 = vrot.lane.b32.xlu0 %v3721, 8
      %v3822 = vpop.permute.xlu0 %3821
      %3823 = vrot.lane.b32.xlu0 %v3722, 8
      %v3824 = vpop.permute.xlu0 %3823
      %3825 = vrot.lane.b32.xlu0 %v3723, 8
      %v3826 = vpop.permute.xlu0 %3825
      %3827 = vrot.lane.b32.xlu0 %v3724, 8
      %v3828 = vpop.permute.xlu0 %3827
      %3829 = vrot.lane.b32.xlu0 %v3725, 8
      %v3830 = vpop.permute.xlu0 %3829
      %3831 = vrot.lane.b32.xlu0 %v3726, 8
      %v3832 = vpop.permute.xlu0 %3831
      %3833 = vrot.lane.b32.xlu0 %v3727, 8
      %v3834 = vpop.permute.xlu0 %3833
      %3835 = vrot.lane.b32.xlu0 %v3728, 8
      %v3836 = vpop.permute.xlu0 %3835
      %3873 = vst.msk [vmem:[#allocation4] sm:$0xff] %vm997, %v3766
      %3874 = vst.msk [vmem:[#allocation4 + $0x8] sm:$0xff] %vm997, %v3768
      %3875 = vst.msk [vmem:[#allocation4 + $0x10] sm:$0xff] %vm997, %v3770
      %3876 = vst.msk [vmem:[#allocation4 + $0x18] sm:$0xff] %vm997, %v3772
      %3877 = vst.msk [vmem:[#allocation4 + $0x20] sm:$0xff] %vm997, %v3774
      %3878 = vst.msk [vmem:[#allocation4 + $0x28] sm:$0xff] %vm997, %v3776
      %3879 = vst.msk [vmem:[#allocation4 + $0x30] sm:$0xff] %vm997, %v3778
      %3880 = vst.msk [vmem:[#allocation4 + $0x38] sm:$0xff] %vm997, %v3780
      %3881 = vst.msk [vmem:[#allocation4 + $0x40] sm:$0xff] %vm997, %v3782
      %3882 = vst.msk [vmem:[#allocation4 + $0x48] sm:$0xff] %vm997, %v3784
      %3883 = vst.msk [vmem:[#allocation4 + $0x50] sm:$0xff] %vm997, %v3786
      %3884 = vst.msk [vmem:[#allocation4 + $0x58] sm:$0xff] %vm997, %v3788
      %3885 = vst.msk [vmem:[#allocation4 + $0x60] sm:$0xff] %vm997, %v3790
      %3886 = vst.msk [vmem:[#allocation4 + $0x68] sm:$0xff] %vm997, %v3792
      %3887 = vst.msk [vmem:[#allocation4 + $0x70] sm:$0xff] %vm997, %v3794
      %3888 = vst.msk [vmem:[#allocation4 + $0x78] sm:$0xff] %vm997, %v3796
      %3889 = vst.msk [vmem:[#allocation4 + $0x80] sm:$0xff] %vm997, %v3798
      %3890 = vst.msk [vmem:[#allocation4 + $0x88] sm:$0xff] %vm997, %v3800
      %3891 = vst.msk [vmem:[#allocation4 + $0x90] sm:$0xff] %vm997, %v3802
      %3892 = vst.msk [vmem:[#allocation4 + $0x98] sm:$0xff] %vm997, %v3804
      %3893 = vst.msk [vmem:[#allocation4 + $0xa0] sm:$0xff] %vm997, %v3806
      %3894 = vst.msk [vmem:[#allocation4 + $0xa8] sm:$0xff] %vm997, %v3808
      %3895 = vst.msk [vmem:[#allocation4 + $0xb0] sm:$0xff] %vm997, %v3810
      %3896 = vst.msk [vmem:[#allocation4 + $0xb8] sm:$0xff] %vm997, %v3812
      %3897 = vst.msk [vmem:[#allocation4 + $0xc0] sm:$0xff] %vm997, %v3814
      %3898 = vst.msk [vmem:[#allocation4 + $0xc8] sm:$0xff] %vm997, %v3816
      %3899 = vst.msk [vmem:[#allocation4 + $0xd0] sm:$0xff] %vm997, %v3818
      %3900 = vst.msk [vmem:[#allocation4 + $0xd8] sm:$0xff] %vm997, %v3820
      %3901 = vst.msk [vmem:[#allocation4 + $0xe0] sm:$0xff] %vm997, %v3822
      %3902 = vst.msk [vmem:[#allocation4 + $0xe8] sm:$0xff] %vm997, %v3824
      %3903 = vst.msk [vmem:[#allocation4 + $0xf0] sm:$0xff] %vm997, %v3826
      %3904 = vst.msk [vmem:[#allocation4 + $0xf8] sm:$0xff] %vm997, %v3828
      %3905 = vst.msk [vmem:[#allocation4 + $0x100] sm:$0xff] %vm997, %v3830
      %3906 = vst.msk [vmem:[#allocation4 + $0x108] sm:$0xff] %vm997, %v3832
      %3907 = vst.msk [vmem:[#allocation4 + $0x110] sm:$0xff] %vm997, %v3834
      %3908 = vst.msk [vmem:[#allocation4 + $0x118] sm:$0xff] %vm997, %v3836
      %v3909 = vld [vmem:[#allocation5 + $0x12] sm:$0xff]
      %v3910 = vld [vmem:[#allocation5 + $0x1a] sm:$0xff]
      %v3911 = vld [vmem:[#allocation5 + $0x22] sm:$0xff]
      %v3912 = vld [vmem:[#allocation5 + $0x2a] sm:$0xff]
      %v3913 = vld [vmem:[#allocation5 + $0x32] sm:$0xff]
      %v3914 = vld [vmem:[#allocation5 + $0x3a] sm:$0xff]
      %v3915 = vld [vmem:[#allocation5 + $0x42] sm:$0xff]
      %v3916 = vld [vmem:[#allocation5 + $0x4a] sm:$0xff]
      %v3917 = vld [vmem:[#allocation5 + $0x52] sm:$0xff]
      %v3918 = vld [vmem:[#allocation5 + $0x5a] sm:$0xff]
      %v3919 = vld [vmem:[#allocation5 + $0x62] sm:$0xff]
      %v3920 = vld [vmem:[#allocation5 + $0x6a] sm:$0xff]
      %v3921 = vld [vmem:[#allocation5 + $0x72] sm:$0xff]
      %v3922 = vld [vmem:[#allocation5 + $0x7a] sm:$0xff]
      %v3923 = vld [vmem:[#allocation5 + $0x82] sm:$0xff]
      %v3924 = vld [vmem:[#allocation5 + $0x8a] sm:$0xff]
      %v3925 = vld [vmem:[#allocation5 + $0x92] sm:$0xff]
      %v3926 = vld [vmem:[#allocation5 + $0x9a] sm:$0xff]
      %v3927 = vld [vmem:[#allocation5 + $0xa2] sm:$0xff]
      %v3928 = vld [vmem:[#allocation5 + $0xaa] sm:$0xff]
      %v3929 = vld [vmem:[#allocation5 + $0xb2] sm:$0xff]
      %v3930 = vld [vmem:[#allocation5 + $0xba] sm:$0xff]
      %v3931 = vld [vmem:[#allocation5 + $0xc2] sm:$0xff]
      %v3932 = vld [vmem:[#allocation5 + $0xca] sm:$0xff]
      %v3933 = vld [vmem:[#allocation5 + $0xd2] sm:$0xff]
      %v3934 = vld [vmem:[#allocation5 + $0xda] sm:$0xff]
      %v3935 = vld [vmem:[#allocation5 + $0xe2] sm:$0xff]
      %v3936 = vld [vmem:[#allocation5 + $0xea] sm:$0xff]
      %v3937 = vld [vmem:[#allocation5 + $0xf2] sm:$0xff]
      %v3938 = vld [vmem:[#allocation5 + $0xfa] sm:$0xff]
      %v3939 = vld [vmem:[#allocation5 + $0x102] sm:$0xff]
      %v3940 = vld [vmem:[#allocation5 + $0x10a] sm:$0xff]
      %v3941 = vld [vmem:[#allocation5 + $0x112] sm:$0xff]
      %v3942 = vld [vmem:[#allocation5 + $0x11a] sm:$0xff]
      %v3943 = vld [vmem:[#allocation5 + $0x122] sm:$0xff]
      %v3944 = vld [vmem:[#allocation5 + $0x12a] sm:$0xff]
      %3981 = vrot.lane.b32.xlu0 %v3909, 12
      %v3982 = vpop.permute.xlu0 %3981
      %3983 = vrot.lane.b32.xlu0 %v3910, 12
      %v3984 = vpop.permute.xlu0 %3983
      %3985 = vrot.lane.b32.xlu0 %v3911, 12
      %v3986 = vpop.permute.xlu0 %3985
      %3987 = vrot.lane.b32.xlu0 %v3912, 12
      %v3988 = vpop.permute.xlu0 %3987
      %3989 = vrot.lane.b32.xlu0 %v3913, 12
      %v3990 = vpop.permute.xlu0 %3989
      %3991 = vrot.lane.b32.xlu0 %v3914, 12
      %v3992 = vpop.permute.xlu0 %3991
      %3993 = vrot.lane.b32.xlu0 %v3915, 12
      %v3994 = vpop.permute.xlu0 %3993
      %3995 = vrot.lane.b32.xlu0 %v3916, 12
      %v3996 = vpop.permute.xlu0 %3995
      %3997 = vrot.lane.b32.xlu0 %v3917, 12
      %v3998 = vpop.permute.xlu0 %3997
      %3999 = vrot.lane.b32.xlu0 %v3918, 12
      %v4000 = vpop.permute.xlu0 %3999
      %4001 = vrot.lane.b32.xlu0 %v3919, 12
      %v4002 = vpop.permute.xlu0 %4001
      %4003 = vrot.lane.b32.xlu0 %v3920, 12
      %v4004 = vpop.permute.xlu0 %4003
      %4005 = vrot.lane.b32.xlu0 %v3921, 12
      %v4006 = vpop.permute.xlu0 %4005
      %4007 = vrot.lane.b32.xlu0 %v3922, 12
      %v4008 = vpop.permute.xlu0 %4007
      %4009 = vrot.lane.b32.xlu0 %v3923, 12
      %v4010 = vpop.permute.xlu0 %4009
      %4011 = vrot.lane.b32.xlu0 %v3924, 12
      %v4012 = vpop.permute.xlu0 %4011
      %4013 = vrot.lane.b32.xlu0 %v3925, 12
      %v4014 = vpop.permute.xlu0 %4013
      %4015 = vrot.lane.b32.xlu0 %v3926, 12
      %v4016 = vpop.permute.xlu0 %4015
      %4017 = vrot.lane.b32.xlu0 %v3927, 12
      %v4018 = vpop.permute.xlu0 %4017
      %4019 = vrot.lane.b32.xlu0 %v3928, 12
      %v4020 = vpop.permute.xlu0 %4019
      %4021 = vrot.lane.b32.xlu0 %v3929, 12
      %v4022 = vpop.permute.xlu0 %4021
      %4023 = vrot.lane.b32.xlu0 %v3930, 12
      %v4024 = vpop.permute.xlu0 %4023
      %4025 = vrot.lane.b32.xlu0 %v3931, 12
      %v4026 = vpop.permute.xlu0 %4025
      %4027 = vrot.lane.b32.xlu0 %v3932, 12
      %v4028 = vpop.permute.xlu0 %4027
      %4029 = vrot.lane.b32.xlu0 %v3933, 12
      %v4030 = vpop.permute.xlu0 %4029
      %4031 = vrot.lane.b32.xlu0 %v3934, 12
      %v4032 = vpop.permute.xlu0 %4031
      %4033 = vrot.lane.b32.xlu0 %v3935, 12
      %v4034 = vpop.permute.xlu0 %4033
      %4035 = vrot.lane.b32.xlu0 %v3936, 12
      %v4036 = vpop.permute.xlu0 %4035
      %4037 = vrot.lane.b32.xlu0 %v3937, 12
      %v4038 = vpop.permute.xlu0 %4037
      %4039 = vrot.lane.b32.xlu0 %v3938, 12
      %v4040 = vpop.permute.xlu0 %4039
      %4041 = vrot.lane.b32.xlu0 %v3939, 12
      %v4042 = vpop.permute.xlu0 %4041
      %4043 = vrot.lane.b32.xlu0 %v3940, 12
      %v4044 = vpop.permute.xlu0 %4043
      %4045 = vrot.lane.b32.xlu0 %v3941, 12
      %v4046 = vpop.permute.xlu0 %4045
      %4047 = vrot.lane.b32.xlu0 %v3942, 12
      %v4048 = vpop.permute.xlu0 %4047
      %4049 = vrot.lane.b32.xlu0 %v3943, 12
      %v4050 = vpop.permute.xlu0 %4049
      %4051 = vrot.lane.b32.xlu0 %v3944, 12
      %v4052 = vpop.permute.xlu0 %4051
      %4089 = vst.msk [vmem:[#allocation4] sm:$0xff] %vm1214, %v3982
      %4090 = vst.msk [vmem:[#allocation4 + $0x8] sm:$0xff] %vm1214, %v3984
      %4091 = vst.msk [vmem:[#allocation4 + $0x10] sm:$0xff] %vm1214, %v3986
      %4092 = vst.msk [vmem:[#allocation4 + $0x18] sm:$0xff] %vm1214, %v3988
      %4093 = vst.msk [vmem:[#allocation4 + $0x20] sm:$0xff] %vm1214, %v3990
      %4094 = vst.msk [vmem:[#allocation4 + $0x28] sm:$0xff] %vm1214, %v3992
      %4095 = vst.msk [vmem:[#allocation4 + $0x30] sm:$0xff] %vm1214, %v3994
      %4096 = vst.msk [vmem:[#allocation4 + $0x38] sm:$0xff] %vm1214, %v3996
      %4097 = vst.msk [vmem:[#allocation4 + $0x40] sm:$0xff] %vm1214, %v3998
      %4098 = vst.msk [vmem:[#allocation4 + $0x48] sm:$0xff] %vm1214, %v4000
      %4099 = vst.msk [vmem:[#allocation4 + $0x50] sm:$0xff] %vm1214, %v4002
      %4100 = vst.msk [vmem:[#allocation4 + $0x58] sm:$0xff] %vm1214, %v4004
      %4101 = vst.msk [vmem:[#allocation4 + $0x60] sm:$0xff] %vm1214, %v4006
      %4102 = vst.msk [vmem:[#allocation4 + $0x68] sm:$0xff] %vm1214, %v4008
      %4103 = vst.msk [vmem:[#allocation4 + $0x70] sm:$0xff] %vm1214, %v4010
      %4104 = vst.msk [vmem:[#allocation4 + $0x78] sm:$0xff] %vm1214, %v4012
      %4105 = vst.msk [vmem:[#allocation4 + $0x80] sm:$0xff] %vm1214, %v4014
      %4106 = vst.msk [vmem:[#allocation4 + $0x88] sm:$0xff] %vm1214, %v4016
      %4107 = vst.msk [vmem:[#allocation4 + $0x90] sm:$0xff] %vm1214, %v4018
      %4108 = vst.msk [vmem:[#allocation4 + $0x98] sm:$0xff] %vm1214, %v4020
      %4109 = vst.msk [vmem:[#allocation4 + $0xa0] sm:$0xff] %vm1214, %v4022
      %4110 = vst.msk [vmem:[#allocation4 + $0xa8] sm:$0xff] %vm1214, %v4024
      %4111 = vst.msk [vmem:[#allocation4 + $0xb0] sm:$0xff] %vm1214, %v4026
      %4112 = vst.msk [vmem:[#allocation4 + $0xb8] sm:$0xff] %vm1214, %v4028
      %4113 = vst.msk [vmem:[#allocation4 + $0xc0] sm:$0xff] %vm1214, %v4030
      %4114 = vst.msk [vmem:[#allocation4 + $0xc8] sm:$0xff] %vm1214, %v4032
      %4115 = vst.msk [vmem:[#allocation4 + $0xd0] sm:$0xff] %vm1214, %v4034
      %4116 = vst.msk [vmem:[#allocation4 + $0xd8] sm:$0xff] %vm1214, %v4036
      %4117 = vst.msk [vmem:[#allocation4 + $0xe0] sm:$0xff] %vm1214, %v4038
      %4118 = vst.msk [vmem:[#allocation4 + $0xe8] sm:$0xff] %vm1214, %v4040
      %4119 = vst.msk [vmem:[#allocation4 + $0xf0] sm:$0xff] %vm1214, %v4042
      %4120 = vst.msk [vmem:[#allocation4 + $0xf8] sm:$0xff] %vm1214, %v4044
      %4121 = vst.msk [vmem:[#allocation4 + $0x100] sm:$0xff] %vm1214, %v4046
      %4122 = vst.msk [vmem:[#allocation4 + $0x108] sm:$0xff] %vm1214, %v4048
      %4123 = vst.msk [vmem:[#allocation4 + $0x110] sm:$0xff] %vm1214, %v4050
      %4124 = vst.msk [vmem:[#allocation4 + $0x118] sm:$0xff] %vm1214, %v4052
      %v4125 = vld [vmem:[#allocation5 + $0x13] sm:$0xff]
      %v4126 = vld [vmem:[#allocation5 + $0x1b] sm:$0xff]
      %v4127 = vld [vmem:[#allocation5 + $0x23] sm:$0xff]
      %v4128 = vld [vmem:[#allocation5 + $0x2b] sm:$0xff]
      %v4129 = vld [vmem:[#allocation5 + $0x33] sm:$0xff]
      %v4130 = vld [vmem:[#allocation5 + $0x3b] sm:$0xff]
      %v4131 = vld [vmem:[#allocation5 + $0x43] sm:$0xff]
      %v4132 = vld [vmem:[#allocation5 + $0x4b] sm:$0xff]
      %v4133 = vld [vmem:[#allocation5 + $0x53] sm:$0xff]
      %v4134 = vld [vmem:[#allocation5 + $0x5b] sm:$0xff]
      %v4135 = vld [vmem:[#allocation5 + $0x63] sm:$0xff]
      %v4136 = vld [vmem:[#allocation5 + $0x6b] sm:$0xff]
      %v4137 = vld [vmem:[#allocation5 + $0x73] sm:$0xff]
      %v4138 = vld [vmem:[#allocation5 + $0x7b] sm:$0xff]
      %v4139 = vld [vmem:[#allocation5 + $0x83] sm:$0xff]
      %v4140 = vld [vmem:[#allocation5 + $0x8b] sm:$0xff]
      %v4141 = vld [vmem:[#allocation5 + $0x93] sm:$0xff]
      %v4142 = vld [vmem:[#allocation5 + $0x9b] sm:$0xff]
      %v4143 = vld [vmem:[#allocation5 + $0xa3] sm:$0xff]
      %v4144 = vld [vmem:[#allocation5 + $0xab] sm:$0xff]
      %v4145 = vld [vmem:[#allocation5 + $0xb3] sm:$0xff]
      %v4146 = vld [vmem:[#allocation5 + $0xbb] sm:$0xff]
      %v4147 = vld [vmem:[#allocation5 + $0xc3] sm:$0xff]
      %v4148 = vld [vmem:[#allocation5 + $0xcb] sm:$0xff]
      %v4149 = vld [vmem:[#allocation5 + $0xd3] sm:$0xff]
      %v4150 = vld [vmem:[#allocation5 + $0xdb] sm:$0xff]
      %v4151 = vld [vmem:[#allocation5 + $0xe3] sm:$0xff]
      %v4152 = vld [vmem:[#allocation5 + $0xeb] sm:$0xff]
      %v4153 = vld [vmem:[#allocation5 + $0xf3] sm:$0xff]
      %v4154 = vld [vmem:[#allocation5 + $0xfb] sm:$0xff]
      %v4155 = vld [vmem:[#allocation5 + $0x103] sm:$0xff]
      %v4156 = vld [vmem:[#allocation5 + $0x10b] sm:$0xff]
      %v4157 = vld [vmem:[#allocation5 + $0x113] sm:$0xff]
      %v4158 = vld [vmem:[#allocation5 + $0x11b] sm:$0xff]
      %v4159 = vld [vmem:[#allocation5 + $0x123] sm:$0xff]
      %v4160 = vld [vmem:[#allocation5 + $0x12b] sm:$0xff]
      %4197 = vrot.lane.b32.xlu0 %v4125, 16
      %v4198 = vpop.permute.xlu0 %4197
      %4199 = vrot.lane.b32.xlu0 %v4126, 16
      %v4200 = vpop.permute.xlu0 %4199
      %4201 = vrot.lane.b32.xlu0 %v4127, 16
      %v4202 = vpop.permute.xlu0 %4201
      %4203 = vrot.lane.b32.xlu0 %v4128, 16
      %v4204 = vpop.permute.xlu0 %4203
      %4205 = vrot.lane.b32.xlu0 %v4129, 16
      %v4206 = vpop.permute.xlu0 %4205
      %4207 = vrot.lane.b32.xlu0 %v4130, 16
      %v4208 = vpop.permute.xlu0 %4207
      %4209 = vrot.lane.b32.xlu0 %v4131, 16
      %v4210 = vpop.permute.xlu0 %4209
      %4211 = vrot.lane.b32.xlu0 %v4132, 16
      %v4212 = vpop.permute.xlu0 %4211
      %4213 = vrot.lane.b32.xlu0 %v4133, 16
      %v4214 = vpop.permute.xlu0 %4213
      %4215 = vrot.lane.b32.xlu0 %v4134, 16
      %v4216 = vpop.permute.xlu0 %4215
      %4217 = vrot.lane.b32.xlu0 %v4135, 16
      %v4218 = vpop.permute.xlu0 %4217
      %4219 = vrot.lane.b32.xlu0 %v4136, 16
      %v4220 = vpop.permute.xlu0 %4219
      %4221 = vrot.lane.b32.xlu0 %v4137, 16
      %v4222 = vpop.permute.xlu0 %4221
      %4223 = vrot.lane.b32.xlu0 %v4138, 16
      %v4224 = vpop.permute.xlu0 %4223
      %4225 = vrot.lane.b32.xlu0 %v4139, 16
      %v4226 = vpop.permute.xlu0 %4225
      %4227 = vrot.lane.b32.xlu0 %v4140, 16
      %v4228 = vpop.permute.xlu0 %4227
      %4229 = vrot.lane.b32.xlu0 %v4141, 16
      %v4230 = vpop.permute.xlu0 %4229
      %4231 = vrot.lane.b32.xlu0 %v4142, 16
      %v4232 = vpop.permute.xlu0 %4231
      %4233 = vrot.lane.b32.xlu0 %v4143, 16
      %v4234 = vpop.permute.xlu0 %4233
      %4235 = vrot.lane.b32.xlu0 %v4144, 16
      %v4236 = vpop.permute.xlu0 %4235
      %4237 = vrot.lane.b32.xlu0 %v4145, 16
      %v4238 = vpop.permute.xlu0 %4237
      %4239 = vrot.lane.b32.xlu0 %v4146, 16
      %v4240 = vpop.permute.xlu0 %4239
      %4241 = vrot.lane.b32.xlu0 %v4147, 16
      %v4242 = vpop.permute.xlu0 %4241
      %4243 = vrot.lane.b32.xlu0 %v4148, 16
      %v4244 = vpop.permute.xlu0 %4243
      %4245 = vrot.lane.b32.xlu0 %v4149, 16
      %v4246 = vpop.permute.xlu0 %4245
      %4247 = vrot.lane.b32.xlu0 %v4150, 16
      %v4248 = vpop.permute.xlu0 %4247
      %4249 = vrot.lane.b32.xlu0 %v4151, 16
      %v4250 = vpop.permute.xlu0 %4249
      %4251 = vrot.lane.b32.xlu0 %v4152, 16
      %v4252 = vpop.permute.xlu0 %4251
      %4253 = vrot.lane.b32.xlu0 %v4153, 16
      %v4254 = vpop.permute.xlu0 %4253
      %4255 = vrot.lane.b32.xlu0 %v4154, 16
      %v4256 = vpop.permute.xlu0 %4255
      %4257 = vrot.lane.b32.xlu0 %v4155, 16
      %v4258 = vpop.permute.xlu0 %4257
      %4259 = vrot.lane.b32.xlu0 %v4156, 16
      %v4260 = vpop.permute.xlu0 %4259
      %4261 = vrot.lane.b32.xlu0 %v4157, 16
      %v4262 = vpop.permute.xlu0 %4261
      %4263 = vrot.lane.b32.xlu0 %v4158, 16
      %v4264 = vpop.permute.xlu0 %4263
      %4265 = vrot.lane.b32.xlu0 %v4159, 16
      %v4266 = vpop.permute.xlu0 %4265
      %4267 = vrot.lane.b32.xlu0 %v4160, 16
      %v4268 = vpop.permute.xlu0 %4267
      %4305 = vst.msk [vmem:[#allocation4] sm:$0xff] %vm1431, %v4198
      %4306 = vst.msk [vmem:[#allocation4 + $0x8] sm:$0xff] %vm1431, %v4200
      %4307 = vst.msk [vmem:[#allocation4 + $0x10] sm:$0xff] %vm1431, %v4202
      %4308 = vst.msk [vmem:[#allocation4 + $0x18] sm:$0xff] %vm1431, %v4204
      %4309 = vst.msk [vmem:[#allocation4 + $0x20] sm:$0xff] %vm1431, %v4206
      %4310 = vst.msk [vmem:[#allocation4 + $0x28] sm:$0xff] %vm1431, %v4208
      %4311 = vst.msk [vmem:[#allocation4 + $0x30] sm:$0xff] %vm1431, %v4210
      %4312 = vst.msk [vmem:[#allocation4 + $0x38] sm:$0xff] %vm1431, %v4212
      %4313 = vst.msk [vmem:[#allocation4 + $0x40] sm:$0xff] %vm1431, %v4214
      %4314 = vst.msk [vmem:[#allocation4 + $0x48] sm:$0xff] %vm1431, %v4216
      %4315 = vst.msk [vmem:[#allocation4 + $0x50] sm:$0xff] %vm1431, %v4218
      %4316 = vst.msk [vmem:[#allocation4 + $0x58] sm:$0xff] %vm1431, %v4220
      %4317 = vst.msk [vmem:[#allocation4 + $0x60] sm:$0xff] %vm1431, %v4222
      %4318 = vst.msk [vmem:[#allocation4 + $0x68] sm:$0xff] %vm1431, %v4224
      %4319 = vst.msk [vmem:[#allocation4 + $0x70] sm:$0xff] %vm1431, %v4226
      %4320 = vst.msk [vmem:[#allocation4 + $0x78] sm:$0xff] %vm1431, %v4228
      %4321 = vst.msk [vmem:[#allocation4 + $0x80] sm:$0xff] %vm1431, %v4230
      %4322 = vst.msk [vmem:[#allocation4 + $0x88] sm:$0xff] %vm1431, %v4232
      %4323 = vst.msk [vmem:[#allocation4 + $0x90] sm:$0xff] %vm1431, %v4234
      %4324 = vst.msk [vmem:[#allocation4 + $0x98] sm:$0xff] %vm1431, %v4236
      %4325 = vst.msk [vmem:[#allocation4 + $0xa0] sm:$0xff] %vm1431, %v4238
      %4326 = vst.msk [vmem:[#allocation4 + $0xa8] sm:$0xff] %vm1431, %v4240
      %4327 = vst.msk [vmem:[#allocation4 + $0xb0] sm:$0xff] %vm1431, %v4242
      %4328 = vst.msk [vmem:[#allocation4 + $0xb8] sm:$0xff] %vm1431, %v4244
      %4329 = vst.msk [vmem:[#allocation4 + $0xc0] sm:$0xff] %vm1431, %v4246
      %4330 = vst.msk [vmem:[#allocation4 + $0xc8] sm:$0xff] %vm1431, %v4248
      %4331 = vst.msk [vmem:[#allocation4 + $0xd0] sm:$0xff] %vm1431, %v4250
      %4332 = vst.msk [vmem:[#allocation4 + $0xd8] sm:$0xff] %vm1431, %v4252
      %4333 = vst.msk [vmem:[#allocation4 + $0xe0] sm:$0xff] %vm1431, %v4254
      %4334 = vst.msk [vmem:[#allocation4 + $0xe8] sm:$0xff] %vm1431, %v4256
      %4335 = vst.msk [vmem:[#allocation4 + $0xf0] sm:$0xff] %vm1431, %v4258
      %4336 = vst.msk [vmem:[#allocation4 + $0xf8] sm:$0xff] %vm1431, %v4260
      %4337 = vst.msk [vmem:[#allocation4 + $0x100] sm:$0xff] %vm1431, %v4262
      %4338 = vst.msk [vmem:[#allocation4 + $0x108] sm:$0xff] %vm1431, %v4264
      %4339 = vst.msk [vmem:[#allocation4 + $0x110] sm:$0xff] %vm1431, %v4266
      %4340 = vst.msk [vmem:[#allocation4 + $0x118] sm:$0xff] %vm1431, %v4268
      %v4341 = vld [vmem:[#allocation5 + $0x14] sm:$0xff]
      %v4342 = vld [vmem:[#allocation5 + $0x1c] sm:$0xff]
      %v4343 = vld [vmem:[#allocation5 + $0x24] sm:$0xff]
      %v4344 = vld [vmem:[#allocation5 + $0x2c] sm:$0xff]
      %v4345 = vld [vmem:[#allocation5 + $0x34] sm:$0xff]
      %v4346 = vld [vmem:[#allocation5 + $0x3c] sm:$0xff]
      %v4347 = vld [vmem:[#allocation5 + $0x44] sm:$0xff]
      %v4348 = vld [vmem:[#allocation5 + $0x4c] sm:$0xff]
      %v4349 = vld [vmem:[#allocation5 + $0x54] sm:$0xff]
      %v4350 = vld [vmem:[#allocation5 + $0x5c] sm:$0xff]
      %v4351 = vld [vmem:[#allocation5 + $0x64] sm:$0xff]
      %v4352 = vld [vmem:[#allocation5 + $0x6c] sm:$0xff]
      %v4353 = vld [vmem:[#allocation5 + $0x74] sm:$0xff]
      %v4354 = vld [vmem:[#allocation5 + $0x7c] sm:$0xff]
      %v4355 = vld [vmem:[#allocation5 + $0x84] sm:$0xff]
      %v4356 = vld [vmem:[#allocation5 + $0x8c] sm:$0xff]
      %v4357 = vld [vmem:[#allocation5 + $0x94] sm:$0xff]
      %v4358 = vld [vmem:[#allocation5 + $0x9c] sm:$0xff]
      %v4359 = vld [vmem:[#allocation5 + $0xa4] sm:$0xff]
      %v4360 = vld [vmem:[#allocation5 + $0xac] sm:$0xff]
      %v4361 = vld [vmem:[#allocation5 + $0xb4] sm:$0xff]
      %v4362 = vld [vmem:[#allocation5 + $0xbc] sm:$0xff]
      %v4363 = vld [vmem:[#allocation5 + $0xc4] sm:$0xff]
      %v4364 = vld [vmem:[#allocation5 + $0xcc] sm:$0xff]
      %v4365 = vld [vmem:[#allocation5 + $0xd4] sm:$0xff]
      %v4366 = vld [vmem:[#allocation5 + $0xdc] sm:$0xff]
      %v4367 = vld [vmem:[#allocation5 + $0xe4] sm:$0xff]
      %v4368 = vld [vmem:[#allocation5 + $0xec] sm:$0xff]
      %v4369 = vld [vmem:[#allocation5 + $0xf4] sm:$0xff]
      %v4370 = vld [vmem:[#allocation5 + $0xfc] sm:$0xff]
      %v4371 = vld [vmem:[#allocation5 + $0x104] sm:$0xff]
      %v4372 = vld [vmem:[#allocation5 + $0x10c] sm:$0xff]
      %v4373 = vld [vmem:[#allocation5 + $0x114] sm:$0xff]
      %v4374 = vld [vmem:[#allocation5 + $0x11c] sm:$0xff]
      %v4375 = vld [vmem:[#allocation5 + $0x124] sm:$0xff]
      %v4376 = vld [vmem:[#allocation5 + $0x12c] sm:$0xff]
      %4413 = vrot.lane.b32.xlu0 %v4341, 20
      %v4414 = vpop.permute.xlu0 %4413
      %4415 = vrot.lane.b32.xlu0 %v4342, 20
      %v4416 = vpop.permute.xlu0 %4415
      %4417 = vrot.lane.b32.xlu0 %v4343, 20
      %v4418 = vpop.permute.xlu0 %4417
      %4419 = vrot.lane.b32.xlu0 %v4344, 20
      %v4420 = vpop.permute.xlu0 %4419
      %4421 = vrot.lane.b32.xlu0 %v4345, 20
      %v4422 = vpop.permute.xlu0 %4421
      %4423 = vrot.lane.b32.xlu0 %v4346, 20
      %v4424 = vpop.permute.xlu0 %4423
      %4425 = vrot.lane.b32.xlu0 %v4347, 20
      %v4426 = vpop.permute.xlu0 %4425
      %4427 = vrot.lane.b32.xlu0 %v4348, 20
      %v4428 = vpop.permute.xlu0 %4427
      %4429 = vrot.lane.b32.xlu0 %v4349, 20
      %v4430 = vpop.permute.xlu0 %4429
      %4431 = vrot.lane.b32.xlu0 %v4350, 20
      %v4432 = vpop.permute.xlu0 %4431
      %4433 = vrot.lane.b32.xlu0 %v4351, 20
      %v4434 = vpop.permute.xlu0 %4433
      %4435 = vrot.lane.b32.xlu0 %v4352, 20
      %v4436 = vpop.permute.xlu0 %4435
      %4437 = vrot.lane.b32.xlu0 %v4353, 20
      %v4438 = vpop.permute.xlu0 %4437
      %4439 = vrot.lane.b32.xlu0 %v4354, 20
      %v4440 = vpop.permute.xlu0 %4439
      %4441 = vrot.lane.b32.xlu0 %v4355, 20
      %v4442 = vpop.permute.xlu0 %4441
      %4443 = vrot.lane.b32.xlu0 %v4356, 20
      %v4444 = vpop.permute.xlu0 %4443
      %4445 = vrot.lane.b32.xlu0 %v4357, 20
      %v4446 = vpop.permute.xlu0 %4445
      %4447 = vrot.lane.b32.xlu0 %v4358, 20
      %v4448 = vpop.permute.xlu0 %4447
      %4449 = vrot.lane.b32.xlu0 %v4359, 20
      %v4450 = vpop.permute.xlu0 %4449
      %4451 = vrot.lane.b32.xlu0 %v4360, 20
      %v4452 = vpop.permute.xlu0 %4451
      %4453 = vrot.lane.b32.xlu0 %v4361, 20
      %v4454 = vpop.permute.xlu0 %4453
      %4455 = vrot.lane.b32.xlu0 %v4362, 20
      %v4456 = vpop.permute.xlu0 %4455
      %4457 = vrot.lane.b32.xlu0 %v4363, 20
      %v4458 = vpop.permute.xlu0 %4457
      %4459 = vrot.lane.b32.xlu0 %v4364, 20
      %v4460 = vpop.permute.xlu0 %4459
      %4461 = vrot.lane.b32.xlu0 %v4365, 20
      %v4462 = vpop.permute.xlu0 %4461
      %4463 = vrot.lane.b32.xlu0 %v4366, 20
      %v4464 = vpop.permute.xlu0 %4463
      %4465 = vrot.lane.b32.xlu0 %v4367, 20
      %v4466 = vpop.permute.xlu0 %4465
      %4467 = vrot.lane.b32.xlu0 %v4368, 20
      %v4468 = vpop.permute.xlu0 %4467
      %4469 = vrot.lane.b32.xlu0 %v4369, 20
      %v4470 = vpop.permute.xlu0 %4469
      %4471 = vrot.lane.b32.xlu0 %v4370, 20
      %v4472 = vpop.permute.xlu0 %4471
      %4473 = vrot.lane.b32.xlu0 %v4371, 20
      %v4474 = vpop.permute.xlu0 %4473
      %4475 = vrot.lane.b32.xlu0 %v4372, 20
      %v4476 = vpop.permute.xlu0 %4475
      %4477 = vrot.lane.b32.xlu0 %v4373, 20
      %v4478 = vpop.permute.xlu0 %4477
      %4479 = vrot.lane.b32.xlu0 %v4374, 20
      %v4480 = vpop.permute.xlu0 %4479
      %4481 = vrot.lane.b32.xlu0 %v4375, 20
      %v4482 = vpop.permute.xlu0 %4481
      %4483 = vrot.lane.b32.xlu0 %v4376, 20
      %v4484 = vpop.permute.xlu0 %4483
      %4521 = vst.msk [vmem:[#allocation4] sm:$0xff] %vm1648, %v4414
      %4522 = vst.msk [vmem:[#allocation4 + $0x8] sm:$0xff] %vm1648, %v4416
      %4523 = vst.msk [vmem:[#allocation4 + $0x10] sm:$0xff] %vm1648, %v4418
      %4524 = vst.msk [vmem:[#allocation4 + $0x18] sm:$0xff] %vm1648, %v4420
      %4525 = vst.msk [vmem:[#allocation4 + $0x20] sm:$0xff] %vm1648, %v4422
      %4526 = vst.msk [vmem:[#allocation4 + $0x28] sm:$0xff] %vm1648, %v4424
      %4527 = vst.msk [vmem:[#allocation4 + $0x30] sm:$0xff] %vm1648, %v4426
      %4528 = vst.msk [vmem:[#allocation4 + $0x38] sm:$0xff] %vm1648, %v4428
      %4529 = vst.msk [vmem:[#allocation4 + $0x40] sm:$0xff] %vm1648, %v4430
      %4530 = vst.msk [vmem:[#allocation4 + $0x48] sm:$0xff] %vm1648, %v4432
      %4531 = vst.msk [vmem:[#allocation4 + $0x50] sm:$0xff] %vm1648, %v4434
      %4532 = vst.msk [vmem:[#allocation4 + $0x58] sm:$0xff] %vm1648, %v4436
      %4533 = vst.msk [vmem:[#allocation4 + $0x60] sm:$0xff] %vm1648, %v4438
      %4534 = vst.msk [vmem:[#allocation4 + $0x68] sm:$0xff] %vm1648, %v4440
      %4535 = vst.msk [vmem:[#allocation4 + $0x70] sm:$0xff] %vm1648, %v4442
      %4536 = vst.msk [vmem:[#allocation4 + $0x78] sm:$0xff] %vm1648, %v4444
      %4537 = vst.msk [vmem:[#allocation4 + $0x80] sm:$0xff] %vm1648, %v4446
      %4538 = vst.msk [vmem:[#allocation4 + $0x88] sm:$0xff] %vm1648, %v4448
      %4539 = vst.msk [vmem:[#allocation4 + $0x90] sm:$0xff] %vm1648, %v4450
      %4540 = vst.msk [vmem:[#allocation4 + $0x98] sm:$0xff] %vm1648, %v4452
      %4541 = vst.msk [vmem:[#allocation4 + $0xa0] sm:$0xff] %vm1648, %v4454
      %4542 = vst.msk [vmem:[#allocation4 + $0xa8] sm:$0xff] %vm1648, %v4456
      %4543 = vst.msk [vmem:[#allocation4 + $0xb0] sm:$0xff] %vm1648, %v4458
      %4544 = vst.msk [vmem:[#allocation4 + $0xb8] sm:$0xff] %vm1648, %v4460
      %4545 = vst.msk [vmem:[#allocation4 + $0xc0] sm:$0xff] %vm1648, %v4462
      %4546 = vst.msk [vmem:[#allocation4 + $0xc8] sm:$0xff] %vm1648, %v4464
      %4547 = vst.msk [vmem:[#allocation4 + $0xd0] sm:$0xff] %vm1648, %v4466
      %4548 = vst.msk [vmem:[#allocation4 + $0xd8] sm:$0xff] %vm1648, %v4468
      %4549 = vst.msk [vmem:[#allocation4 + $0xe0] sm:$0xff] %vm1648, %v4470
      %4550 = vst.msk [vmem:[#allocation4 + $0xe8] sm:$0xff] %vm1648, %v4472
      %4551 = vst.msk [vmem:[#allocation4 + $0xf0] sm:$0xff] %vm1648, %v4474
      %4552 = vst.msk [vmem:[#allocation4 + $0xf8] sm:$0xff] %vm1648, %v4476
      %4553 = vst.msk [vmem:[#allocation4 + $0x100] sm:$0xff] %vm1648, %v4478
      %4554 = vst.msk [vmem:[#allocation4 + $0x108] sm:$0xff] %vm1648, %v4480
      %4555 = vst.msk [vmem:[#allocation4 + $0x110] sm:$0xff] %vm1648, %v4482
      %4556 = vst.msk [vmem:[#allocation4 + $0x118] sm:$0xff] %vm1648, %v4484
      %v4557 = vld [vmem:[#allocation5 + $0x24] sm:$0xff]
      %v4558 = vld [vmem:[#allocation5 + $0x2c] sm:$0xff]
      %v4559 = vld [vmem:[#allocation5 + $0x34] sm:$0xff]
      %v4560 = vld [vmem:[#allocation5 + $0x3c] sm:$0xff]
      %v4561 = vld [vmem:[#allocation5 + $0x44] sm:$0xff]
      %v4562 = vld [vmem:[#allocation5 + $0x4c] sm:$0xff]
      %v4563 = vld [vmem:[#allocation5 + $0x54] sm:$0xff]
      %v4564 = vld [vmem:[#allocation5 + $0x5c] sm:$0xff]
      %v4565 = vld [vmem:[#allocation5 + $0x64] sm:$0xff]
      %v4566 = vld [vmem:[#allocation5 + $0x6c] sm:$0xff]
      %v4567 = vld [vmem:[#allocation5 + $0x74] sm:$0xff]
      %v4568 = vld [vmem:[#allocation5 + $0x7c] sm:$0xff]
      %v4569 = vld [vmem:[#allocation5 + $0x84] sm:$0xff]
      %v4570 = vld [vmem:[#allocation5 + $0x8c] sm:$0xff]
      %v4571 = vld [vmem:[#allocation5 + $0x94] sm:$0xff]
      %v4572 = vld [vmem:[#allocation5 + $0x9c] sm:$0xff]
      %v4573 = vld [vmem:[#allocation5 + $0xa4] sm:$0xff]
      %v4574 = vld [vmem:[#allocation5 + $0xac] sm:$0xff]
      %v4575 = vld [vmem:[#allocation5 + $0xb4] sm:$0xff]
      %v4576 = vld [vmem:[#allocation5 + $0xbc] sm:$0xff]
      %v4577 = vld [vmem:[#allocation5 + $0xc4] sm:$0xff]
      %v4578 = vld [vmem:[#allocation5 + $0xcc] sm:$0xff]
      %v4579 = vld [vmem:[#allocation5 + $0xd4] sm:$0xff]
      %v4580 = vld [vmem:[#allocation5 + $0xdc] sm:$0xff]
      %v4581 = vld [vmem:[#allocation5 + $0xe4] sm:$0xff]
      %v4582 = vld [vmem:[#allocation5 + $0xec] sm:$0xff]
      %v4583 = vld [vmem:[#allocation5 + $0xf4] sm:$0xff]
      %v4584 = vld [vmem:[#allocation5 + $0xfc] sm:$0xff]
      %v4585 = vld [vmem:[#allocation5 + $0x104] sm:$0xff]
      %v4586 = vld [vmem:[#allocation5 + $0x10c] sm:$0xff]
      %v4587 = vld [vmem:[#allocation5 + $0x114] sm:$0xff]
      %v4588 = vld [vmem:[#allocation5 + $0x11c] sm:$0xff]
      %v4589 = vld [vmem:[#allocation5 + $0x124] sm:$0xff]
      %v4590 = vld [vmem:[#allocation5 + $0x12c] sm:$0xff]
      %v4591 = vld [vmem:[#allocation5 + $0x134] sm:$0xff]
      %v4592 = vld [vmem:[#allocation5 + $0x13c] sm:$0xff]
      %4629 = vrot.lane.b32.xlu0 %v4557, 24
      %v4630 = vpop.permute.xlu0 %4629
      %4631 = vrot.lane.b32.xlu0 %v4558, 24
      %v4632 = vpop.permute.xlu0 %4631
      %4633 = vrot.lane.b32.xlu0 %v4559, 24
      %v4634 = vpop.permute.xlu0 %4633
      %4635 = vrot.lane.b32.xlu0 %v4560, 24
      %v4636 = vpop.permute.xlu0 %4635
      %4637 = vrot.lane.b32.xlu0 %v4561, 24
      %v4638 = vpop.permute.xlu0 %4637
      %4639 = vrot.lane.b32.xlu0 %v4562, 24
      %v4640 = vpop.permute.xlu0 %4639
      %4641 = vrot.lane.b32.xlu0 %v4563, 24
      %v4642 = vpop.permute.xlu0 %4641
      %4643 = vrot.lane.b32.xlu0 %v4564, 24
      %v4644 = vpop.permute.xlu0 %4643
      %4645 = vrot.lane.b32.xlu0 %v4565, 24
      %v4646 = vpop.permute.xlu0 %4645
      %4647 = vrot.lane.b32.xlu0 %v4566, 24
      %v4648 = vpop.permute.xlu0 %4647
      %4649 = vrot.lane.b32.xlu0 %v4567, 24
      %v4650 = vpop.permute.xlu0 %4649
      %4651 = vrot.lane.b32.xlu0 %v4568, 24
      %v4652 = vpop.permute.xlu0 %4651
      %4653 = vrot.lane.b32.xlu0 %v4569, 24
      %v4654 = vpop.permute.xlu0 %4653
      %4655 = vrot.lane.b32.xlu0 %v4570, 24
      %v4656 = vpop.permute.xlu0 %4655
      %4657 = vrot.lane.b32.xlu0 %v4571, 24
      %v4658 = vpop.permute.xlu0 %4657
      %4659 = vrot.lane.b32.xlu0 %v4572, 24
      %v4660 = vpop.permute.xlu0 %4659
      %4661 = vrot.lane.b32.xlu0 %v4573, 24
      %v4662 = vpop.permute.xlu0 %4661
      %4663 = vrot.lane.b32.xlu0 %v4574, 24
      %v4664 = vpop.permute.xlu0 %4663
      %4665 = vrot.lane.b32.xlu0 %v4575, 24
      %v4666 = vpop.permute.xlu0 %4665
      %4667 = vrot.lane.b32.xlu0 %v4576, 24
      %v4668 = vpop.permute.xlu0 %4667
      %4669 = vrot.lane.b32.xlu0 %v4577, 24
      %v4670 = vpop.permute.xlu0 %4669
      %4671 = vrot.lane.b32.xlu0 %v4578, 24
      %v4672 = vpop.permute.xlu0 %4671
      %4673 = vrot.lane.b32.xlu0 %v4579, 24
      %v4674 = vpop.permute.xlu0 %4673
      %4675 = vrot.lane.b32.xlu0 %v4580, 24
      %v4676 = vpop.permute.xlu0 %4675
      %4677 = vrot.lane.b32.xlu0 %v4581, 24
      %v4678 = vpop.permute.xlu0 %4677
      %4679 = vrot.lane.b32.xlu0 %v4582, 24
      %v4680 = vpop.permute.xlu0 %4679
      %4681 = vrot.lane.b32.xlu0 %v4583, 24
      %v4682 = vpop.permute.xlu0 %4681
      %4683 = vrot.lane.b32.xlu0 %v4584, 24
      %v4684 = vpop.permute.xlu0 %4683
      %4685 = vrot.lane.b32.xlu0 %v4585, 24
      %v4686 = vpop.permute.xlu0 %4685
      %4687 = vrot.lane.b32.xlu0 %v4586, 24
      %v4688 = vpop.permute.xlu0 %4687
      %4689 = vrot.lane.b32.xlu0 %v4587, 24
      %v4690 = vpop.permute.xlu0 %4689
      %4691 = vrot.lane.b32.xlu0 %v4588, 24
      %v4692 = vpop.permute.xlu0 %4691
      %4693 = vrot.lane.b32.xlu0 %v4589, 24
      %v4694 = vpop.permute.xlu0 %4693
      %4695 = vrot.lane.b32.xlu0 %v4590, 24
      %v4696 = vpop.permute.xlu0 %4695
      %4697 = vrot.lane.b32.xlu0 %v4591, 24
      %v4698 = vpop.permute.xlu0 %4697
      %4699 = vrot.lane.b32.xlu0 %v4592, 24
      %v4700 = vpop.permute.xlu0 %4699
      %4737 = vst.msk [vmem:[#allocation4] sm:$0xff] %vm1865, %v4630
      %4738 = vst.msk [vmem:[#allocation4 + $0x8] sm:$0xff] %vm1865, %v4632
      %4739 = vst.msk [vmem:[#allocation4 + $0x10] sm:$0xff] %vm1865, %v4634
      %4740 = vst.msk [vmem:[#allocation4 + $0x18] sm:$0xff] %vm1865, %v4636
      %4741 = vst.msk [vmem:[#allocation4 + $0x20] sm:$0xff] %vm1865, %v4638
      %4742 = vst.msk [vmem:[#allocation4 + $0x28] sm:$0xff] %vm1865, %v4640
      %4743 = vst.msk [vmem:[#allocation4 + $0x30] sm:$0xff] %vm1865, %v4642
      %4744 = vst.msk [vmem:[#allocation4 + $0x38] sm:$0xff] %vm1865, %v4644
      %4745 = vst.msk [vmem:[#allocation4 + $0x40] sm:$0xff] %vm1865, %v4646
      %4746 = vst.msk [vmem:[#allocation4 + $0x48] sm:$0xff] %vm1865, %v4648
      %4747 = vst.msk [vmem:[#allocation4 + $0x50] sm:$0xff] %vm1865, %v4650
      %4748 = vst.msk [vmem:[#allocation4 + $0x58] sm:$0xff] %vm1865, %v4652
      %4749 = vst.msk [vmem:[#allocation4 + $0x60] sm:$0xff] %vm1865, %v4654
      %4750 = vst.msk [vmem:[#allocation4 + $0x68] sm:$0xff] %vm1865, %v4656
      %4751 = vst.msk [vmem:[#allocation4 + $0x70] sm:$0xff] %vm1865, %v4658
      %4752 = vst.msk [vmem:[#allocation4 + $0x78] sm:$0xff] %vm1865, %v4660
      %4753 = vst.msk [vmem:[#allocation4 + $0x80] sm:$0xff] %vm1865, %v4662
      %4754 = vst.msk [vmem:[#allocation4 + $0x88] sm:$0xff] %vm1865, %v4664
      %4755 = vst.msk [vmem:[#allocation4 + $0x90] sm:$0xff] %vm1865, %v4666
      %4756 = vst.msk [vmem:[#allocation4 + $0x98] sm:$0xff] %vm1865, %v4668
      %4757 = vst.msk [vmem:[#allocation4 + $0xa0] sm:$0xff] %vm1865, %v4670
      %4758 = vst.msk [vmem:[#allocation4 + $0xa8] sm:$0xff] %vm1865, %v4672
      %4759 = vst.msk [vmem:[#allocation4 + $0xb0] sm:$0xff] %vm1865, %v4674
      %4760 = vst.msk [vmem:[#allocation4 + $0xb8] sm:$0xff] %vm1865, %v4676
      %4761 = vst.msk [vmem:[#allocation4 + $0xc0] sm:$0xff] %vm1865, %v4678
      %4762 = vst.msk [vmem:[#allocation4 + $0xc8] sm:$0xff] %vm1865, %v4680
      %4763 = vst.msk [vmem:[#allocation4 + $0xd0] sm:$0xff] %vm1865, %v4682
      %4764 = vst.msk [vmem:[#allocation4 + $0xd8] sm:$0xff] %vm1865, %v4684
      %4765 = vst.msk [vmem:[#allocation4 + $0xe0] sm:$0xff] %vm1865, %v4686
      %4766 = vst.msk [vmem:[#allocation4 + $0xe8] sm:$0xff] %vm1865, %v4688
      %4767 = vst.msk [vmem:[#allocation4 + $0xf0] sm:$0xff] %vm1865, %v4690
      %4768 = vst.msk [vmem:[#allocation4 + $0xf8] sm:$0xff] %vm1865, %v4692
      %4769 = vst.msk [vmem:[#allocation4 + $0x100] sm:$0xff] %vm1865, %v4694
      %4770 = vst.msk [vmem:[#allocation4 + $0x108] sm:$0xff] %vm1865, %v4696
      %4771 = vst.msk [vmem:[#allocation4 + $0x110] sm:$0xff] %vm1865, %v4698
      %4772 = vst.msk [vmem:[#allocation4 + $0x118] sm:$0xff] %vm1865, %v4700
      %v4773 = vld [vmem:[#allocation5 + $0x25] sm:$0xff]
      %v4774 = vld [vmem:[#allocation5 + $0x2d] sm:$0xff]
      %v4775 = vld [vmem:[#allocation5 + $0x35] sm:$0xff]
      %v4776 = vld [vmem:[#allocation5 + $0x3d] sm:$0xff]
      %v4777 = vld [vmem:[#allocation5 + $0x45] sm:$0xff]
      %v4778 = vld [vmem:[#allocation5 + $0x4d] sm:$0xff]
      %v4779 = vld [vmem:[#allocation5 + $0x55] sm:$0xff]
      %v4780 = vld [vmem:[#allocation5 + $0x5d] sm:$0xff]
      %v4781 = vld [vmem:[#allocation5 + $0x65] sm:$0xff]
      %v4782 = vld [vmem:[#allocation5 + $0x6d] sm:$0xff]
      %v4783 = vld [vmem:[#allocation5 + $0x75] sm:$0xff]
      %v4784 = vld [vmem:[#allocation5 + $0x7d] sm:$0xff]
      %v4785 = vld [vmem:[#allocation5 + $0x85] sm:$0xff]
      %v4786 = vld [vmem:[#allocation5 + $0x8d] sm:$0xff]
      %v4787 = vld [vmem:[#allocation5 + $0x95] sm:$0xff]
      %v4788 = vld [vmem:[#allocation5 + $0x9d] sm:$0xff]
      %v4789 = vld [vmem:[#allocation5 + $0xa5] sm:$0xff]
      %v4790 = vld [vmem:[#allocation5 + $0xad] sm:$0xff]
      %v4791 = vld [vmem:[#allocation5 + $0xb5] sm:$0xff]
      %v4792 = vld [vmem:[#allocation5 + $0xbd] sm:$0xff]
      %v4793 = vld [vmem:[#allocation5 + $0xc5] sm:$0xff]
      %v4794 = vld [vmem:[#allocation5 + $0xcd] sm:$0xff]
      %v4795 = vld [vmem:[#allocation5 + $0xd5] sm:$0xff]
      %v4796 = vld [vmem:[#allocation5 + $0xdd] sm:$0xff]
      %v4797 = vld [vmem:[#allocation5 + $0xe5] sm:$0xff]
      %v4798 = vld [vmem:[#allocation5 + $0xed] sm:$0xff]
      %v4799 = vld [vmem:[#allocation5 + $0xf5] sm:$0xff]
      %v4800 = vld [vmem:[#allocation5 + $0xfd] sm:$0xff]
      %v4801 = vld [vmem:[#allocation5 + $0x105] sm:$0xff]
      %v4802 = vld [vmem:[#allocation5 + $0x10d] sm:$0xff]
      %v4803 = vld [vmem:[#allocation5 + $0x115] sm:$0xff]
      %v4804 = vld [vmem:[#allocation5 + $0x11d] sm:$0xff]
      %v4805 = vld [vmem:[#allocation5 + $0x125] sm:$0xff]
      %v4806 = vld [vmem:[#allocation5 + $0x12d] sm:$0xff]
      %v4807 = vld [vmem:[#allocation5 + $0x135] sm:$0xff]
      %v4808 = vld [vmem:[#allocation5 + $0x13d] sm:$0xff]
      %4845 = vrot.lane.b32.xlu0 %v4773, 28
      %v4846 = vpop.permute.xlu0 %4845
      %4847 = vrot.lane.b32.xlu0 %v4774, 28
      %v4848 = vpop.permute.xlu0 %4847
      %4849 = vrot.lane.b32.xlu0 %v4775, 28
      %v4850 = vpop.permute.xlu0 %4849
      %4851 = vrot.lane.b32.xlu0 %v4776, 28
      %v4852 = vpop.permute.xlu0 %4851
      %4853 = vrot.lane.b32.xlu0 %v4777, 28
      %v4854 = vpop.permute.xlu0 %4853
      %4855 = vrot.lane.b32.xlu0 %v4778, 28
      %v4856 = vpop.permute.xlu0 %4855
      %4857 = vrot.lane.b32.xlu0 %v4779, 28
      %v4858 = vpop.permute.xlu0 %4857
      %4859 = vrot.lane.b32.xlu0 %v4780, 28
      %v4860 = vpop.permute.xlu0 %4859
      %4861 = vrot.lane.b32.xlu0 %v4781, 28
      %v4862 = vpop.permute.xlu0 %4861
      %4863 = vrot.lane.b32.xlu0 %v4782, 28
      %v4864 = vpop.permute.xlu0 %4863
      %4865 = vrot.lane.b32.xlu0 %v4783, 28
      %v4866 = vpop.permute.xlu0 %4865
      %4867 = vrot.lane.b32.xlu0 %v4784, 28
      %v4868 = vpop.permute.xlu0 %4867
      %4869 = vrot.lane.b32.xlu0 %v4785, 28
      %v4870 = vpop.permute.xlu0 %4869
      %4871 = vrot.lane.b32.xlu0 %v4786, 28
      %v4872 = vpop.permute.xlu0 %4871
      %4873 = vrot.lane.b32.xlu0 %v4787, 28
      %v4874 = vpop.permute.xlu0 %4873
      %4875 = vrot.lane.b32.xlu0 %v4788, 28
      %v4876 = vpop.permute.xlu0 %4875
      %4877 = vrot.lane.b32.xlu0 %v4789, 28
      %v4878 = vpop.permute.xlu0 %4877
      %4879 = vrot.lane.b32.xlu0 %v4790, 28
      %v4880 = vpop.permute.xlu0 %4879
      %4881 = vrot.lane.b32.xlu0 %v4791, 28
      %v4882 = vpop.permute.xlu0 %4881
      %4883 = vrot.lane.b32.xlu0 %v4792, 28
      %v4884 = vpop.permute.xlu0 %4883
      %4885 = vrot.lane.b32.xlu0 %v4793, 28
      %v4886 = vpop.permute.xlu0 %4885
      %4887 = vrot.lane.b32.xlu0 %v4794, 28
      %v4888 = vpop.permute.xlu0 %4887
      %4889 = vrot.lane.b32.xlu0 %v4795, 28
      %v4890 = vpop.permute.xlu0 %4889
      %4891 = vrot.lane.b32.xlu0 %v4796, 28
      %v4892 = vpop.permute.xlu0 %4891
      %4893 = vrot.lane.b32.xlu0 %v4797, 28
      %v4894 = vpop.permute.xlu0 %4893
      %4895 = vrot.lane.b32.xlu0 %v4798, 28
      %v4896 = vpop.permute.xlu0 %4895
      %4897 = vrot.lane.b32.xlu0 %v4799, 28
      %v4898 = vpop.permute.xlu0 %4897
      %4899 = vrot.lane.b32.xlu0 %v4800, 28
      %v4900 = vpop.permute.xlu0 %4899
      %4901 = vrot.lane.b32.xlu0 %v4801, 28
      %v4902 = vpop.permute.xlu0 %4901
      %4903 = vrot.lane.b32.xlu0 %v4802, 28
      %v4904 = vpop.permute.xlu0 %4903
      %4905 = vrot.lane.b32.xlu0 %v4803, 28
      %v4906 = vpop.permute.xlu0 %4905
      %4907 = vrot.lane.b32.xlu0 %v4804, 28
      %v4908 = vpop.permute.xlu0 %4907
      %4909 = vrot.lane.b32.xlu0 %v4805, 28
      %v4910 = vpop.permute.xlu0 %4909
      %4911 = vrot.lane.b32.xlu0 %v4806, 28
      %v4912 = vpop.permute.xlu0 %4911
      %4913 = vrot.lane.b32.xlu0 %v4807, 28
      %v4914 = vpop.permute.xlu0 %4913
      %4915 = vrot.lane.b32.xlu0 %v4808, 28
      %v4916 = vpop.permute.xlu0 %4915
      %4953 = vst.msk [vmem:[#allocation4] sm:$0xff] %vm2082, %v4846
      %4954 = vst.msk [vmem:[#allocation4 + $0x8] sm:$0xff] %vm2082, %v4848
      %4955 = vst.msk [vmem:[#allocation4 + $0x10] sm:$0xff] %vm2082, %v4850
      %4956 = vst.msk [vmem:[#allocation4 + $0x18] sm:$0xff] %vm2082, %v4852
      %4957 = vst.msk [vmem:[#allocation4 + $0x20] sm:$0xff] %vm2082, %v4854
      %4958 = vst.msk [vmem:[#allocation4 + $0x28] sm:$0xff] %vm2082, %v4856
      %4959 = vst.msk [vmem:[#allocation4 + $0x30] sm:$0xff] %vm2082, %v4858
      %4960 = vst.msk [vmem:[#allocation4 + $0x38] sm:$0xff] %vm2082, %v4860
      %4961 = vst.msk [vmem:[#allocation4 + $0x40] sm:$0xff] %vm2082, %v4862
      %4962 = vst.msk [vmem:[#allocation4 + $0x48] sm:$0xff] %vm2082, %v4864
      %4963 = vst.msk [vmem:[#allocation4 + $0x50] sm:$0xff] %vm2082, %v4866
      %4964 = vst.msk [vmem:[#allocation4 + $0x58] sm:$0xff] %vm2082, %v4868
      %4965 = vst.msk [vmem:[#allocation4 + $0x60] sm:$0xff] %vm2082, %v4870
      %4966 = vst.msk [vmem:[#allocation4 + $0x68] sm:$0xff] %vm2082, %v4872
      %4967 = vst.msk [vmem:[#allocation4 + $0x70] sm:$0xff] %vm2082, %v4874
      %4968 = vst.msk [vmem:[#allocation4 + $0x78] sm:$0xff] %vm2082, %v4876
      %4969 = vst.msk [vmem:[#allocation4 + $0x80] sm:$0xff] %vm2082, %v4878
      %4970 = vst.msk [vmem:[#allocation4 + $0x88] sm:$0xff] %vm2082, %v4880
      %4971 = vst.msk [vmem:[#allocation4 + $0x90] sm:$0xff] %vm2082, %v4882
      %4972 = vst.msk [vmem:[#allocation4 + $0x98] sm:$0xff] %vm2082, %v4884
      %4973 = vst.msk [vmem:[#allocation4 + $0xa0] sm:$0xff] %vm2082, %v4886
      %4974 = vst.msk [vmem:[#allocation4 + $0xa8] sm:$0xff] %vm2082, %v4888
      %4975 = vst.msk [vmem:[#allocation4 + $0xb0] sm:$0xff] %vm2082, %v4890
      %4976 = vst.msk [vmem:[#allocation4 + $0xb8] sm:$0xff] %vm2082, %v4892
      %4977 = vst.msk [vmem:[#allocation4 + $0xc0] sm:$0xff] %vm2082, %v4894
      %4978 = vst.msk [vmem:[#allocation4 + $0xc8] sm:$0xff] %vm2082, %v4896
      %4979 = vst.msk [vmem:[#allocation4 + $0xd0] sm:$0xff] %vm2082, %v4898
      %4980 = vst.msk [vmem:[#allocation4 + $0xd8] sm:$0xff] %vm2082, %v4900
      %4981 = vst.msk [vmem:[#allocation4 + $0xe0] sm:$0xff] %vm2082, %v4902
      %4982 = vst.msk [vmem:[#allocation4 + $0xe8] sm:$0xff] %vm2082, %v4904
      %4983 = vst.msk [vmem:[#allocation4 + $0xf0] sm:$0xff] %vm2082, %v4906
      %4984 = vst.msk [vmem:[#allocation4 + $0xf8] sm:$0xff] %vm2082, %v4908
      %4985 = vst.msk [vmem:[#allocation4 + $0x100] sm:$0xff] %vm2082, %v4910
      %4986 = vst.msk [vmem:[#allocation4 + $0x108] sm:$0xff] %vm2082, %v4912
      %4987 = vst.msk [vmem:[#allocation4 + $0x110] sm:$0xff] %vm2082, %v4914
      %4988 = vst.msk [vmem:[#allocation4 + $0x118] sm:$0xff] %vm2082, %v4916
      %v4989 = vld [vmem:[#allocation5 + $0x26] sm:$0xff]
      %v4990 = vld [vmem:[#allocation5 + $0x2e] sm:$0xff]
      %v4991 = vld [vmem:[#allocation5 + $0x36] sm:$0xff]
      %v4992 = vld [vmem:[#allocation5 + $0x3e] sm:$0xff]
      %v4993 = vld [vmem:[#allocation5 + $0x46] sm:$0xff]
      %v4994 = vld [vmem:[#allocation5 + $0x4e] sm:$0xff]
      %v4995 = vld [vmem:[#allocation5 + $0x56] sm:$0xff]
      %v4996 = vld [vmem:[#allocation5 + $0x5e] sm:$0xff]
      %v4997 = vld [vmem:[#allocation5 + $0x66] sm:$0xff]
      %v4998 = vld [vmem:[#allocation5 + $0x6e] sm:$0xff]
      %v4999 = vld [vmem:[#allocation5 + $0x76] sm:$0xff]
      %v5000 = vld [vmem:[#allocation5 + $0x7e] sm:$0xff]
      %v5001 = vld [vmem:[#allocation5 + $0x86] sm:$0xff]
      %v5002 = vld [vmem:[#allocation5 + $0x8e] sm:$0xff]
      %v5003 = vld [vmem:[#allocation5 + $0x96] sm:$0xff]
      %v5004 = vld [vmem:[#allocation5 + $0x9e] sm:$0xff]
      %v5005 = vld [vmem:[#allocation5 + $0xa6] sm:$0xff]
      %v5006 = vld [vmem:[#allocation5 + $0xae] sm:$0xff]
      %v5007 = vld [vmem:[#allocation5 + $0xb6] sm:$0xff]
      %v5008 = vld [vmem:[#allocation5 + $0xbe] sm:$0xff]
      %v5009 = vld [vmem:[#allocation5 + $0xc6] sm:$0xff]
      %v5010 = vld [vmem:[#allocation5 + $0xce] sm:$0xff]
      %v5011 = vld [vmem:[#allocation5 + $0xd6] sm:$0xff]
      %v5012 = vld [vmem:[#allocation5 + $0xde] sm:$0xff]
      %v5013 = vld [vmem:[#allocation5 + $0xe6] sm:$0xff]
      %v5014 = vld [vmem:[#allocation5 + $0xee] sm:$0xff]
      %v5015 = vld [vmem:[#allocation5 + $0xf6] sm:$0xff]
      %v5016 = vld [vmem:[#allocation5 + $0xfe] sm:$0xff]
      %v5017 = vld [vmem:[#allocation5 + $0x106] sm:$0xff]
      %v5018 = vld [vmem:[#allocation5 + $0x10e] sm:$0xff]
      %v5019 = vld [vmem:[#allocation5 + $0x116] sm:$0xff]
      %v5020 = vld [vmem:[#allocation5 + $0x11e] sm:$0xff]
      %v5021 = vld [vmem:[#allocation5 + $0x126] sm:$0xff]
      %v5022 = vld [vmem:[#allocation5 + $0x12e] sm:$0xff]
      %v5023 = vld [vmem:[#allocation5 + $0x136] sm:$0xff]
      %v5024 = vld [vmem:[#allocation5 + $0x13e] sm:$0xff]
      %5061 = vrot.lane.b32.xlu0 %v4989, 32
      %v5062 = vpop.permute.xlu0 %5061
      %5063 = vrot.lane.b32.xlu0 %v4990, 32
      %v5064 = vpop.permute.xlu0 %5063
      %5065 = vrot.lane.b32.xlu0 %v4991, 32
      %v5066 = vpop.permute.xlu0 %5065
      %5067 = vrot.lane.b32.xlu0 %v4992, 32
      %v5068 = vpop.permute.xlu0 %5067
      %5069 = vrot.lane.b32.xlu0 %v4993, 32
      %v5070 = vpop.permute.xlu0 %5069
      %5071 = vrot.lane.b32.xlu0 %v4994, 32
      %v5072 = vpop.permute.xlu0 %5071
      %5073 = vrot.lane.b32.xlu0 %v4995, 32
      %v5074 = vpop.permute.xlu0 %5073
      %5075 = vrot.lane.b32.xlu0 %v4996, 32
      %v5076 = vpop.permute.xlu0 %5075
      %5077 = vrot.lane.b32.xlu0 %v4997, 32
      %v5078 = vpop.permute.xlu0 %5077
      %5079 = vrot.lane.b32.xlu0 %v4998, 32
      %v5080 = vpop.permute.xlu0 %5079
      %5081 = vrot.lane.b32.xlu0 %v4999, 32
      %v5082 = vpop.permute.xlu0 %5081
      %5083 = vrot.lane.b32.xlu0 %v5000, 32
      %v5084 = vpop.permute.xlu0 %5083
      %5085 = vrot.lane.b32.xlu0 %v5001, 32
      %v5086 = vpop.permute.xlu0 %5085
      %5087 = vrot.lane.b32.xlu0 %v5002, 32
      %v5088 = vpop.permute.xlu0 %5087
      %5089 = vrot.lane.b32.xlu0 %v5003, 32
      %v5090 = vpop.permute.xlu0 %5089
      %5091 = vrot.lane.b32.xlu0 %v5004, 32
      %v5092 = vpop.permute.xlu0 %5091
      %5093 = vrot.lane.b32.xlu0 %v5005, 32
      %v5094 = vpop.permute.xlu0 %5093
      %5095 = vrot.lane.b32.xlu0 %v5006, 32
      %v5096 = vpop.permute.xlu0 %5095
      %5097 = vrot.lane.b32.xlu0 %v5007, 32
      %v5098 = vpop.permute.xlu0 %5097
      %5099 = vrot.lane.b32.xlu0 %v5008, 32
      %v5100 = vpop.permute.xlu0 %5099
      %5101 = vrot.lane.b32.xlu0 %v5009, 32
      %v5102 = vpop.permute.xlu0 %5101
      %5103 = vrot.lane.b32.xlu0 %v5010, 32
      %v5104 = vpop.permute.xlu0 %5103
      %5105 = vrot.lane.b32.xlu0 %v5011, 32
      %v5106 = vpop.permute.xlu0 %5105
      %5107 = vrot.lane.b32.xlu0 %v5012, 32
      %v5108 = vpop.permute.xlu0 %5107
      %5109 = vrot.lane.b32.xlu0 %v5013, 32
      %v5110 = vpop.permute.xlu0 %5109
      %5111 = vrot.lane.b32.xlu0 %v5014, 32
      %v5112 = vpop.permute.xlu0 %5111
      %5113 = vrot.lane.b32.xlu0 %v5015, 32
      %v5114 = vpop.permute.xlu0 %5113
      %5115 = vrot.lane.b32.xlu0 %v5016, 32
      %v5116 = vpop.permute.xlu0 %5115
      %5117 = vrot.lane.b32.xlu0 %v5017, 32
      %v5118 = vpop.permute.xlu0 %5117
      %5119 = vrot.lane.b32.xlu0 %v5018, 32
      %v5120 = vpop.permute.xlu0 %5119
      %5121 = vrot.lane.b32.xlu0 %v5019, 32
      %v5122 = vpop.permute.xlu0 %5121
      %5123 = vrot.lane.b32.xlu0 %v5020, 32
      %v5124 = vpop.permute.xlu0 %5123
      %5125 = vrot.lane.b32.xlu0 %v5021, 32
      %v5126 = vpop.permute.xlu0 %5125
      %5127 = vrot.lane.b32.xlu0 %v5022, 32
      %v5128 = vpop.permute.xlu0 %5127
      %5129 = vrot.lane.b32.xlu0 %v5023, 32
      %v5130 = vpop.permute.xlu0 %5129
      %5131 = vrot.lane.b32.xlu0 %v5024, 32
      %v5132 = vpop.permute.xlu0 %5131
      %5169 = vst.msk [vmem:[#allocation4] sm:$0xff] %vm2299, %v5062
      %5170 = vst.msk [vmem:[#allocation4 + $0x8] sm:$0xff] %vm2299, %v5064
      %5171 = vst.msk [vmem:[#allocation4 + $0x10] sm:$0xff] %vm2299, %v5066
      %5172 = vst.msk [vmem:[#allocation4 + $0x18] sm:$0xff] %vm2299, %v5068
      %5173 = vst.msk [vmem:[#allocation4 + $0x20] sm:$0xff] %vm2299, %v5070
      %5174 = vst.msk [vmem:[#allocation4 + $0x28] sm:$0xff] %vm2299, %v5072
      %5175 = vst.msk [vmem:[#allocation4 + $0x30] sm:$0xff] %vm2299, %v5074
      %5176 = vst.msk [vmem:[#allocation4 + $0x38] sm:$0xff] %vm2299, %v5076
      %5177 = vst.msk [vmem:[#allocation4 + $0x40] sm:$0xff] %vm2299, %v5078
      %5178 = vst.msk [vmem:[#allocation4 + $0x48] sm:$0xff] %vm2299, %v5080
      %5179 = vst.msk [vmem:[#allocation4 + $0x50] sm:$0xff] %vm2299, %v5082
      %5180 = vst.msk [vmem:[#allocation4 + $0x58] sm:$0xff] %vm2299, %v5084
      %5181 = vst.msk [vmem:[#allocation4 + $0x60] sm:$0xff] %vm2299, %v5086
      %5182 = vst.msk [vmem:[#allocation4 + $0x68] sm:$0xff] %vm2299, %v5088
      %5183 = vst.msk [vmem:[#allocation4 + $0x70] sm:$0xff] %vm2299, %v5090
      %5184 = vst.msk [vmem:[#allocation4 + $0x78] sm:$0xff] %vm2299, %v5092
      %5185 = vst.msk [vmem:[#allocation4 + $0x80] sm:$0xff] %vm2299, %v5094
      %5186 = vst.msk [vmem:[#allocation4 + $0x88] sm:$0xff] %vm2299, %v5096
      %5187 = vst.msk [vmem:[#allocation4 + $0x90] sm:$0xff] %vm2299, %v5098
      %5188 = vst.msk [vmem:[#allocation4 + $0x98] sm:$0xff] %vm2299, %v5100
      %5189 = vst.msk [vmem:[#allocation4 + $0xa0] sm:$0xff] %vm2299, %v5102
      %5190 = vst.msk [vmem:[#allocation4 + $0xa8] sm:$0xff] %vm2299, %v5104
      %5191 = vst.msk [vmem:[#allocation4 + $0xb0] sm:$0xff] %vm2299, %v5106
      %5192 = vst.msk [vmem:[#allocation4 + $0xb8] sm:$0xff] %vm2299, %v5108
      %5193 = vst.msk [vmem:[#allocation4 + $0xc0] sm:$0xff] %vm2299, %v5110
      %5194 = vst.msk [vmem:[#allocation4 + $0xc8] sm:$0xff] %vm2299, %v5112
      %5195 = vst.msk [vmem:[#allocation4 + $0xd0] sm:$0xff] %vm2299, %v5114
      %5196 = vst.msk [vmem:[#allocation4 + $0xd8] sm:$0xff] %vm2299, %v5116
      %5197 = vst.msk [vmem:[#allocation4 + $0xe0] sm:$0xff] %vm2299, %v5118
      %5198 = vst.msk [vmem:[#allocation4 + $0xe8] sm:$0xff] %vm2299, %v5120
      %5199 = vst.msk [vmem:[#allocation4 + $0xf0] sm:$0xff] %vm2299, %v5122
      %5200 = vst.msk [vmem:[#allocation4 + $0xf8] sm:$0xff] %vm2299, %v5124
      %5201 = vst.msk [vmem:[#allocation4 + $0x100] sm:$0xff] %vm2299, %v5126
      %5202 = vst.msk [vmem:[#allocation4 + $0x108] sm:$0xff] %vm2299, %v5128
      %5203 = vst.msk [vmem:[#allocation4 + $0x110] sm:$0xff] %vm2299, %v5130
      %5204 = vst.msk [vmem:[#allocation4 + $0x118] sm:$0xff] %vm2299, %v5132
      %v5205 = vld [vmem:[#allocation4] sm:$0xff]
      %v5206 = vld [vmem:[#allocation4 + $0x8] sm:$0xff]
      %v5207 = vld [vmem:[#allocation4 + $0x10] sm:$0xff]
      %v5208 = vld [vmem:[#allocation4 + $0x18] sm:$0xff]
      %v5209 = vld [vmem:[#allocation4 + $0x20] sm:$0xff]
      %v5210 = vld [vmem:[#allocation4 + $0x28] sm:$0xff]
      %v5211 = vld [vmem:[#allocation4 + $0x30] sm:$0xff]
      %v5212 = vld [vmem:[#allocation4 + $0x38] sm:$0xff]
      %v5213 = vld [vmem:[#allocation4 + $0x40] sm:$0xff]
      %v5214 = vld [vmem:[#allocation4 + $0x48] sm:$0xff]
      %v5215 = vld [vmem:[#allocation4 + $0x50] sm:$0xff]
      %v5216 = vld [vmem:[#allocation4 + $0x58] sm:$0xff]
      %v5217 = vld [vmem:[#allocation4 + $0x60] sm:$0xff]
      %v5218 = vld [vmem:[#allocation4 + $0x68] sm:$0xff]
      %v5219 = vld [vmem:[#allocation4 + $0x70] sm:$0xff]
      %v5220 = vld [vmem:[#allocation4 + $0x78] sm:$0xff]
      %v5221 = vld [vmem:[#allocation4 + $0x80] sm:$0xff]
      %v5222 = vld [vmem:[#allocation4 + $0x88] sm:$0xff]
      %v5223 = vld [vmem:[#allocation4 + $0x90] sm:$0xff]
      %v5224 = vld [vmem:[#allocation4 + $0x98] sm:$0xff]
      %v5225 = vld [vmem:[#allocation4 + $0xa0] sm:$0xff]
      %v5226 = vld [vmem:[#allocation4 + $0xa8] sm:$0xff]
      %v5227 = vld [vmem:[#allocation4 + $0xb0] sm:$0xff]
      %v5228 = vld [vmem:[#allocation4 + $0xb8] sm:$0xff]
      %v5229 = vld [vmem:[#allocation4 + $0xc0] sm:$0xff]
      %v5230 = vld [vmem:[#allocation4 + $0xc8] sm:$0xff]
      %v5231 = vld [vmem:[#allocation4 + $0xd0] sm:$0xff]
      %v5232 = vld [vmem:[#allocation4 + $0xd8] sm:$0xff]
      %v5233 = vld [vmem:[#allocation4 + $0xe0] sm:$0xff]
      %v5234 = vld [vmem:[#allocation4 + $0xe8] sm:$0xff]
      %v5235 = vld [vmem:[#allocation4 + $0xf0] sm:$0xff]
      %v5236 = vld [vmem:[#allocation4 + $0xf8] sm:$0xff]
      %v5237 = vld [vmem:[#allocation4 + $0x100] sm:$0xff]
      %v5238 = vld [vmem:[#allocation4 + $0x108] sm:$0xff]
      %v5239 = vld [vmem:[#allocation4 + $0x110] sm:$0xff]
      %v5240 = vld [vmem:[#allocation4 + $0x118] sm:$0xff]
      %v5241 = vpack.c.bf16 %v5206, %v5205
      %v5242 = vpack.c.bf16 %v5208, %v5207
      %v5243 = vpack.c.bf16 %v5210, %v5209
      %v5244 = vpack.c.bf16 %v5212, %v5211
      %v5245 = vpack.c.bf16 %v5214, %v5213
      %v5246 = vpack.c.bf16 %v5216, %v5215
      %v5247 = vpack.c.bf16 %v5218, %v5217
      %v5248 = vpack.c.bf16 %v5220, %v5219
      %v5249 = vpack.c.bf16 %v5222, %v5221
      %v5250 = vpack.c.bf16 %v5224, %v5223
      %v5251 = vpack.c.bf16 %v5226, %v5225
      %v5252 = vpack.c.bf16 %v5228, %v5227
      %v5253 = vpack.c.bf16 %v5230, %v5229
      %v5254 = vpack.c.bf16 %v5232, %v5231
      %v5255 = vpack.c.bf16 %v5234, %v5233
      %v5256 = vpack.c.bf16 %v5236, %v5235
      %v5257 = vpack.c.bf16 %v5238, %v5237
      %v5258 = vpack.c.bf16 %v5240, %v5239
      %v5259 = vld [vmem:[%s6] sm:$0xf]
      %v5260 = vld [vmem:[%s6 + $0x4] sm:$0xf]
      %v5261 = vld [vmem:[%s6 + $0x8] sm:$0xf]
      %v5262 = vld [vmem:[%s6 + $0xc] sm:$0xf]
      %v5263 = vld [vmem:[%s6 + $0x10] sm:$0x3]
      %v5264 = vld [vmem:[%s7] sm:$0x1]
      %v5266 = vperm.slane %v5264, 0
      %v5273 = vunpack.c.l.b16 %v5259
      %v5274 = vunpack.c.l.b16 %v5260
      %v5275 = vunpack.c.l.b16 %v5261
      %v5276 = vunpack.c.l.b16 %v5262
      %v5277 = vunpack.c.l.b16 %v5263
      %v5278 = vpack.c.b16 %v5274, %v5273
      %v5279 = vpack.c.b16 %v5276, %v5275
      %v5280 = vpack.c.b16 %v5277, %v5277
      %v5284 = vsel %vm2414, %v5241, 0
      %v5287 = vsel %vm2414, %v5242, 0
      %v5290 = vsel %vm2414, %v5243, 0
      %v5293 = vsel %vm2414, %v5244, 0
      %v5296 = vsel %vm2414, %v5245, 0
      %v5299 = vsel %vm2414, %v5246, 0
      %v5302 = vsel %vm2414, %v5247, 0
      %v5305 = vsel %vm2414, %v5248, 0
      %v5308 = vsel %vm2414, %v5249, 0
      %v5311 = vsel %vm2414, %v5250, 0
      %v5314 = vsel %vm2414, %v5251, 0
      %v5317 = vsel %vm2414, %v5252, 0
      %v5320 = vsel %vm2414, %v5253, 0
      %v5323 = vsel %vm2414, %v5254, 0
      %v5326 = vsel %vm2414, %v5255, 0
      %v5329 = vsel %vm2414, %v5256, 0
      %v5332 = vsel %vm2414, %v5257, 0
      %v5335 = vsel %vm2414, %v5258, 0
      %v5338 = vsel %vm2469, %v5280, 0
      %5340 = vmatpush.bf16.msra.mxu0 0
      %5341 = vmatpush.bf16.msra.mxu0 0
      %5342 = vmatpush.bf16.msra.mxu0 0
      %5343 = vmatpush.bf16.msra.mxu0 0
      %5344 = vmatpush.bf16.msra.mxu0 0
      %5345 = vmatpush.bf16.msra.mxu0 %v5338
      %5346 = vmatpush.bf16.msra.mxu0 %v5279
      %5347 = vmatpush.bf16.msra.mxu0 %v5278
      %5348 = vmatmul.bf16.gmra.mxu0 %v5284
      %v5349 = vpop.f32.mrf.mxu0
      %v5350 = vadd.f32 %v5266, %v5349
      %v5351 = vpop.f32.mrf.mxu0
      %v5352 = vadd.f32 %v5266, %v5351
      %5353 = vmatmul.bf16.gmra.mxu0 %v5287
      %v5354 = vpop.f32.mrf.mxu0
      %v5355 = vadd.f32 %v5266, %v5354
      %v5356 = vpop.f32.mrf.mxu0
      %v5357 = vadd.f32 %v5266, %v5356
      %5358 = vmatmul.bf16.gmra.mxu0 %v5290
      %v5359 = vpop.f32.mrf.mxu0
      %v5360 = vadd.f32 %v5266, %v5359
      %v5361 = vpop.f32.mrf.mxu0
      %v5362 = vadd.f32 %v5266, %v5361
      %5363 = vmatmul.bf16.gmra.mxu0 %v5293
      %v5364 = vpop.f32.mrf.mxu0
      %v5365 = vadd.f32 %v5266, %v5364
      %v5366 = vpop.f32.mrf.mxu0
      %v5367 = vadd.f32 %v5266, %v5366
      %5368 = vmatmul.bf16.gmra.mxu0 %v5296
      %v5369 = vpop.f32.mrf.mxu0
      %v5370 = vadd.f32 %v5266, %v5369
      %v5371 = vpop.f32.mrf.mxu0
      %v5372 = vadd.f32 %v5266, %v5371
      %5373 = vmatmul.bf16.gmra.mxu0 %v5299
      %v5374 = vpop.f32.mrf.mxu0
      %v5375 = vadd.f32 %v5266, %v5374
      %v5376 = vpop.f32.mrf.mxu0
      %v5377 = vadd.f32 %v5266, %v5376
      %5378 = vmatmul.bf16.gmra.mxu0 %v5302
      %v5379 = vpop.f32.mrf.mxu0
      %v5380 = vadd.f32 %v5266, %v5379
      %v5381 = vpop.f32.mrf.mxu0
      %v5382 = vadd.f32 %v5266, %v5381
      %5383 = vmatmul.bf16.gmra.mxu0 %v5305
      %v5384 = vpop.f32.mrf.mxu0
      %v5385 = vadd.f32 %v5266, %v5384
      %v5386 = vpop.f32.mrf.mxu0
      %v5387 = vadd.f32 %v5266, %v5386
      %5388 = vmatmul.bf16.gmra.mxu0 %v5308
      %v5389 = vpop.f32.mrf.mxu0
      %v5390 = vadd.f32 %v5266, %v5389
      %v5391 = vpop.f32.mrf.mxu0
      %v5392 = vadd.f32 %v5266, %v5391
      %5393 = vmatmul.bf16.gmra.mxu0 %v5311
      %v5394 = vpop.f32.mrf.mxu0
      %v5395 = vadd.f32 %v5266, %v5394
      %v5396 = vpop.f32.mrf.mxu0
      %v5397 = vadd.f32 %v5266, %v5396
      %5398 = vmatmul.bf16.gmra.mxu0 %v5314
      %v5399 = vpop.f32.mrf.mxu0
      %v5400 = vadd.f32 %v5266, %v5399
      %v5401 = vpop.f32.mrf.mxu0
      %v5402 = vadd.f32 %v5266, %v5401
      %5403 = vmatmul.bf16.gmra.mxu0 %v5317
      %v5404 = vpop.f32.mrf.mxu0
      %v5405 = vadd.f32 %v5266, %v5404
      %v5406 = vpop.f32.mrf.mxu0
      %v5407 = vadd.f32 %v5266, %v5406
      %5408 = vmatmul.bf16.gmra.mxu0 %v5320
      %v5409 = vpop.f32.mrf.mxu0
      %v5410 = vadd.f32 %v5266, %v5409
      %v5411 = vpop.f32.mrf.mxu0
      %v5412 = vadd.f32 %v5266, %v5411
      %5413 = vmatmul.bf16.gmra.mxu0 %v5323
      %v5414 = vpop.f32.mrf.mxu0
      %v5415 = vadd.f32 %v5266, %v5414
      %v5416 = vpop.f32.mrf.mxu0
      %v5417 = vadd.f32 %v5266, %v5416
      %5418 = vmatmul.bf16.gmra.mxu0 %v5326
      %v5419 = vpop.f32.mrf.mxu0
      %v5420 = vadd.f32 %v5266, %v5419
      %v5421 = vpop.f32.mrf.mxu0
      %v5422 = vadd.f32 %v5266, %v5421
      %5423 = vmatmul.bf16.gmra.mxu0 %v5329
      %v5424 = vpop.f32.mrf.mxu0
      %v5425 = vadd.f32 %v5266, %v5424
      %v5426 = vpop.f32.mrf.mxu0
      %v5427 = vadd.f32 %v5266, %v5426
      %5428 = vmatmul.bf16.gmra.mxu0 %v5332
      %v5429 = vpop.f32.mrf.mxu0
      %v5430 = vadd.f32 %v5266, %v5429
      %v5431 = vpop.f32.mrf.mxu0
      %v5432 = vadd.f32 %v5266, %v5431
      %5433 = vmatmul.bf16.gmra.mxu0 %v5335
      %v5434 = vpop.f32.mrf.mxu0
      %v5435 = vadd.f32 %v5266, %v5434
      %v5436 = vpop.f32.mrf.mxu0
      %v5437 = vadd.f32 %v5266, %v5436
      %5438 = vdwg.mxu0
      %v5439 = vld [vmem:[%s8] sm:$0x1]
      %v5440 = vld [vmem:[%s9] sm:$0x1]
      %v5441 = vmul.f32 %v5350, %v2577
      %v5442 = vmul.f32 %v5352, %v2582
      %v5443 = vmul.f32 %v5355, %v2587
      %v5444 = vmul.f32 %v5357, %v2592
      %v5445 = vmul.f32 %v5360, %v2597
      %v5446 = vmul.f32 %v5362, %v2602
      %v5447 = vmul.f32 %v5365, %v2607
      %v5448 = vmul.f32 %v5367, %v2612
      %v5449 = vmul.f32 %v5370, %v2617
      %v5450 = vmul.f32 %v5372, %v2622
      %v5451 = vmul.f32 %v5375, %v2627
      %v5452 = vmul.f32 %v5377, %v2632
      %v5453 = vmul.f32 %v5380, %v2637
      %v5454 = vmul.f32 %v5382, %v2642
      %v5455 = vmul.f32 %v5385, %v2647
      %v5456 = vmul.f32 %v5387, %v2652
      %v5457 = vmul.f32 %v5390, %v2657
      %v5458 = vmul.f32 %v5392, %v2662
      %v5459 = vmul.f32 %v5395, %v2667
      %v5460 = vmul.f32 %v5397, %v2672
      %v5461 = vmul.f32 %v5400, %v2677
      %v5462 = vmul.f32 %v5402, %v2682
      %v5463 = vmul.f32 %v5405, %v2687
      %v5464 = vmul.f32 %v5407, %v2692
      %v5465 = vmul.f32 %v5410, %v2697
      %v5466 = vmul.f32 %v5412, %v2702
      %v5467 = vmul.f32 %v5415, %v2707
      %v5468 = vmul.f32 %v5417, %v2712
      %v5469 = vmul.f32 %v5420, %v2717
      %v5470 = vmul.f32 %v5422, %v2722
      %v5471 = vmul.f32 %v5425, %v2727
      %v5472 = vmul.f32 %v5427, %v2732
      %v5473 = vmul.f32 %v5430, %v2737
      %v5474 = vmul.f32 %v5432, %v2742
      %v5475 = vmul.f32 %v5435, %v2747
      %v5476 = vmul.f32 %v5437, %v2752
      %v5477 = vsel %vm483, %v5441, 0.0
      %v5478 = vsel %vm483, %v5442, 0.0
      %v5479 = vadd.f32 %v5477, %v5478
      %v5480 = vsel %vm483, %v5443, 0.0
      %v5481 = vadd.f32 %v5479, %v5480
      %v5482 = vsel %vm483, %v5444, 0.0
      %v5483 = vadd.f32 %v5481, %v5482
      %v5484 = vsel %vm483, %v5445, 0.0
      %v5485 = vadd.f32 %v5483, %v5484
      %v5486 = vsel %vm483, %v5446, 0.0
      %v5487 = vadd.f32 %v5485, %v5486
      %v5488 = vsel %vm483, %v5447, 0.0
      %v5489 = vadd.f32 %v5487, %v5488
      %v5490 = vsel %vm483, %v5448, 0.0
      %v5491 = vadd.f32 %v5489, %v5490
      %v5492 = vsel %vm483, %v5449, 0.0
      %v5493 = vadd.f32 %v5491, %v5492
      %v5494 = vsel %vm483, %v5450, 0.0
      %v5495 = vadd.f32 %v5493, %v5494
      %v5496 = vsel %vm483, %v5451, 0.0
      %v5497 = vadd.f32 %v5495, %v5496
      %v5498 = vsel %vm483, %v5452, 0.0
      %v5499 = vadd.f32 %v5497, %v5498
      %v5500 = vsel %vm483, %v5453, 0.0
      %v5501 = vadd.f32 %v5499, %v5500
      %v5502 = vsel %vm483, %v5454, 0.0
      %v5503 = vadd.f32 %v5501, %v5502
      %v5504 = vsel %vm483, %v5455, 0.0
      %v5505 = vadd.f32 %v5503, %v5504
      %v5506 = vsel %vm483, %v5456, 0.0
      %v5507 = vadd.f32 %v5505, %v5506
      %v5508 = vsel %vm483, %v5457, 0.0
      %v5509 = vadd.f32 %v5507, %v5508
      %v5510 = vsel %vm483, %v5458, 0.0
      %v5511 = vadd.f32 %v5509, %v5510
      %v5512 = vsel %vm483, %v5459, 0.0
      %v5513 = vadd.f32 %v5511, %v5512
      %v5514 = vsel %vm483, %v5460, 0.0
      %v5515 = vadd.f32 %v5513, %v5514
      %v5516 = vsel %vm483, %v5461, 0.0
      %v5517 = vadd.f32 %v5515, %v5516
      %v5518 = vsel %vm483, %v5462, 0.0
      %v5519 = vadd.f32 %v5517, %v5518
      %v5520 = vsel %vm483, %v5463, 0.0
      %v5521 = vadd.f32 %v5519, %v5520
      %v5522 = vsel %vm483, %v5464, 0.0
      %v5523 = vadd.f32 %v5521, %v5522
      %v5524 = vsel %vm483, %v5465, 0.0
      %v5525 = vadd.f32 %v5523, %v5524
      %v5526 = vsel %vm483, %v5466, 0.0
      %v5527 = vadd.f32 %v5525, %v5526
      %v5528 = vsel %vm483, %v5467, 0.0
      %v5529 = vadd.f32 %v5527, %v5528
      %v5530 = vsel %vm483, %v5468, 0.0
      %v5531 = vadd.f32 %v5529, %v5530
      %v5532 = vsel %vm483, %v5469, 0.0
      %v5533 = vadd.f32 %v5531, %v5532
      %v5534 = vsel %vm483, %v5470, 0.0
      %v5535 = vadd.f32 %v5533, %v5534
      %v5536 = vsel %vm483, %v5471, 0.0
      %v5537 = vadd.f32 %v5535, %v5536
      %v5538 = vsel %vm483, %v5472, 0.0
      %v5539 = vadd.f32 %v5537, %v5538
      %v5540 = vsel %vm483, %v5473, 0.0
      %v5541 = vadd.f32 %v5539, %v5540
      %v5542 = vsel %vm483, %v5474, 0.0
      %v5543 = vadd.f32 %v5541, %v5542
      %v5544 = vsel %vm483, %v5475, 0.0
      %v5545 = vadd.f32 %v5543, %v5544
      %v5546 = vsel %vm483, %v5476, 0.0
      %v5547 = vadd.f32 %v5545, %v5546
      %v5548 = vrot.slane %v5547, 4
      %v5549 = vadd.f32 %v5547, %v5548
      %v5550 = vrot.slane %v5549, 2
      %v5551 = vadd.f32 %v5549, %v5550
      %v5552 = vrot.slane %v5551, 1
      %v5553 = vadd.f32 %v5551, %v5552
      %v5554 = vmul.f32 %v5441, %v5350
      %v5555 = vmul.f32 %v5442, %v5352
      %v5556 = vmul.f32 %v5443, %v5355
      %v5557 = vmul.f32 %v5444, %v5357
      %v5558 = vmul.f32 %v5445, %v5360
      %v5559 = vmul.f32 %v5446, %v5362
      %v5560 = vmul.f32 %v5447, %v5365
      %v5561 = vmul.f32 %v5448, %v5367
      %v5562 = vmul.f32 %v5449, %v5370
      %v5563 = vmul.f32 %v5450, %v5372
      %v5564 = vmul.f32 %v5451, %v5375
      %v5565 = vmul.f32 %v5452, %v5377
      %v5566 = vmul.f32 %v5453, %v5380
      %v5567 = vmul.f32 %v5454, %v5382
      %v5568 = vmul.f32 %v5455, %v5385
      %v5569 = vmul.f32 %v5456, %v5387
      %v5570 = vmul.f32 %v5457, %v5390
      %v5571 = vmul.f32 %v5458, %v5392
      %v5572 = vmul.f32 %v5459, %v5395
      %v5573 = vmul.f32 %v5460, %v5397
      %v5574 = vmul.f32 %v5461, %v5400
      %v5575 = vmul.f32 %v5462, %v5402
      %v5576 = vmul.f32 %v5463, %v5405
      %v5577 = vmul.f32 %v5464, %v5407
      %v5578 = vmul.f32 %v5465, %v5410
      %v5579 = vmul.f32 %v5466, %v5412
      %v5580 = vmul.f32 %v5467, %v5415
      %v5581 = vmul.f32 %v5468, %v5417
      %v5582 = vmul.f32 %v5469, %v5420
      %v5583 = vmul.f32 %v5470, %v5422
      %v5584 = vmul.f32 %v5471, %v5425
      %v5585 = vmul.f32 %v5472, %v5427
      %v5586 = vmul.f32 %v5473, %v5430
      %v5587 = vmul.f32 %v5474, %v5432
      %v5588 = vmul.f32 %v5475, %v5435
      %v5589 = vmul.f32 %v5476, %v5437
      %v5590 = vsel %vm483, %v5554, 0.0
      %v5591 = vsel %vm483, %v5555, 0.0
      %v5592 = vadd.f32 %v5590, %v5591
      %v5593 = vsel %vm483, %v5556, 0.0
      %v5594 = vadd.f32 %v5592, %v5593
      %v5595 = vsel %vm483, %v5557, 0.0
      %v5596 = vadd.f32 %v5594, %v5595
      %v5597 = vsel %vm483, %v5558, 0.0
      %v5598 = vadd.f32 %v5596, %v5597
      %v5599 = vsel %vm483, %v5559, 0.0
      %v5600 = vadd.f32 %v5598, %v5599
      %v5601 = vsel %vm483, %v5560, 0.0
      %v5602 = vadd.f32 %v5600, %v5601
      %v5603 = vsel %vm483, %v5561, 0.0
      %v5604 = vadd.f32 %v5602, %v5603
      %v5605 = vsel %vm483, %v5562, 0.0
      %v5606 = vadd.f32 %v5604, %v5605
      %v5607 = vsel %vm483, %v5563, 0.0
      %v5608 = vadd.f32 %v5606, %v5607
      %v5609 = vsel %vm483, %v5564, 0.0
      %v5610 = vadd.f32 %v5608, %v5609
      %v5611 = vsel %vm483, %v5565, 0.0
      %v5612 = vadd.f32 %v5610, %v5611
      %v5613 = vsel %vm483, %v5566, 0.0
      %v5614 = vadd.f32 %v5612, %v5613
      %v5615 = vsel %vm483, %v5567, 0.0
      %v5616 = vadd.f32 %v5614, %v5615
      %v5617 = vsel %vm483, %v5568, 0.0
      %v5618 = vadd.f32 %v5616, %v5617
      %v5619 = vsel %vm483, %v5569, 0.0
      %v5620 = vadd.f32 %v5618, %v5619
      %v5621 = vsel %vm483, %v5570, 0.0
      %v5622 = vadd.f32 %v5620, %v5621
      %v5623 = vsel %vm483, %v5571, 0.0
      %v5624 = vadd.f32 %v5622, %v5623
      %v5625 = vsel %vm483, %v5572, 0.0
      %v5626 = vadd.f32 %v5624, %v5625
      %v5627 = vsel %vm483, %v5573, 0.0
      %v5628 = vadd.f32 %v5626, %v5627
      %v5629 = vsel %vm483, %v5574, 0.0
      %v5630 = vadd.f32 %v5628, %v5629
      %v5631 = vsel %vm483, %v5575, 0.0
      %v5632 = vadd.f32 %v5630, %v5631
      %v5633 = vsel %vm483, %v5576, 0.0
      %v5634 = vadd.f32 %v5632, %v5633
      %v5635 = vsel %vm483, %v5577, 0.0
      %v5636 = vadd.f32 %v5634, %v5635
      %v5637 = vsel %vm483, %v5578, 0.0
      %v5638 = vadd.f32 %v5636, %v5637
      %v5639 = vsel %vm483, %v5579, 0.0
      %v5640 = vadd.f32 %v5638, %v5639
      %v5641 = vsel %vm483, %v5580, 0.0
      %v5642 = vadd.f32 %v5640, %v5641
      %v5643 = vsel %vm483, %v5581, 0.0
      %v5644 = vadd.f32 %v5642, %v5643
      %v5645 = vsel %vm483, %v5582, 0.0
      %v5646 = vadd.f32 %v5644, %v5645
      %v5647 = vsel %vm483, %v5583, 0.0
      %v5648 = vadd.f32 %v5646, %v5647
      %v5649 = vsel %vm483, %v5584, 0.0
      %v5650 = vadd.f32 %v5648, %v5649
      %v5651 = vsel %vm483, %v5585, 0.0
      %v5652 = vadd.f32 %v5650, %v5651
      %v5653 = vsel %vm483, %v5586, 0.0
      %v5654 = vadd.f32 %v5652, %v5653
      %v5655 = vsel %vm483, %v5587, 0.0
      %v5656 = vadd.f32 %v5654, %v5655
      %v5657 = vsel %vm483, %v5588, 0.0
      %v5658 = vadd.f32 %v5656, %v5657
      %v5659 = vsel %vm483, %v5589, 0.0
      %v5660 = vadd.f32 %v5658, %v5659
      %v5661 = vrot.slane %v5660, 4
      %v5662 = vadd.f32 %v5660, %v5661
      %v5663 = vrot.slane %v5662, 2
      %v5664 = vadd.f32 %v5662, %v5663
      %v5665 = vrot.slane %v5664, 1
      %v5666 = vadd.f32 %v5664, %v5665
      %v5667 = vmul.f32 %v5553, 0.00390625
      %v5668 = vmul.f32 %v5666, 0.00390625
      %v5669 = vmul.f32 %v5667, %v5667
      %v5670 = vsub.f32 %v5668, %v5669
      %v5671 = vmax.f32 %v5670, 0.0
      %v5672 = vsub.f32 %v5350, %v5667
      %v5673 = vsub.f32 %v5352, %v5667
      %v5674 = vsub.f32 %v5355, %v5667
      %v5675 = vsub.f32 %v5357, %v5667
      %v5676 = vsub.f32 %v5360, %v5667
      %v5677 = vsub.f32 %v5362, %v5667
      %v5678 = vsub.f32 %v5365, %v5667
      %v5679 = vsub.f32 %v5367, %v5667
      %v5680 = vsub.f32 %v5370, %v5667
      %v5681 = vsub.f32 %v5372, %v5667
      %v5682 = vsub.f32 %v5375, %v5667
      %v5683 = vsub.f32 %v5377, %v5667
      %v5684 = vsub.f32 %v5380, %v5667
      %v5685 = vsub.f32 %v5382, %v5667
      %v5686 = vsub.f32 %v5385, %v5667
      %v5687 = vsub.f32 %v5387, %v5667
      %v5688 = vsub.f32 %v5390, %v5667
      %v5689 = vsub.f32 %v5392, %v5667
      %v5690 = vsub.f32 %v5395, %v5667
      %v5691 = vsub.f32 %v5397, %v5667
      %v5692 = vsub.f32 %v5400, %v5667
      %v5693 = vsub.f32 %v5402, %v5667
      %v5694 = vsub.f32 %v5405, %v5667
      %v5695 = vsub.f32 %v5407, %v5667
      %v5696 = vsub.f32 %v5410, %v5667
      %v5697 = vsub.f32 %v5412, %v5667
      %v5698 = vsub.f32 %v5415, %v5667
      %v5699 = vsub.f32 %v5417, %v5667
      %v5700 = vsub.f32 %v5420, %v5667
      %v5701 = vsub.f32 %v5422, %v5667
      %v5702 = vsub.f32 %v5425, %v5667
      %v5703 = vsub.f32 %v5427, %v5667
      %v5704 = vsub.f32 %v5430, %v5667
      %v5705 = vsub.f32 %v5432, %v5667
      %v5706 = vsub.f32 %v5435, %v5667
      %v5707 = vsub.f32 %v5437, %v5667
      %v5708 = vadd.f32 %v5671, 1e-05
      %v5709 = vrsqrt.pop %v5708
      %v5710 = vmul.f32 %v5709, %v5708
      %v5711 = vmul.f32 %v5710, %v5709
      %v5712 = vmul.f32 0.5, %v5711
      %v5713 = vsub.f32 1.5, %v5712
      %v5714 = vmul.f32 %v5709, %v5713
      %vm5715 = vweird.f32 %v5708
      %vm5716 = vweird.f32 %v5709
      %vm5717 = vmor %vm5715, %vm5716
      %v5718 = vsel %vm5717, %v5709, %v5714
      %v5719 = vmul.f32 %v5672, %v5718
      %v5720 = vmul.f32 %v5673, %v5718
      %v5721 = vmul.f32 %v5674, %v5718
      %v5722 = vmul.f32 %v5675, %v5718
      %v5723 = vmul.f32 %v5676, %v5718
      %v5724 = vmul.f32 %v5677, %v5718
      %v5725 = vmul.f32 %v5678, %v5718
      %v5726 = vmul.f32 %v5679, %v5718
      %v5727 = vmul.f32 %v5680, %v5718
      %v5728 = vmul.f32 %v5681, %v5718
      %v5729 = vmul.f32 %v5682, %v5718
      %v5730 = vmul.f32 %v5683, %v5718
      %v5731 = vmul.f32 %v5684, %v5718
      %v5732 = vmul.f32 %v5685, %v5718
      %v5733 = vmul.f32 %v5686, %v5718
      %v5734 = vmul.f32 %v5687, %v5718
      %v5735 = vmul.f32 %v5688, %v5718
      %v5736 = vmul.f32 %v5689, %v5718
      %v5737 = vmul.f32 %v5690, %v5718
      %v5738 = vmul.f32 %v5691, %v5718
      %v5739 = vmul.f32 %v5692, %v5718
      %v5740 = vmul.f32 %v5693, %v5718
      %v5741 = vmul.f32 %v5694, %v5718
      %v5742 = vmul.f32 %v5695, %v5718
      %v5743 = vmul.f32 %v5696, %v5718
      %v5744 = vmul.f32 %v5697, %v5718
      %v5745 = vmul.f32 %v5698, %v5718
      %v5746 = vmul.f32 %v5699, %v5718
      %v5747 = vmul.f32 %v5700, %v5718
      %v5748 = vmul.f32 %v5701, %v5718
      %v5749 = vmul.f32 %v5702, %v5718
      %v5750 = vmul.f32 %v5703, %v5718
      %v5751 = vmul.f32 %v5704, %v5718
      %v5752 = vmul.f32 %v5705, %v5718
      %v5753 = vmul.f32 %v5706, %v5718
      %v5754 = vmul.f32 %v5707, %v5718
      %v5756 = vperm.slane %v5439, 0
      %v5758 = vmul.f32 %v5719, %v5756
      %v5759 = vmul.f32 %v5720, %v5756
      %v5760 = vmul.f32 %v5721, %v5756
      %v5761 = vmul.f32 %v5722, %v5756
      %v5762 = vmul.f32 %v5723, %v5756
      %v5763 = vmul.f32 %v5724, %v5756
      %v5764 = vmul.f32 %v5725, %v5756
      %v5765 = vmul.f32 %v5726, %v5756
      %v5766 = vmul.f32 %v5727, %v5756
      %v5767 = vmul.f32 %v5728, %v5756
      %v5768 = vmul.f32 %v5729, %v5756
      %v5769 = vmul.f32 %v5730, %v5756
      %v5770 = vmul.f32 %v5731, %v5756
      %v5771 = vmul.f32 %v5732, %v5756
      %v5772 = vmul.f32 %v5733, %v5756
      %v5773 = vmul.f32 %v5734, %v5756
      %v5774 = vmul.f32 %v5735, %v5756
      %v5775 = vmul.f32 %v5736, %v5756
      %v5776 = vmul.f32 %v5737, %v5756
      %v5777 = vmul.f32 %v5738, %v5756
      %v5778 = vmul.f32 %v5739, %v5756
      %v5779 = vmul.f32 %v5740, %v5756
      %v5780 = vmul.f32 %v5741, %v5756
      %v5781 = vmul.f32 %v5742, %v5756
      %v5782 = vmul.f32 %v5743, %v5756
      %v5783 = vmul.f32 %v5744, %v5756
      %v5784 = vmul.f32 %v5745, %v5756
      %v5785 = vmul.f32 %v5746, %v5756
      %v5786 = vmul.f32 %v5747, %v5756
      %v5787 = vmul.f32 %v5748, %v5756
      %v5788 = vmul.f32 %v5749, %v5756
      %v5789 = vmul.f32 %v5750, %v5756
      %v5790 = vmul.f32 %v5751, %v5756
      %v5791 = vmul.f32 %v5752, %v5756
      %v5792 = vmul.f32 %v5753, %v5756
      %v5793 = vmul.f32 %v5754, %v5756
      %v5795 = vperm.slane %v5440, 0
      %v5797 = vadd.f32 %v5758, %v5795
      %v5798 = vadd.f32 %v5759, %v5795
      %v5799 = vadd.f32 %v5760, %v5795
      %v5800 = vadd.f32 %v5761, %v5795
      %v5801 = vadd.f32 %v5762, %v5795
      %v5802 = vadd.f32 %v5763, %v5795
      %v5803 = vadd.f32 %v5764, %v5795
      %v5804 = vadd.f32 %v5765, %v5795
      %v5805 = vadd.f32 %v5766, %v5795
      %v5806 = vadd.f32 %v5767, %v5795
      %v5807 = vadd.f32 %v5768, %v5795
      %v5808 = vadd.f32 %v5769, %v5795
      %v5809 = vadd.f32 %v5770, %v5795
      %v5810 = vadd.f32 %v5771, %v5795
      %v5811 = vadd.f32 %v5772, %v5795
      %v5812 = vadd.f32 %v5773, %v5795
      %v5813 = vadd.f32 %v5774, %v5795
      %v5814 = vadd.f32 %v5775, %v5795
      %v5815 = vadd.f32 %v5776, %v5795
      %v5816 = vadd.f32 %v5777, %v5795
      %v5817 = vadd.f32 %v5778, %v5795
      %v5818 = vadd.f32 %v5779, %v5795
      %v5819 = vadd.f32 %v5780, %v5795
      %v5820 = vadd.f32 %v5781, %v5795
      %v5821 = vadd.f32 %v5782, %v5795
      %v5822 = vadd.f32 %v5783, %v5795
      %v5823 = vadd.f32 %v5784, %v5795
      %v5824 = vadd.f32 %v5785, %v5795
      %v5825 = vadd.f32 %v5786, %v5795
      %v5826 = vadd.f32 %v5787, %v5795
      %v5827 = vadd.f32 %v5788, %v5795
      %v5828 = vadd.f32 %v5789, %v5795
      %v5829 = vadd.f32 %v5790, %v5795
      %v5830 = vadd.f32 %v5791, %v5795
      %v5831 = vadd.f32 %v5792, %v5795
      %v5832 = vadd.f32 %v5793, %v5795
      %vm5833 = vcmp.ge.f32.partialorder %v5797, 0.0
      %vm5834 = vcmp.ge.f32.partialorder %v5798, 0.0
      %vm5835 = vcmp.ge.f32.partialorder %v5799, 0.0
      %vm5836 = vcmp.ge.f32.partialorder %v5800, 0.0
      %vm5837 = vcmp.ge.f32.partialorder %v5801, 0.0
      %vm5838 = vcmp.ge.f32.partialorder %v5802, 0.0
      %vm5839 = vcmp.ge.f32.partialorder %v5803, 0.0
      %vm5840 = vcmp.ge.f32.partialorder %v5804, 0.0
      %vm5841 = vcmp.ge.f32.partialorder %v5805, 0.0
      %vm5842 = vcmp.ge.f32.partialorder %v5806, 0.0
      %vm5843 = vcmp.ge.f32.partialorder %v5807, 0.0
      %vm5844 = vcmp.ge.f32.partialorder %v5808, 0.0
      %vm5845 = vcmp.ge.f32.partialorder %v5809, 0.0
      %vm5846 = vcmp.ge.f32.partialorder %v5810, 0.0
      %vm5847 = vcmp.ge.f32.partialorder %v5811, 0.0
      %vm5848 = vcmp.ge.f32.partialorder %v5812, 0.0
      %vm5849 = vcmp.ge.f32.partialorder %v5813, 0.0
      %vm5850 = vcmp.ge.f32.partialorder %v5814, 0.0
      %vm5851 = vcmp.ge.f32.partialorder %v5815, 0.0
      %vm5852 = vcmp.ge.f32.partialorder %v5816, 0.0
      %vm5853 = vcmp.ge.f32.partialorder %v5817, 0.0
      %vm5854 = vcmp.ge.f32.partialorder %v5818, 0.0
      %vm5855 = vcmp.ge.f32.partialorder %v5819, 0.0
      %vm5856 = vcmp.ge.f32.partialorder %v5820, 0.0
      %vm5857 = vcmp.ge.f32.partialorder %v5821, 0.0
      %vm5858 = vcmp.ge.f32.partialorder %v5822, 0.0
      %vm5859 = vcmp.ge.f32.partialorder %v5823, 0.0
      %vm5860 = vcmp.ge.f32.partialorder %v5824, 0.0
      %vm5861 = vcmp.ge.f32.partialorder %v5825, 0.0
      %vm5862 = vcmp.ge.f32.partialorder %v5826, 0.0
      %vm5863 = vcmp.ge.f32.partialorder %v5827, 0.0
      %vm5864 = vcmp.ge.f32.partialorder %v5828, 0.0
      %vm5865 = vcmp.ge.f32.partialorder %v5829, 0.0
      %vm5866 = vcmp.ge.f32.partialorder %v5830, 0.0
      %vm5867 = vcmp.ge.f32.partialorder %v5831, 0.0
      %vm5868 = vcmp.ge.f32.partialorder %v5832, 0.0
      %v5869 = vmul.f32 %v5797, 0.25
      %v5870 = vmul.f32 %v5798, 0.25
      %v5871 = vmul.f32 %v5799, 0.25
      %v5872 = vmul.f32 %v5800, 0.25
      %v5873 = vmul.f32 %v5801, 0.25
      %v5874 = vmul.f32 %v5802, 0.25
      %v5875 = vmul.f32 %v5803, 0.25
      %v5876 = vmul.f32 %v5804, 0.25
      %v5877 = vmul.f32 %v5805, 0.25
      %v5878 = vmul.f32 %v5806, 0.25
      %v5879 = vmul.f32 %v5807, 0.25
      %v5880 = vmul.f32 %v5808, 0.25
      %v5881 = vmul.f32 %v5809, 0.25
      %v5882 = vmul.f32 %v5810, 0.25
      %v5883 = vmul.f32 %v5811, 0.25
      %v5884 = vmul.f32 %v5812, 0.25
      %v5885 = vmul.f32 %v5813, 0.25
      %v5886 = vmul.f32 %v5814, 0.25
      %v5887 = vmul.f32 %v5815, 0.25
      %v5888 = vmul.f32 %v5816, 0.25
      %v5889 = vmul.f32 %v5817, 0.25
      %v5890 = vmul.f32 %v5818, 0.25
      %v5891 = vmul.f32 %v5819, 0.25
      %v5892 = vmul.f32 %v5820, 0.25
      %v5893 = vmul.f32 %v5821, 0.25
      %v5894 = vmul.f32 %v5822, 0.25
      %v5895 = vmul.f32 %v5823, 0.25
      %v5896 = vmul.f32 %v5824, 0.25
      %v5897 = vmul.f32 %v5825, 0.25
      %v5898 = vmul.f32 %v5826, 0.25
      %v5899 = vmul.f32 %v5827, 0.25
      %v5900 = vmul.f32 %v5828, 0.25
      %v5901 = vmul.f32 %v5829, 0.25
      %v5902 = vmul.f32 %v5830, 0.25
      %v5903 = vmul.f32 %v5831, 0.25
      %v5904 = vmul.f32 %v5832, 0.25
      %v5905 = vsel %vm5833, %v5797, %v5869
      %v5906 = vsel %vm5834, %v5798, %v5870
      %v5907 = vsel %vm5835, %v5799, %v5871
      %v5908 = vsel %vm5836, %v5800, %v5872
      %v5909 = vsel %vm5837, %v5801, %v5873
      %v5910 = vsel %vm5838, %v5802, %v5874
      %v5911 = vsel %vm5839, %v5803, %v5875
      %v5912 = vsel %vm5840, %v5804, %v5876
      %v5913 = vsel %vm5841, %v5805, %v5877
      %v5914 = vsel %vm5842, %v5806, %v5878
      %v5915 = vsel %vm5843, %v5807, %v5879
      %v5916 = vsel %vm5844, %v5808, %v5880
      %v5917 = vsel %vm5845, %v5809, %v5881
      %v5918 = vsel %vm5846, %v5810, %v5882
      %v5919 = vsel %vm5847, %v5811, %v5883
      %v5920 = vsel %vm5848, %v5812, %v5884
      %v5921 = vsel %vm5849, %v5813, %v5885
      %v5922 = vsel %vm5850, %v5814, %v5886
      %v5923 = vsel %vm5851, %v5815, %v5887
      %v5924 = vsel %vm5852, %v5816, %v5888
      %v5925 = vsel %vm5853, %v5817, %v5889
      %v5926 = vsel %vm5854, %v5818, %v5890
      %v5927 = vsel %vm5855, %v5819, %v5891
      %v5928 = vsel %vm5856, %v5820, %v5892
      %v5929 = vsel %vm5857, %v5821, %v5893
      %v5930 = vsel %vm5858, %v5822, %v5894
      %v5931 = vsel %vm5859, %v5823, %v5895
      %v5932 = vsel %vm5860, %v5824, %v5896
      %v5933 = vsel %vm5861, %v5825, %v5897
      %v5934 = vsel %vm5862, %v5826, %v5898
      %v5935 = vsel %vm5863, %v5827, %v5899
      %v5936 = vsel %vm5864, %v5828, %v5900
      %v5937 = vsel %vm5865, %v5829, %v5901
      %v5938 = vsel %vm5866, %v5830, %v5902
      %v5939 = vsel %vm5867, %v5831, %v5903
      %v5940 = vsel %vm5868, %v5832, %v5904
      %v5941 = vmul.f32 %v5905, %v2577
      %v5942 = vmul.f32 %v5906, %v2582
      %v5943 = vmul.f32 %v5907, %v2587
      %v5944 = vmul.f32 %v5908, %v2592
      %v5945 = vmul.f32 %v5909, %v2597
      %v5946 = vmul.f32 %v5910, %v2602
      %v5947 = vmul.f32 %v5911, %v2607
      %v5948 = vmul.f32 %v5912, %v2612
      %v5949 = vmul.f32 %v5913, %v2617
      %v5950 = vmul.f32 %v5914, %v2622
      %v5951 = vmul.f32 %v5915, %v2627
      %v5952 = vmul.f32 %v5916, %v2632
      %v5953 = vmul.f32 %v5917, %v2637
      %v5954 = vmul.f32 %v5918, %v2642
      %v5955 = vmul.f32 %v5919, %v2647
      %v5956 = vmul.f32 %v5920, %v2652
      %v5957 = vmul.f32 %v5921, %v2657
      %v5958 = vmul.f32 %v5922, %v2662
      %v5959 = vmul.f32 %v5923, %v2667
      %v5960 = vmul.f32 %v5924, %v2672
      %v5961 = vmul.f32 %v5925, %v2677
      %v5962 = vmul.f32 %v5926, %v2682
      %v5963 = vmul.f32 %v5927, %v2687
      %v5964 = vmul.f32 %v5928, %v2692
      %v5965 = vmul.f32 %v5929, %v2697
      %v5966 = vmul.f32 %v5930, %v2702
      %v5967 = vmul.f32 %v5931, %v2707
      %v5968 = vmul.f32 %v5932, %v2712
      %v5969 = vmul.f32 %v5933, %v2717
      %v5970 = vmul.f32 %v5934, %v2722
      %v5971 = vmul.f32 %v5935, %v2727
      %v5972 = vmul.f32 %v5936, %v2732
      %v5973 = vmul.f32 %v5937, %v2737
      %v5974 = vmul.f32 %v5938, %v2742
      %v5975 = vmul.f32 %v5939, %v2747
      %v5976 = vmul.f32 %v5940, %v2752
      %v5977 = vadd.f32 %v5941, %v3290
      %v5978 = vadd.f32 %v5942, %v3291
      %v5979 = vadd.f32 %v5943, %v3292
      %v5980 = vadd.f32 %v5944, %v3293
      %v5981 = vadd.f32 %v5945, %v3294
      %v5982 = vadd.f32 %v5946, %v3295
      %v5983 = vadd.f32 %v5947, %v3296
      %v5984 = vadd.f32 %v5948, %v3297
      %v5985 = vadd.f32 %v5949, %v3298
      %v5986 = vadd.f32 %v5950, %v3299
      %v5987 = vadd.f32 %v5951, %v3300
      %v5988 = vadd.f32 %v5952, %v3301
      %v5989 = vadd.f32 %v5953, %v3302
      %v5990 = vadd.f32 %v5954, %v3303
      %v5991 = vadd.f32 %v5955, %v3304
      %v5992 = vadd.f32 %v5956, %v3305
      %v5993 = vadd.f32 %v5957, %v3306
      %v5994 = vadd.f32 %v5958, %v3307
      %v5995 = vadd.f32 %v5959, %v3308
      %v5996 = vadd.f32 %v5960, %v3309
      %v5997 = vadd.f32 %v5961, %v3310
      %v5998 = vadd.f32 %v5962, %v3311
      %v5999 = vadd.f32 %v5963, %v3312
      %v6000 = vadd.f32 %v5964, %v3313
      %v6001 = vadd.f32 %v5965, %v3314
      %v6002 = vadd.f32 %v5966, %v3315
      %v6003 = vadd.f32 %v5967, %v3316
      %v6004 = vadd.f32 %v5968, %v3317
      %v6005 = vadd.f32 %v5969, %v3318
      %v6006 = vadd.f32 %v5970, %v3319
      %v6007 = vadd.f32 %v5971, %v3320
      %v6008 = vadd.f32 %v5972, %v3321
      %v6009 = vadd.f32 %v5973, %v3322
      %v6010 = vadd.f32 %v5974, %v3323
      %v6011 = vadd.f32 %v5975, %v3324
      %v6012 = vadd.f32 %v5976, %v3325
      %6013 = vst.msk [vmem:[%s359] sm:$0xff] %vm483, %v5977
      %6014 = vst.msk [vmem:[%s359 + $0x8] sm:$0xff] %vm483, %v5978
      %6015 = vst.msk [vmem:[%s359 + $0x10] sm:$0xff] %vm483, %v5979
      %6016 = vst.msk [vmem:[%s359 + $0x18] sm:$0xff] %vm483, %v5980
      %6017 = vst.msk [vmem:[%s359 + $0x20] sm:$0xff] %vm483, %v5981
      %6018 = vst.msk [vmem:[%s359 + $0x28] sm:$0xff] %vm483, %v5982
      %6019 = vst.msk [vmem:[%s359 + $0x30] sm:$0xff] %vm483, %v5983
      %6020 = vst.msk [vmem:[%s359 + $0x38] sm:$0xff] %vm483, %v5984
      %6021 = vst.msk [vmem:[%s359 + $0x40] sm:$0xff] %vm483, %v5985
      %6022 = vst.msk [vmem:[%s359 + $0x48] sm:$0xff] %vm483, %v5986
      %6023 = vst.msk [vmem:[%s359 + $0x50] sm:$0xff] %vm483, %v5987
      %6024 = vst.msk [vmem:[%s359 + $0x58] sm:$0xff] %vm483, %v5988
      %6025 = vst.msk [vmem:[%s359 + $0x60] sm:$0xff] %vm483, %v5989
      %6026 = vst.msk [vmem:[%s359 + $0x68] sm:$0xff] %vm483, %v5990
      %6027 = vst.msk [vmem:[%s359 + $0x70] sm:$0xff] %vm483, %v5991
      %6028 = vst.msk [vmem:[%s359 + $0x78] sm:$0xff] %vm483, %v5992
      %6029 = vst.msk [vmem:[%s359 + $0x80] sm:$0xff] %vm483, %v5993
      %6030 = vst.msk [vmem:[%s359 + $0x88] sm:$0xff] %vm483, %v5994
      %6031 = vst.msk [vmem:[%s359 + $0x90] sm:$0xff] %vm483, %v5995
      %6032 = vst.msk [vmem:[%s359 + $0x98] sm:$0xff] %vm483, %v5996
      %6033 = vst.msk [vmem:[%s359 + $0xa0] sm:$0xff] %vm483, %v5997
      %6034 = vst.msk [vmem:[%s359 + $0xa8] sm:$0xff] %vm483, %v5998
      %6035 = vst.msk [vmem:[%s359 + $0xb0] sm:$0xff] %vm483, %v5999
      %6036 = vst.msk [vmem:[%s359 + $0xb8] sm:$0xff] %vm483, %v6000
      %6037 = vst.msk [vmem:[%s359 + $0xc0] sm:$0xff] %vm483, %v6001
      %6038 = vst.msk [vmem:[%s359 + $0xc8] sm:$0xff] %vm483, %v6002
      %6039 = vst.msk [vmem:[%s359 + $0xd0] sm:$0xff] %vm483, %v6003
      %6040 = vst.msk [vmem:[%s359 + $0xd8] sm:$0xff] %vm483, %v6004
      %6041 = vst.msk [vmem:[%s359 + $0xe0] sm:$0xff] %vm483, %v6005
      %6042 = vst.msk [vmem:[%s359 + $0xe8] sm:$0xff] %vm483, %v6006
      %6043 = vst.msk [vmem:[%s359 + $0xf0] sm:$0xff] %vm483, %v6007
      %6044 = vst.msk [vmem:[%s359 + $0xf8] sm:$0xff] %vm483, %v6008
      %6045 = vst.msk [vmem:[%s359 + $0x100] sm:$0xff] %vm483, %v6009
      %6046 = vst.msk [vmem:[%s359 + $0x108] sm:$0xff] %vm483, %v6010
      %6047 = vst.msk [vmem:[%s359 + $0x110] sm:$0xff] %vm483, %v6011
      %6048 = vst.msk [vmem:[%s359 + $0x118] sm:$0xff] %vm483, %v6012
      %p6049 = scmp.lt.s32.totalorder %s21, 1
      %s6050 = scalar_select %p6049, %s21, 1
      %s6051 = smul.addr %s6050, 36
      %s6052 = smul.addr %s6051, 8
      %s6053 = scalar_lea.vmem %s10, %s6052
      // Predicated region
      $region61: #{tpu_custom_call.1} parent=59 // pred_check
        %p6054 = pneg %p254
      $region62: #{tpu_custom_call.1} parent=59 // pred_check_branch
        %6056 = sbr.rel (%p6054) target = $region64
      $region63: #{tpu_custom_call.1} parent=59 // pred_region
        _
      $region64: #{tpu_custom_call.1} parent=59 // pred_fallthru
        _
    $region60: #{tpu_custom_call.1} parent=5 // pred_fallthru
      _
    %p6057 = scmp.le.s32.totalorder 2, %s16
    // Predicated region
    $region65: #{tpu_custom_call.1} parent=5 // pred_check
      %p6058 = pneg %p6057
    $region66: #{tpu_custom_call.1} parent=5 // pred_check_branch
      %6060 = sbr.rel (%p6058) target = $region68
    $region67: #{tpu_custom_call.1} parent=5 // pred_region
      %s6061 = ssub.s32 %s16, 2
      // Predicated region
      $region69: #{tpu_custom_call.1} parent=67 // pred_check
        %p6062 = pneg %p260
      $region70: #{tpu_custom_call.1} parent=67 // pred_check_branch
        %6064 = sbr.rel (%p6062) target = $region72
      $region71: #{tpu_custom_call.1} parent=67 // pred_region
        %p6065 = scmp.lt.s32.totalorder %s22, 1
        %s6066 = scalar_select %p6065, %s22, 1
        %s6067 = smul.addr %s6066, 36
        %s6068 = smul.addr %s6067, 8
        %s6069 = scalar_lea.vmem %s10, %s6068
      $region72: #{tpu_custom_call.1} parent=67 // pred_fallthru
        _
    $region68: #{tpu_custom_call.1} parent=5 // pred_fallthru
      _
  $region6: #{tpu_custom_call.1} parent=0 // loop_footer
    %s20 = sadd.s32 1, %s16
  $region7: #{tpu_custom_call.1} parent=0 // loop_footer_branch
    %15 = sbr.rel target = $region3
  $region8: #{tpu_custom_call.1} parent=0 // loop_exit
    _

</llo_original>
